<compile_context>
chip_gen: v6e
topology: v6e:2x2x1
jax: 0.10.0
libtpu: 0.0.40
codegen_flags: <defaults>
</compile_context>

<pallas_src>
import math
from functools import partial

import numpy as np
import jax
import jax.numpy as jnp
from jax import lax
from jax.experimental import pallas as pl
from jax.experimental.pallas import tpu as pltpu

_BN_EPS = 1e-5


def _round_up(x, m):
    return -(-x // m) * m


# --------------------------------------------------------------------------- #
# Fully fused Bottleneck kernel (one image per grid step).
#   x_ref    : (1, L, Cin)   bf16  zero-padded (+1 ring) image, flattened rows
#   mask_ref : (L, 1)        f32   1 on interior of the padded grid, else 0
#   sel_ref  : (HoWo, HWp)   bf16  one-hot row selector (stride + valid cols)
#   w1/b1, w2(9,width,width)/b2, w3/b3, optional wd/bd : folded-BN weights
#   o_ref    : (1, HoWo, Cout) bf16
#   a1_ref   : VMEM scratch (L, width) bf16 -- conv1 output on the padded grid
# --------------------------------------------------------------------------- #
def _bottleneck_kernel(*refs, Wp, HWp, has_ds):
    if has_ds:
        (x_ref, mask_ref, sel_ref, w1_ref, b1_ref, w2_ref, b2_ref,
         w3_ref, b3_ref, wd_ref, bd_ref, o_ref, a1_ref) = refs
    else:
        (x_ref, mask_ref, sel_ref, w1_ref, b1_ref, w2_ref, b2_ref,
         w3_ref, b3_ref, o_ref, a1_ref) = refs

    xf = x_ref[0]                                            # (L, Cin) bf16

    # ---- conv1 (1x1) + bn1 + relu on the padded grid; ring/tail zeroed ----
    a1 = jnp.dot(xf, w1_ref[...], preferred_element_type=jnp.float32)
    a1 = jnp.maximum(a1 + b1_ref[...], 0.0) * mask_ref[...]
    a1_ref[...] = a1.astype(a1_ref.dtype)

    # ---- conv2 (3x3) + bn2 + relu, computed on the stride-1 grid ----------
    acc = None
    for di in range(3):
        for dj in range(3):
            lhs = a1_ref[pl.ds(di * Wp + dj, HWp), :]        # (HWp, width)
            d = jnp.dot(lhs, w2_ref[di * 3 + dj],
                        preferred_element_type=jnp.float32)
            acc = d if acc is None else acc + d
    a2 = jnp.maximum(acc + b2_ref[...], 0.0).astype(jnp.bfloat16)

    # ---- stride / valid-position selection (one-hot matmul) ---------------
    sel = sel_ref[...]                                       # (HoWo, HWp) bf16
    l3 = jnp.dot(sel, a2,
                 preferred_element_type=jnp.float32).astype(jnp.bfloat16)

    # ---- identity / downsample path (same selector, shifted input slice) --
    ident = jnp.dot(sel, x_ref[0, pl.ds(Wp + 1, HWp), :],
                    preferred_element_type=jnp.float32)      # (HoWo, Cin) f32
    if has_ds:
        res = jnp.dot(ident.astype(jnp.bfloat16), wd_ref[...],
                      preferred_element_type=jnp.float32) + bd_ref[...]
    else:
        res = ident                                          # Cin == Cout

    # ---- conv3 (1x1) + bn3 + residual add + relu ---------------------------
    out = jnp.dot(l3, w3_ref[...], preferred_element_type=jnp.float32)
    out = jnp.maximum(out + b3_ref[...] + res, 0.0)
    o_ref[0] = out.astype(o_ref.dtype)


# --------------------------------------------------------------------------- #
# NHWC-bf16 fast path (for chaining blocks without layout round trips)
# --------------------------------------------------------------------------- #
@partial(jax.jit, static_argnames=("stride",))
def bottleneck_forward_nhwc(x, p, *, stride):
    N, H, W, Cin = x.shape
    width = p["w1"].shape[1]
    Cout = p["w3"].shape[1]
    s = stride
    Hp, Wp = H + 2, W + 2
    Ho = (H - 1) // s + 1
    Wo = (W - 1) // s + 1
    HWp = H * Wp
    HoWo = Ho * Wo
    L = _round_up(Hp * Wp + 2, 16)
    has_ds = "wd" in p

    x = x.astype(jnp.bfloat16)
    # Only XLA-side glue: pad by the 3x3 halo and flatten rows.
    xp = jnp.pad(x, ((0, 0), (1, 1), (1, 1), (0, 0))).reshape(N, Hp * Wp, Cin)
    xf = jnp.pad(xp, ((0, 0), (0, L - Hp * Wp), (0, 0)))

    # Trace-time constants (baked into the program; resident in VMEM).
    idx = np.arange(L)
    r, c = idx // Wp, idx % Wp
    interior = (idx < Hp * Wp) & (r >= 1) & (r <= H) & (c >= 1) & (c <= W)
    mask = jnp.asarray(interior.astype(np.float32)[:, None])            # (L,1)

    o = np.arange(HoWo)
    q = (o // Wo) * s * Wp + (o % Wo) * s
    sel_np = (q[:, None] == np.arange(HWp)[None, :]).astype(np.float32)
    sel = jnp.asarray(sel_np).astype(jnp.bfloat16)                      # (HoWo,HWp)

    def full(shape):
        return pl.BlockSpec(shape, lambda n, _s=len(shape): (0,) * _s)

    in_specs = [
        pl.BlockSpec((1, L, Cin), lambda n: (n, 0, 0)),
        full((L, 1)),
        full((HoWo, HWp)),
        full(p["w1"].shape), full(p["b1"].shape),
        full(p["w2"].shape), full(p["b2"].shape),
        full(p["w3"].shape), full(p["b3"].shape),
    ]
    args = [xf, mask, sel, p["w1"], p["b1"], p["w2"], p["b2"], p["w3"], p["b3"]]
    if has_ds:
        in_specs += [full(p["wd"].shape), full(p["bd"].shape)]
        args += [p["wd"], p["bd"]]

    flops = 2 * N * (L * Cin * width
                     + 9 * HWp * width * width
                     + HoWo * HWp * (width + Cin)
                     + HoWo * width * Cout
                     + (HoWo * Cin * Cout if has_ds else 0))
    param_bytes = sum(int(v.size) * v.dtype.itemsize for v in p.values())
    bytes_accessed = (int(xf.size) * 2 + N * HoWo * Cout * 2 + param_bytes
                      + int(mask.size) * 4 + int(sel.size) * 2)

    out = pl.pallas_call(
        partial(_bottleneck_kernel, Wp=Wp, HWp=HWp, has_ds=has_ds),
        out_shape=jax.ShapeDtypeStruct((N, HoWo, Cout), jnp.bfloat16),
        grid_spec=pltpu.PrefetchScalarGridSpec(
            num_scalar_prefetch=0,
            grid=(N,),
            in_specs=in_specs,
            out_specs=pl.BlockSpec((1, HoWo, Cout), lambda n: (n, 0, 0)),
            scratch_shapes=[pltpu.VMEM((L, width), jnp.bfloat16)],
        ),
        compiler_params=pltpu.CompilerParams(
            dimension_semantics=("parallel",),
            vmem_limit_bytes=32 * 1024 * 1024,
        ),
        cost_estimate=pl.CostEstimate(flops=int(flops), transcendentals=0,
                                      bytes_accessed=int(bytes_accessed)),
    )(*args)

    return out.reshape(N, Ho, Wo, Cout)


# Public NCHW fp32 interface (matches the PyTorch module's layout).
@partial(jax.jit, static_argnames=("stride",))
def bottleneck_forward(x_nchw, p, *, stride):
    x = jnp.transpose(x_nchw, (0, 2, 3, 1)).astype(jnp.bfloat16)
    y = bottleneck_forward_nhwc(x, p, stride=stride)
    return jnp.transpose(y, (0, 3, 1, 2)).astype(jnp.float32)


# --------------------------------------------------------------------------- #
# Parameters: PyTorch-layout init, then one-time prep (BN fold, transpose, bf16)
# --------------------------------------------------------------------------- #
def init_bottleneck_params(key, inplanes, planes, stride):
    expansion = 4
    width = planes  # base_width=64, groups=1
    keys = jax.random.split(key, 4)

    def conv_w(k, shape):  # (O, I, KH, KW), kaiming-normal fan_out
        fan_out = shape[0] * shape[2] * shape[3]
        return (math.sqrt(2.0 / fan_out) * jax.random.normal(k, shape)).astype(jnp.float32)

    def bn(c):
        return {"gamma": jnp.ones((c,), jnp.float32),
                "beta": jnp.zeros((c,), jnp.float32),
                "mean": jnp.zeros((c,), jnp.float32),
                "var": jnp.ones((c,), jnp.float32)}

    p = {
        "conv1": conv_w(keys[0], (width, inplanes, 1, 1)), "bn1": bn(width),
        "conv2": conv_w(keys[1], (width, width, 3, 3)), "bn2": bn(width),
        "conv3": conv_w(keys[2], (planes * expansion, width, 1, 1)),
        "bn3": bn(planes * expansion),
    }
    if stride != 1 or inplanes != planes * expansion:
        p["down_conv"] = conv_w(keys[3], (planes * expansion, inplanes, 1, 1))
        p["down_bn"] = bn(planes * expansion)
    return p


def _fold_bn(w, bn):
    scale = bn["gamma"] / jnp.sqrt(bn["var"] + _BN_EPS)
    return w * scale[:, None, None, None], bn["beta"] - bn["mean"] * scale


def prepare_bottleneck_params(raw):
    """One-time weight prep: fold BN, transpose to matmul layout, cast bf16."""
    def prep_1x1(w, bn):
        wf, b = _fold_bn(w, bn)
        wmat = jnp.transpose(wf[:, :, 0, 0], (1, 0)).astype(jnp.bfloat16)   # (C, O)
        return wmat, b.reshape(1, -1).astype(jnp.float32)

    def prep_3x3(w, bn):
        wf, b = _fold_bn(w, bn)
        O, I = w.shape[0], w.shape[1]
        w9 = jnp.transpose(wf, (2, 3, 1, 0)).reshape(9, I, O).astype(jnp.bfloat16)
        return w9, b.reshape(1, -1).astype(jnp.float32)

    prepped = {}
    prepped["w1"], prepped["b1"] = prep_1x1(raw["conv1"], raw["bn1"])
    prepped["w2"], prepped["b2"] = prep_3x3(raw["conv2"], raw["bn2"])
    prepped["w3"], prepped["b3"] = prep_1x1(raw["conv3"], raw["bn3"])
    if "down_conv" in raw:
        prepped["wd"], prepped["bd"] = prep_1x1(raw["down_conv"], raw["down_bn"])
    return prepped


# --------------------------------------------------------------------------- #
# Pure-JAX fp32 reference (mirrors the PyTorch Bottleneck in eval mode)
# --------------------------------------------------------------------------- #
def _reference_bottleneck(x, raw, stride):
    def conv(x, w, s, pad):
        return lax.conv_general_dilated(
            x, w, window_strides=(s, s), padding=((pad, pad), (pad, pad)),
            dimension_numbers=("NCHW", "OIHW", "NCHW"))

    def bn(x, b):
        s = b["gamma"] / jnp.sqrt(b["var"] + _BN_EPS)
        sh = b["beta"] - b["mean"] * s
        return x * s[None, :, None, None] + sh[None, :, None, None]

    out = jax.nn.relu(bn(conv(x, raw["conv1"], 1, 0), raw["bn1"]))
    out = jax.nn.relu(bn(conv(out, raw["conv2"], stride, 1), raw["bn2"]))
    out = bn(conv(out, raw["conv3"], 1, 0), raw["bn3"])
    ident = bn(conv(x, raw["down_conv"], stride, 0), raw["down_bn"]) if "down_conv" in raw else x
    return jax.nn.relu(out + ident)


# --------------------------------------------------------------------------- #
if __name__ == "__main__":
    key = jax.random.PRNGKey(0)
    k_inp, k_b1, k_b2 = jax.random.split(key, 3)

    # Block 1: inplanes=64 -> planes=32 (width 32, out 128), stride=2, downsample.
    raw1 = init_bottleneck_params(k_b1, inplanes=64, planes=32, stride=2)
    p1 = prepare_bottleneck_params(raw1)
    # Block 2: inplanes=128 -> planes=32, stride=1, identity shortcut.
    raw2 = init_bottleneck_params(k_b2, inplanes=128, planes=32, stride=1)
    p2 = prepare_bottleneck_params(raw2)

    x = jax.random.normal(k_inp, (2, 64, 16, 16), dtype=jnp.float32)  # NCHW

    # Chained blocks stay in NHWC bf16 (no per-block NCHW/f32 round trip).
    x_nhwc = jnp.transpose(x, (0, 2, 3, 1)).astype(jnp.bfloat16)
    y1_nhwc = bottleneck_forward_nhwc(x_nhwc, p1, stride=2)   # (2, 8, 8, 128)
    y2_nhwc = bottleneck_forward_nhwc(y1_nhwc, p2, stride=1)  # (2, 8, 8, 128)
    y2_nhwc = jax.block_until_ready(y2_nhwc)

    y1 = jnp.transpose(y1_nhwc, (0, 3, 1, 2)).astype(jnp.float32)
    y2 = jnp.transpose(y2_nhwc, (0, 3, 1, 2)).astype(jnp.float32)

    assert y1.shape == (2, 128, 8, 8), y1.shape
    assert y2.shape == (2, 128, 8, 8), y2.shape
    assert bool(jnp.all(jnp.isfinite(y2)))

    # numerical check vs fp32 reference (loose tolerance: bf16 activations/weights)
    ref1 = _reference_bottleneck(x, raw1, stride=2)
    ref2 = _reference_bottleneck(y1, raw2, stride=1)
    err1 = float(jnp.max(jnp.abs(y1 - ref1)) / (jnp.max(jnp.abs(ref1)) + 1e-6))
    err2 = float(jnp.max(jnp.abs(y2 - ref2)) / (jnp.max(jnp.abs(ref2)) + 1e-6))
    assert err1 < 0.1, f"block1 rel-to-max error {err1}"
    assert err2 < 0.1, f"block2 rel-to-max error {err2}"

    print("KERNEL_OK")
</pallas_src>

<mosaic_0001>
module attributes {stable_mosaic.version = 11 : i64} {
  func.func @_bottleneck_kernel(%arg0: i32, %arg1: memref<1x336x64xbf16, #tpu.memory_space<vmem>>, %arg2: memref<336x1xf32, #tpu.memory_space<vmem>>, %arg3: memref<64x288xbf16, #tpu.memory_space<vmem>>, %arg4: memref<64x32xbf16, #tpu.memory_space<vmem>>, %arg5: memref<1x32xf32, #tpu.memory_space<vmem>>, %arg6: memref<9x32x32xbf16, #tpu.memory_space<vmem>>, %arg7: memref<1x32xf32, #tpu.memory_space<vmem>>, %arg8: memref<32x128xbf16, #tpu.memory_space<vmem>>, %arg9: memref<1x128xf32, #tpu.memory_space<vmem>>, %arg10: memref<64x128xbf16, #tpu.memory_space<vmem>>, %arg11: memref<1x128xf32, #tpu.memory_space<vmem>>, %arg12: memref<1x64x128xbf16, #tpu.memory_space<vmem>>, %arg13: memref<336x32xbf16, #tpu.memory_space<vmem>>) attributes {dimension_semantics = [#tpu.dimension_semantics<parallel>], iteration_bounds = array<i64: 2>, scalar_prefetch = 0 : i64, scratch_operands = 1 : i64, tpu.core_type = #tpu.core_type<tc>, window_params = [{transform_indices = @transform_0, window_bounds = array<i64: 1, 336, 64>}, {pipeline_mode = #tpu.pipeline_mode<synchronous>, transform_indices = @transform_1, window_bounds = array<i64: 336, 1>}, {pipeline_mode = #tpu.pipeline_mode<synchronous>, transform_indices = @transform_2, window_bounds = array<i64: 64, 288>}, {pipeline_mode = #tpu.pipeline_mode<synchronous>, transform_indices = @transform_3, window_bounds = array<i64: 64, 32>}, {pipeline_mode = #tpu.pipeline_mode<synchronous>, transform_indices = @transform_4, window_bounds = array<i64: 1, 32>}, {pipeline_mode = #tpu.pipeline_mode<synchronous>, transform_indices = @transform_5, window_bounds = array<i64: 9, 32, 32>}, {pipeline_mode = #tpu.pipeline_mode<synchronous>, transform_indices = @transform_6, window_bounds = array<i64: 1, 32>}, {pipeline_mode = #tpu.pipeline_mode<synchronous>, transform_indices = @transform_7, window_bounds = array<i64: 32, 128>}, {pipeline_mode = #tpu.pipeline_mode<synchronous>, transform_indices = @transform_8, window_bounds = array<i64: 1, 128>}, {pipeline_mode = #tpu.pipeline_mode<synchronous>, transform_indices = @transform_9, window_bounds = array<i64: 64, 128>}, {pipeline_mode = #tpu.pipeline_mode<synchronous>, transform_indices = @transform_10, window_bounds = array<i64: 1, 128>}, {transform_indices = @transform_11, window_bounds = array<i64: 1, 64, 128>}]} {
    %c0 = arith.constant 0 : index
    %c0_0 = arith.constant 0 : index
    %c0_1 = arith.constant 0 : index
    %0 = vector.load %arg1[%c0, %c0_0, %c0_1] : memref<1x336x64xbf16, #tpu.memory_space<vmem>>, vector<1x336x64xbf16>
    %1 = vector.shape_cast %0 : vector<1x336x64xbf16> to vector<336x64xbf16>
    %c0_2 = arith.constant 0 : index
    %c0_3 = arith.constant 0 : index
    %2 = vector.load %arg4[%c0_2, %c0_3] : memref<64x32xbf16, #tpu.memory_space<vmem>>, vector<64x32xbf16>
    %cst = arith.constant dense<0.000000e+00> : vector<336x32xf32>
    %3 = tpu.matmul %1, %2, %cst {dimension_numbers = #tpu.dot_dimension_numbers<[1], [0], [0], [1], [0, 0, 1, 1], [], []>} : vector<336x64xbf16>, vector<64x32xbf16>, vector<336x32xf32> -> vector<336x32xf32>
    %c0_4 = arith.constant 0 : index
    %c0_5 = arith.constant 0 : index
    %4 = vector.load %arg5[%c0_4, %c0_5] : memref<1x32xf32, #tpu.memory_space<vmem>>, vector<1x32xf32>
    %5 = vector.broadcast %4 : vector<1x32xf32> to vector<336x32xf32>
    %6 = arith.addf %3, %5 : vector<336x32xf32>
    %cst_6 = arith.constant 0.000000e+00 : f32
    %7 = vector.broadcast %cst_6 : f32 to vector<336x32xf32>
    %8 = arith.maximumf %6, %7 : vector<336x32xf32>
    %c0_7 = arith.constant 0 : index
    %c0_8 = arith.constant 0 : index
    %9 = vector.load %arg2[%c0_7, %c0_8] : memref<336x1xf32, #tpu.memory_space<vmem>>, vector<336x1xf32>
    %10 = vector.broadcast %9 : vector<336x1xf32> to vector<336x32xf32>
    %11 = arith.mulf %8, %10 : vector<336x32xf32>
    %12 = arith.truncf %11 : vector<336x32xf32> to vector<336x32xbf16>
    %c0_9 = arith.constant 0 : index
    %c0_10 = arith.constant 0 : index
    %13 = vector.load %arg13[%c0_9, %c0_10] : memref<336x32xbf16, #tpu.memory_space<vmem>>, vector<336x32xbf16>
    tpu.vector_store %arg13[%c0_9, %c0_10], %12 {strides = array<i32>} : memref<336x32xbf16, #tpu.memory_space<vmem>>, vector<336x32xbf16>,
    %c0_11 = arith.constant 0 : index
    %c0_12 = arith.constant 0 : index
    %14 = vector.load %arg13[%c0_11, %c0_12] : memref<336x32xbf16, #tpu.memory_space<vmem>>, vector<288x32xbf16>
    %c0_13 = arith.constant 0 : index
    %c0_14 = arith.constant 0 : index
    %c0_15 = arith.constant 0 : index
    %15 = vector.load %arg6[%c0_13, %c0_14, %c0_15] : memref<9x32x32xbf16, #tpu.memory_space<vmem>>, vector<1x32x32xbf16>
    %16 = vector.shape_cast %15 : vector<1x32x32xbf16> to vector<32x32xbf16>
    %cst_16 = arith.constant dense<0.000000e+00> : vector<288x32xf32>
    %17 = tpu.matmul %14, %16, %cst_16 {dimension_numbers = #tpu.dot_dimension_numbers<[1], [0], [0], [1], [0, 0, 1, 1], [], []>} : vector<288x32xbf16>, vector<32x32xbf16>, vector<288x32xf32> -> vector<288x32xf32>
    %c1 = arith.constant 1 : index
    %c0_17 = arith.constant 0 : index
    %18 = vector.load %arg13[%c1, %c0_17] : memref<336x32xbf16, #tpu.memory_space<vmem>>, vector<288x32xbf16>
    %c1_18 = arith.constant 1 : index
    %c0_19 = arith.constant 0 : index
    %c0_20 = arith.constant 0 : index
    %19 = vector.load %arg6[%c1_18, %c0_19, %c0_20] : memref<9x32x32xbf16, #tpu.memory_space<vmem>>, vector<1x32x32xbf16>
    %20 = vector.shape_cast %19 : vector<1x32x32xbf16> to vector<32x32xbf16>
    %cst_21 = arith.constant dense<0.000000e+00> : vector<288x32xf32>
    %21 = tpu.matmul %18, %20, %cst_21 {dimension_numbers = #tpu.dot_dimension_numbers<[1], [0], [0], [1], [0, 0, 1, 1], [], []>} : vector<288x32xbf16>, vector<32x32xbf16>, vector<288x32xf32> -> vector<288x32xf32>
    %22 = arith.addf %17, %21 : vector<288x32xf32>
    %c2 = arith.constant 2 : index
    %c0_22 = arith.constant 0 : index
    %23 = vector.load %arg13[%c2, %c0_22] : memref<336x32xbf16, #tpu.memory_space<vmem>>, vector<288x32xbf16>
    %c2_23 = arith.constant 2 : index
    %c0_24 = arith.constant 0 : index
    %c0_25 = arith.constant 0 : index
    %24 = vector.load %arg6[%c2_23, %c0_24, %c0_25] : memref<9x32x32xbf16, #tpu.memory_space<vmem>>, vector<1x32x32xbf16>
    %25 = vector.shape_cast %24 : vector<1x32x32xbf16> to vector<32x32xbf16>
    %cst_26 = arith.constant dense<0.000000e+00> : vector<288x32xf32>
    %26 = tpu.matmul %23, %25, %cst_26 {dimension_numbers = #tpu.dot_dimension_numbers<[1], [0], [0], [1], [0, 0, 1, 1], [], []>} : vector<288x32xbf16>, vector<32x32xbf16>, vector<288x32xf32> -> vector<288x32xf32>
    %27 = arith.addf %22, %26 : vector<288x32xf32>
    %c18 = arith.constant 18 : index
    %c0_27 = arith.constant 0 : index
    %28 = vector.load %arg13[%c18, %c0_27] : memref<336x32xbf16, #tpu.memory_space<vmem>>, vector<288x32xbf16>
    %c3 = arith.constant 3 : index
    %c0_28 = arith.constant 0 : index
    %c0_29 = arith.constant 0 : index
    %29 = vector.load %arg6[%c3, %c0_28, %c0_29] : memref<9x32x32xbf16, #tpu.memory_space<vmem>>, vector<1x32x32xbf16>
    %30 = vector.shape_cast %29 : vector<1x32x32xbf16> to vector<32x32xbf16>
    %cst_30 = arith.constant dense<0.000000e+00> : vector<288x32xf32>
    %31 = tpu.matmul %28, %30, %cst_30 {dimension_numbers = #tpu.dot_dimension_numbers<[1], [0], [0], [1], [0, 0, 1, 1], [], []>} : vector<288x32xbf16>, vector<32x32xbf16>, vector<288x32xf32> -> vector<288x32xf32>
    %32 = arith.addf %27, %31 : vector<288x32xf32>
    %c19 = arith.constant 19 : index
    %c0_31 = arith.constant 0 : index
    %33 = vector.load %arg13[%c19, %c0_31] : memref<336x32xbf16, #tpu.memory_space<vmem>>, vector<288x32xbf16>
    %c4 = arith.constant 4 : index
    %c0_32 = arith.constant 0 : index
    %c0_33 = arith.constant 0 : index
    %34 = vector.load %arg6[%c4, %c0_32, %c0_33] : memref<9x32x32xbf16, #tpu.memory_space<vmem>>, vector<1x32x32xbf16>
    %35 = vector.shape_cast %34 : vector<1x32x32xbf16> to vector<32x32xbf16>
    %cst_34 = arith.constant dense<0.000000e+00> : vector<288x32xf32>
    %36 = tpu.matmul %33, %35, %cst_34 {dimension_numbers = #tpu.dot_dimension_numbers<[1], [0], [0], [1], [0, 0, 1, 1], [], []>} : vector<288x32xbf16>, vector<32x32xbf16>, vector<288x32xf32> -> vector<288x32xf32>
    %37 = arith.addf %32, %36 : vector<288x32xf32>
    %c20 = arith.constant 20 : index
    %c0_35 = arith.constant 0 : index
    %38 = vector.load %arg13[%c20, %c0_35] : memref<336x32xbf16, #tpu.memory_space<vmem>>, vector<288x32xbf16>
    %c5 = arith.constant 5 : index
    %c0_36 = arith.constant 0 : index
    %c0_37 = arith.constant 0 : index
    %39 = vector.load %arg6[%c5, %c0_36, %c0_37] : memref<9x32x32xbf16, #tpu.memory_space<vmem>>, vector<1x32x32xbf16>
    %40 = vector.shape_cast %39 : vector<1x32x32xbf16> to vector<32x32xbf16>
    %cst_38 = arith.constant dense<0.000000e+00> : vector<288x32xf32>
    %41 = tpu.matmul %38, %40, %cst_38 {dimension_numbers = #tpu.dot_dimension_numbers<[1], [0], [0], [1], [0, 0, 1, 1], [], []>} : vector<288x32xbf16>, vector<32x32xbf16>, vector<288x32xf32> -> vector<288x32xf32>
    %42 = arith.addf %37, %41 : vector<288x32xf32>
    %c36 = arith.constant 36 : index
    %c0_39 = arith.constant 0 : index
    %43 = vector.load %arg13[%c36, %c0_39] : memref<336x32xbf16, #tpu.memory_space<vmem>>, vector<288x32xbf16>
    %c6 = arith.constant 6 : index
    %c0_40 = arith.constant 0 : index
    %c0_41 = arith.constant 0 : index
    %44 = vector.load %arg6[%c6, %c0_40, %c0_41] : memref<9x32x32xbf16, #tpu.memory_space<vmem>>, vector<1x32x32xbf16>
    %45 = vector.shape_cast %44 : vector<1x32x32xbf16> to vector<32x32xbf16>
    %cst_42 = arith.constant dense<0.000000e+00> : vector<288x32xf32>
    %46 = tpu.matmul %43, %45, %cst_42 {dimension_numbers = #tpu.dot_dimension_numbers<[1], [0], [0], [1], [0, 0, 1, 1], [], []>} : vector<288x32xbf16>, vector<32x32xbf16>, vector<288x32xf32> -> vector<288x32xf32>
    %47 = arith.addf %42, %46 : vector<288x32xf32>
    %c37 = arith.constant 37 : index
    %c0_43 = arith.constant 0 : index
    %48 = vector.load %arg13[%c37, %c0_43] : memref<336x32xbf16, #tpu.memory_space<vmem>>, vector<288x32xbf16>
    %c7 = arith.constant 7 : index
    %c0_44 = arith.constant 0 : index
    %c0_45 = arith.constant 0 : index
    %49 = vector.load %arg6[%c7, %c0_44, %c0_45] : memref<9x32x32xbf16, #tpu.memory_space<vmem>>, vector<1x32x32xbf16>
    %50 = vector.shape_cast %49 : vector<1x32x32xbf16> to vector<32x32xbf16>
    %cst_46 = arith.constant dense<0.000000e+00> : vector<288x32xf32>
    %51 = tpu.matmul %48, %50, %cst_46 {dimension_numbers = #tpu.dot_dimension_numbers<[1], [0], [0], [1], [0, 0, 1, 1], [], []>} : vector<288x32xbf16>, vector<32x32xbf16>, vector<288x32xf32> -> vector<288x32xf32>
    %52 = arith.addf %47, %51 : vector<288x32xf32>
    %c38 = arith.constant 38 : index
    %c0_47 = arith.constant 0 : index
    %53 = vector.load %arg13[%c38, %c0_47] : memref<336x32xbf16, #tpu.memory_space<vmem>>, vector<288x32xbf16>
    %c8 = arith.constant 8 : index
    %c0_48 = arith.constant 0 : index
    %c0_49 = arith.constant 0 : index
    %54 = vector.load %arg6[%c8, %c0_48, %c0_49] : memref<9x32x32xbf16, #tpu.memory_space<vmem>>, vector<1x32x32xbf16>
    %55 = vector.shape_cast %54 : vector<1x32x32xbf16> to vector<32x32xbf16>
    %cst_50 = arith.constant dense<0.000000e+00> : vector<288x32xf32>
    %56 = tpu.matmul %53, %55, %cst_50 {dimension_numbers = #tpu.dot_dimension_numbers<[1], [0], [0], [1], [0, 0, 1, 1], [], []>} : vector<288x32xbf16>, vector<32x32xbf16>, vector<288x32xf32> -> vector<288x32xf32>
    %57 = arith.addf %52, %56 : vector<288x32xf32>
    %c0_51 = arith.constant 0 : index
    %c0_52 = arith.constant 0 : index
    %58 = vector.load %arg7[%c0_51, %c0_52] : memref<1x32xf32, #tpu.memory_space<vmem>>, vector<1x32xf32>
    %59 = vector.broadcast %58 : vector<1x32xf32> to vector<288x32xf32>
    %60 = arith.addf %57, %59 : vector<288x32xf32>
    %cst_53 = arith.constant 0.000000e+00 : f32
    %61 = vector.broadcast %cst_53 : f32 to vector<288x32xf32>
    %62 = arith.maximumf %60, %61 : vector<288x32xf32>
    %63 = arith.truncf %62 : vector<288x32xf32> to vector<288x32xbf16>
    %c0_54 = arith.constant 0 : index
    %c0_55 = arith.constant 0 : index
    %64 = vector.load %arg3[%c0_54, %c0_55] : memref<64x288xbf16, #tpu.memory_space<vmem>>, vector<64x288xbf16>
    %cst_56 = arith.constant dense<0.000000e+00> : vector<64x32xf32>
    %65 = tpu.matmul %64, %63, %cst_56 {dimension_numbers = #tpu.dot_dimension_numbers<[1], [0], [0], [1], [0, 0, 1, 1], [], []>} : vector<64x288xbf16>, vector<288x32xbf16>, vector<64x32xf32> -> vector<64x32xf32>
    %66 = arith.truncf %65 : vector<64x32xf32> to vector<64x32xbf16>
    %c0_57 = arith.constant 0 : index
    %c19_58 = arith.constant 19 : index
    %c0_59 = arith.constant 0 : index
    %67 = vector.load %arg1[%c0_57, %c19_58, %c0_59] : memref<1x336x64xbf16, #tpu.memory_space<vmem>>, vector<1x288x64xbf16>
    %68 = vector.shape_cast %67 : vector<1x288x64xbf16> to vector<288x64xbf16>
    %cst_60 = arith.constant dense<0.000000e+00> : vector<64x64xf32>
    %69 = tpu.matmul %64, %68, %cst_60 {dimension_numbers = #tpu.dot_dimension_numbers<[1], [0], [0], [1], [0, 0, 1, 1], [], []>} : vector<64x288xbf16>, vector<288x64xbf16>, vector<64x64xf32> -> vector<64x64xf32>
    %70 = arith.truncf %69 : vector<64x64xf32> to vector<64x64xbf16>
    %c0_61 = arith.constant 0 : index
    %c0_62 = arith.constant 0 : index
    %71 = vector.load %arg10[%c0_61, %c0_62] : memref<64x128xbf16, #tpu.memory_space<vmem>>, vector<64x128xbf16>
    %cst_63 = arith.constant dense<0.000000e+00> : vector<64x128xf32>
    %72 = tpu.matmul %70, %71, %cst_63 {dimension_numbers = #tpu.dot_dimension_numbers<[1], [0], [0], [1], [0, 0, 1, 1], [], []>} : vector<64x64xbf16>, vector<64x128xbf16>, vector<64x128xf32> -> vector<64x128xf32>
    %c0_64 = arith.constant 0 : index
    %c0_65 = arith.constant 0 : index
    %73 = vector.load %arg11[%c0_64, %c0_65] : memref<1x128xf32, #tpu.memory_space<vmem>>, vector<1x128xf32>
    %74 = vector.broadcast %73 : vector<1x128xf32> to vector<64x128xf32>
    %75 = arith.addf %72, %74 : vector<64x128xf32>
    %c0_66 = arith.constant 0 : index
    %c0_67 = arith.constant 0 : index
    %76 = vector.load %arg8[%c0_66, %c0_67] : memref<32x128xbf16, #tpu.memory_space<vmem>>, vector<32x128xbf16>
    %cst_68 = arith.constant dense<0.000000e+00> : vector<64x128xf32>
    %77 = tpu.matmul %66, %76, %cst_68 {dimension_numbers = #tpu.dot_dimension_numbers<[1], [0], [0], [1], [0, 0, 1, 1], [], []>} : vector<64x32xbf16>, vector<32x128xbf16>, vector<64x128xf32> -> vector<64x128xf32>
    %c0_69 = arith.constant 0 : index
    %c0_70 = arith.constant 0 : index
    %78 = vector.load %arg9[%c0_69, %c0_70] : memref<1x128xf32, #tpu.memory_space<vmem>>, vector<1x128xf32>
    %79 = vector.broadcast %78 : vector<1x128xf32> to vector<64x128xf32>
    %80 = arith.addf %77, %79 : vector<64x128xf32>
    %81 = arith.addf %80, %75 : vector<64x128xf32>
    %cst_71 = arith.constant 0.000000e+00 : f32
    %82 = vector.broadcast %cst_71 : f32 to vector<64x128xf32>
    %83 = arith.maximumf %81, %82 : vector<64x128xf32>
    %84 = arith.truncf %83 : vector<64x128xf32> to vector<64x128xbf16>
    %c0_72 = arith.constant 0 : index
    %c0_73 = arith.constant 0 : index
    %c0_74 = arith.constant 0 : index
    %85 = vector.load %arg12[%c0_72, %c0_73, %c0_74] : memref<1x64x128xbf16, #tpu.memory_space<vmem>>, vector<1x64x128xbf16>
    %86 = vector.shape_cast %85 : vector<1x64x128xbf16> to vector<64x128xbf16>
    %87 = vector.shape_cast %84 : vector<64x128xbf16> to vector<1x64x128xbf16>
    tpu.vector_store %arg12[%c0_72, %c0_73, %c0_74], %87 {strides = array<i32>} : memref<1x64x128xbf16, #tpu.memory_space<vmem>>, vector<1x64x128xbf16>,
    return
  }
  func.func @transform_0(%arg0: i32) -> (i32, i32, i32) {
    %c0_i32 = arith.constant 0 : i32
    %c0_i32_0 = arith.constant 0 : i32
    %c0_i32_1 = arith.constant 0 : i32
    return %arg0, %c0_i32, %c0_i32_0 : i32, i32, i32
  }
  func.func @transform_1(%arg0: i32) -> (i32, i32) {
    %c0_i32 = arith.constant 0 : i32
    %c0_i32_0 = arith.constant 0 : i32
    %c0_i32_1 = arith.constant 0 : i32
    return %c0_i32, %c0_i32_0 : i32, i32
  }
  func.func @transform_2(%arg0: i32) -> (i32, i32) {
    %c0_i32 = arith.constant 0 : i32
    %c0_i32_0 = arith.constant 0 : i32
    %c0_i32_1 = arith.constant 0 : i32
    return %c0_i32, %c0_i32_0 : i32, i32
  }
  func.func @transform_3(%arg0: i32) -> (i32, i32) {
    %c0_i32 = arith.constant 0 : i32
    %c0_i32_0 = arith.constant 0 : i32
    %c0_i32_1 = arith.constant 0 : i32
    return %c0_i32, %c0_i32_0 : i32, i32
  }
  func.func @transform_4(%arg0: i32) -> (i32, i32) {
    %c0_i32 = arith.constant 0 : i32
    %c0_i32_0 = arith.constant 0 : i32
    %c0_i32_1 = arith.constant 0 : i32
    return %c0_i32, %c0_i32_0 : i32, i32
  }
  func.func @transform_5(%arg0: i32) -> (i32, i32, i32) {
    %c0_i32 = arith.constant 0 : i32
    %c0_i32_0 = arith.constant 0 : i32
    %c0_i32_1 = arith.constant 0 : i32
    %c0_i32_2 = arith.constant 0 : i32
    return %c0_i32, %c0_i32_0, %c0_i32_1 : i32, i32, i32
  }
  func.func @transform_6(%arg0: i32) -> (i32, i32) {
    %c0_i32 = arith.constant 0 : i32
    %c0_i32_0 = arith.constant 0 : i32
    %c0_i32_1 = arith.constant 0 : i32
    return %c0_i32, %c0_i32_0 : i32, i32
  }
  func.func @transform_7(%arg0: i32) -> (i32, i32) {
    %c0_i32 = arith.constant 0 : i32
    %c0_i32_0 = arith.constant 0 : i32
    %c0_i32_1 = arith.constant 0 : i32
    return %c0_i32, %c0_i32_0 : i32, i32
  }
  func.func @transform_8(%arg0: i32) -> (i32, i32) {
    %c0_i32 = arith.constant 0 : i32
    %c0_i32_0 = arith.constant 0 : i32
    %c0_i32_1 = arith.constant 0 : i32
    return %c0_i32, %c0_i32_0 : i32, i32
  }
  func.func @transform_9(%arg0: i32) -> (i32, i32) {
    %c0_i32 = arith.constant 0 : i32
    %c0_i32_0 = arith.constant 0 : i32
    %c0_i32_1 = arith.constant 0 : i32
    return %c0_i32, %c0_i32_0 : i32, i32
  }
  func.func @transform_10(%arg0: i32) -> (i32, i32) {
    %c0_i32 = arith.constant 0 : i32
    %c0_i32_0 = arith.constant 0 : i32
    %c0_i32_1 = arith.constant 0 : i32
    return %c0_i32, %c0_i32_0 : i32, i32
  }
  func.func @transform_11(%arg0: i32) -> (i32, i32, i32) {
    %c0_i32 = arith.constant 0 : i32
    %c0_i32_0 = arith.constant 0 : i32
    %c0_i32_1 = arith.constant 0 : i32
    return %arg0, %c0_i32, %c0_i32_0 : i32, i32, i32
  }
}

</mosaic_0001>

<llo_original>
// kernel: bottleneck_forward_nhwc.1
$region0: #{bottleneck_forward_nhwc.1}
  #allocation0 [shape = 'u32[]', space=smem, size = 0x4, offset = 0x4, fixed_abs, tag = 'smem constant byte address 0x4 - core index']
  #allocation1 [shape = 'u32[144,128]{1,0:T(1,128)}', space=vmem, size = 0x12000, scoped, tag = 'internal scratch']
  #allocation2 [shape = 'bf16[336,32]{1,0:T(8,128)(2,1)}', space=vmem, size = 0x15000, scoped, tag = 'scratch operand']
  %s0 = inlined_call_operand.vmem [shape: bf16[2,336,64], index: 0, kind: input, shape index: {}]
  %s1 = inlined_call_operand.vmem [shape: f32[336,1], index: 1, kind: input, shape index: {}]
  %s2 = inlined_call_operand.vmem [shape: bf16[64,288], index: 2, kind: input, shape index: {}]
  %s3 = inlined_call_operand.vmem [shape: bf16[64,32], index: 3, kind: input, shape index: {}]
  %s4 = inlined_call_operand.vmem [shape: f32[1,32], index: 4, kind: input, shape index: {}]
  %s5 = inlined_call_operand.vmem [shape: bf16[9,32,32], index: 5, kind: input, shape index: {}]
  %s6 = inlined_call_operand.vmem [shape: f32[1,32], index: 6, kind: input, shape index: {}]
  %s7 = inlined_call_operand.vmem [shape: bf16[32,128], index: 7, kind: input, shape index: {}]
  %s8 = inlined_call_operand.vmem [shape: f32[1,128], index: 8, kind: input, shape index: {}]
  %s9 = inlined_call_operand.vmem [shape: bf16[64,128], index: 9, kind: input, shape index: {}]
  %s10 = inlined_call_operand.vmem [shape: f32[1,128], index: 10, kind: input, shape index: {}]
  %s11 = inlined_call_operand.hbm [shape: bf16[2,64,128], index: 11, kind: output, shape index: {}]
  %s12 = sld [smem:[#allocation0]]
  $region77: #{bottleneck_forward_nhwc.1} parent=0
    _
  %s14 = ssub.s32 1, %s12
  %s15 = scalar_select 0, %s14, %s12
  $region1: #{bottleneck_forward_nhwc.1} parent=0
    #allocation3 [shape = 'u8[32768]{0}', space=vmem, size = 0x8000, scoped, tag = 'output window, operand 0']
    #allocation4 [shape = 's32[2]{0}', space=sflag, size = 0x8, scoped, tag = 'scoped memory for bottleneck_forward_nhwc.1']
    %16 = vsyncpa [#allocation4], 0
    %s17 = scalar_lea.sflag [#allocation4], 1
    %18 = vsyncpa %s17, 0
    loop: start=0, step=1, limit=4
    $region2: #{bottleneck_forward_nhwc.1} parent=1 // loop_pre_header
      _
    $region3: #{bottleneck_forward_nhwc.1} parent=1 // loop_header
      %s20 = sphi 0, %s24
      %p21 = scmp.ge.s32.totalorder %s20, 4
      %s30 = sphi 0, %s32
      %s33 = sphi 0, %s30
      %s34 = sphi 0, %s33
      %s50 = sphi 0, %s34
      %s54 = sphi 0, %s54
      %s56 = sphi 0, %s54
      %s57 = sphi 0, %s56
      %s71 = sphi 0, %s57
      %s75 = sphi 0, %s75
      %s77 = sphi 0, %s75
      %s78 = sphi 0, %s77
      %s92 = sphi 0, %s78
      %s96 = sphi 0, %s96
      %s98 = sphi 0, %s96
      %s99 = sphi 0, %s98
      %s113 = sphi 0, %s99
      %s117 = sphi 0, %s117
      %s119 = sphi 0, %s117
      %s120 = sphi 0, %s119
      %s134 = sphi 0, %s120
      %s138 = sphi 0, %s138
      %s140 = sphi 0, %s138
      %s141 = sphi 0, %s140
      %s155 = sphi 0, %s141
      %s159 = sphi 0, %s159
      %s161 = sphi 0, %s159
      %s162 = sphi 0, %s161
      %s176 = sphi 0, %s162
      %s180 = sphi 0, %s180
      %s182 = sphi 0, %s180
      %s183 = sphi 0, %s182
      %s197 = sphi 0, %s183
      %s201 = sphi 0, %s201
      %s203 = sphi 0, %s201
      %s204 = sphi 0, %s203
      %s218 = sphi 0, %s204
      %s222 = sphi 0, %s222
      %s224 = sphi 0, %s222
      %s225 = sphi 0, %s224
      %s239 = sphi 0, %s225
      %s243 = sphi 0, %s243
      %s245 = sphi 0, %s243
      %s246 = sphi 0, %s245
      %s260 = sphi 0, %s246
      %s266 = sphi 0, %s268
      %s269 = sphi 0, %s266
      %s270 = sphi 0, %s269
      %s286 = sphi 0, %s270
    $region4: #{bottleneck_forward_nhwc.1} parent=1 // loop_header_branch
      %23 = sbr.rel (%p21) target = $region8
    $region5: #{bottleneck_forward_nhwc.1} parent=1 // loop_body
      %s25 = ssub.s32 %s20, 1
      %s26 = ssub.s32 %s20, 2
      %s27 = sadd.s32 %s20, 1
      %s28 = ssub.s32 %s20, %s27
      %p29 = scmp.eq.s32.totalorder %s28, 0
      %s31 = sadd.s32 %s30, 1
      %s32 = scalar_select %p29, %s30, %s31
      %p35 = pneg %p29
      %p36 = scmp.eq.s32.totalorder %s20, 1
      %p37 = por %p35, %p36
      %p38 = scmp.ne.s32.totalorder %s30, %s33
      %p39 = scmp.eq.s32.totalorder %s20, 0
      %p40 = por %p38, %p39
      %p41 = scmp.ne.s32.totalorder %s30, %s33
      %p42 = scmp.eq.s32.totalorder %s25, 1
      %p43 = por %p41, %p42
      %p44 = scmp.ne.s32.totalorder %s33, %s34
      %p45 = scmp.eq.s32.totalorder %s25, 0
      %p46 = por %p44, %p45
      %p47 = scmp.ne.s32.totalorder %s33, %s34
      %p48 = scmp.eq.s32.totalorder %s26, 1
      %p49 = por %p47, %p48
      %p51 = scmp.ne.s32.totalorder %s34, %s50
      %p52 = scmp.eq.s32.totalorder %s26, 0
      %p53 = por %p51, %p52
      %s55 = sadd.s32 %s54, 1
      %p58 = scmp.eq.s32.totalorder %s20, 1
      %p59 = scmp.ne.s32.totalorder %s54, %s56
      %p60 = scmp.eq.s32.totalorder %s20, 0
      %p61 = por %p59, %p60
      %p62 = scmp.ne.s32.totalorder %s54, %s56
      %p63 = scmp.eq.s32.totalorder %s25, 1
      %p64 = por %p62, %p63
      %p65 = scmp.ne.s32.totalorder %s56, %s57
      %p66 = scmp.eq.s32.totalorder %s25, 0
      %p67 = por %p65, %p66
      %p68 = scmp.ne.s32.totalorder %s56, %s57
      %p69 = scmp.eq.s32.totalorder %s26, 1
      %p70 = por %p68, %p69
      %p72 = scmp.ne.s32.totalorder %s57, %s71
      %p73 = scmp.eq.s32.totalorder %s26, 0
      %p74 = por %p72, %p73
      %s76 = sadd.s32 %s75, 1
      %p79 = scmp.eq.s32.totalorder %s20, 1
      %p80 = scmp.ne.s32.totalorder %s75, %s77
      %p81 = scmp.eq.s32.totalorder %s20, 0
      %p82 = por %p80, %p81
      %p83 = scmp.ne.s32.totalorder %s75, %s77
      %p84 = scmp.eq.s32.totalorder %s25, 1
      %p85 = por %p83, %p84
      %p86 = scmp.ne.s32.totalorder %s77, %s78
      %p87 = scmp.eq.s32.totalorder %s25, 0
      %p88 = por %p86, %p87
      %p89 = scmp.ne.s32.totalorder %s77, %s78
      %p90 = scmp.eq.s32.totalorder %s26, 1
      %p91 = por %p89, %p90
      %p93 = scmp.ne.s32.totalorder %s78, %s92
      %p94 = scmp.eq.s32.totalorder %s26, 0
      %p95 = por %p93, %p94
      %s97 = sadd.s32 %s96, 1
      %p100 = scmp.eq.s32.totalorder %s20, 1
      %p101 = scmp.ne.s32.totalorder %s96, %s98
      %p102 = scmp.eq.s32.totalorder %s20, 0
      %p103 = por %p101, %p102
      %p104 = scmp.ne.s32.totalorder %s96, %s98
      %p105 = scmp.eq.s32.totalorder %s25, 1
      %p106 = por %p104, %p105
      %p107 = scmp.ne.s32.totalorder %s98, %s99
      %p108 = scmp.eq.s32.totalorder %s25, 0
      %p109 = por %p107, %p108
      %p110 = scmp.ne.s32.totalorder %s98, %s99
      %p111 = scmp.eq.s32.totalorder %s26, 1
      %p112 = por %p110, %p111
      %p114 = scmp.ne.s32.totalorder %s99, %s113
      %p115 = scmp.eq.s32.totalorder %s26, 0
      %p116 = por %p114, %p115
      %s118 = sadd.s32 %s117, 1
      %p121 = scmp.eq.s32.totalorder %s20, 1
      %p122 = scmp.ne.s32.totalorder %s117, %s119
      %p123 = scmp.eq.s32.totalorder %s20, 0
      %p124 = por %p122, %p123
      %p125 = scmp.ne.s32.totalorder %s117, %s119
      %p126 = scmp.eq.s32.totalorder %s25, 1
      %p127 = por %p125, %p126
      %p128 = scmp.ne.s32.totalorder %s119, %s120
      %p129 = scmp.eq.s32.totalorder %s25, 0
      %p130 = por %p128, %p129
      %p131 = scmp.ne.s32.totalorder %s119, %s120
      %p132 = scmp.eq.s32.totalorder %s26, 1
      %p133 = por %p131, %p132
      %p135 = scmp.ne.s32.totalorder %s120, %s134
      %p136 = scmp.eq.s32.totalorder %s26, 0
      %p137 = por %p135, %p136
      %s139 = sadd.s32 %s138, 1
      %p142 = scmp.eq.s32.totalorder %s20, 1
      %p143 = scmp.ne.s32.totalorder %s138, %s140
      %p144 = scmp.eq.s32.totalorder %s20, 0
      %p145 = por %p143, %p144
      %p146 = scmp.ne.s32.totalorder %s138, %s140
      %p147 = scmp.eq.s32.totalorder %s25, 1
      %p148 = por %p146, %p147
      %p149 = scmp.ne.s32.totalorder %s140, %s141
      %p150 = scmp.eq.s32.totalorder %s25, 0
      %p151 = por %p149, %p150
      %p152 = scmp.ne.s32.totalorder %s140, %s141
      %p153 = scmp.eq.s32.totalorder %s26, 1
      %p154 = por %p152, %p153
      %p156 = scmp.ne.s32.totalorder %s141, %s155
      %p157 = scmp.eq.s32.totalorder %s26, 0
      %p158 = por %p156, %p157
      %s160 = sadd.s32 %s159, 1
      %p163 = scmp.eq.s32.totalorder %s20, 1
      %p164 = scmp.ne.s32.totalorder %s159, %s161
      %p165 = scmp.eq.s32.totalorder %s20, 0
      %p166 = por %p164, %p165
      %p167 = scmp.ne.s32.totalorder %s159, %s161
      %p168 = scmp.eq.s32.totalorder %s25, 1
      %p169 = por %p167, %p168
      %p170 = scmp.ne.s32.totalorder %s161, %s162
      %p171 = scmp.eq.s32.totalorder %s25, 0
      %p172 = por %p170, %p171
      %p173 = scmp.ne.s32.totalorder %s161, %s162
      %p174 = scmp.eq.s32.totalorder %s26, 1
      %p175 = por %p173, %p174
      %p177 = scmp.ne.s32.totalorder %s162, %s176
      %p178 = scmp.eq.s32.totalorder %s26, 0
      %p179 = por %p177, %p178
      %s181 = sadd.s32 %s180, 1
      %p184 = scmp.eq.s32.totalorder %s20, 1
      %p185 = scmp.ne.s32.totalorder %s180, %s182
      %p186 = scmp.eq.s32.totalorder %s20, 0
      %p187 = por %p185, %p186
      %p188 = scmp.ne.s32.totalorder %s180, %s182
      %p189 = scmp.eq.s32.totalorder %s25, 1
      %p190 = por %p188, %p189
      %p191 = scmp.ne.s32.totalorder %s182, %s183
      %p192 = scmp.eq.s32.totalorder %s25, 0
      %p193 = por %p191, %p192
      %p194 = scmp.ne.s32.totalorder %s182, %s183
      %p195 = scmp.eq.s32.totalorder %s26, 1
      %p196 = por %p194, %p195
      %p198 = scmp.ne.s32.totalorder %s183, %s197
      %p199 = scmp.eq.s32.totalorder %s26, 0
      %p200 = por %p198, %p199
      %s202 = sadd.s32 %s201, 1
      %p205 = scmp.eq.s32.totalorder %s20, 1
      %p206 = scmp.ne.s32.totalorder %s201, %s203
      %p207 = scmp.eq.s32.totalorder %s20, 0
      %p208 = por %p206, %p207
      %p209 = scmp.ne.s32.totalorder %s201, %s203
      %p210 = scmp.eq.s32.totalorder %s25, 1
      %p211 = por %p209, %p210
      %p212 = scmp.ne.s32.totalorder %s203, %s204
      %p213 = scmp.eq.s32.totalorder %s25, 0
      %p214 = por %p212, %p213
      %p215 = scmp.ne.s32.totalorder %s203, %s204
      %p216 = scmp.eq.s32.totalorder %s26, 1
      %p217 = por %p215, %p216
      %p219 = scmp.ne.s32.totalorder %s204, %s218
      %p220 = scmp.eq.s32.totalorder %s26, 0
      %p221 = por %p219, %p220
      %s223 = sadd.s32 %s222, 1
      %p226 = scmp.eq.s32.totalorder %s20, 1
      %p227 = scmp.ne.s32.totalorder %s222, %s224
      %p228 = scmp.eq.s32.totalorder %s20, 0
      %p229 = por %p227, %p228
      %p230 = scmp.ne.s32.totalorder %s222, %s224
      %p231 = scmp.eq.s32.totalorder %s25, 1
      %p232 = por %p230, %p231
      %p233 = scmp.ne.s32.totalorder %s224, %s225
      %p234 = scmp.eq.s32.totalorder %s25, 0
      %p235 = por %p233, %p234
      %p236 = scmp.ne.s32.totalorder %s224, %s225
      %p237 = scmp.eq.s32.totalorder %s26, 1
      %p238 = por %p236, %p237
      %p240 = scmp.ne.s32.totalorder %s225, %s239
      %p241 = scmp.eq.s32.totalorder %s26, 0
      %p242 = por %p240, %p241
      %s244 = sadd.s32 %s243, 1
      %p247 = scmp.eq.s32.totalorder %s20, 1
      %p248 = scmp.ne.s32.totalorder %s243, %s245
      %p249 = scmp.eq.s32.totalorder %s20, 0
      %p250 = por %p248, %p249
      %p251 = scmp.ne.s32.totalorder %s243, %s245
      %p252 = scmp.eq.s32.totalorder %s25, 1
      %p253 = por %p251, %p252
      %p254 = scmp.ne.s32.totalorder %s245, %s246
      %p255 = scmp.eq.s32.totalorder %s25, 0
      %p256 = por %p254, %p255
      %p257 = scmp.ne.s32.totalorder %s245, %s246
      %p258 = scmp.eq.s32.totalorder %s26, 1
      %p259 = por %p257, %p258
      %p261 = scmp.ne.s32.totalorder %s246, %s260
      %p262 = scmp.eq.s32.totalorder %s26, 0
      %p263 = por %p261, %p262
      %s264 = ssub.s32 %s20, %s27
      %p265 = scmp.eq.s32.totalorder %s264, 0
      %s267 = sadd.s32 %s266, 1
      %s268 = scalar_select %p265, %s266, %s267
      %p271 = pneg %p265
      %p272 = scmp.eq.s32.totalorder %s20, 1
      %p273 = por %p271, %p272
      %p274 = scmp.ne.s32.totalorder %s266, %s269
      %p275 = scmp.eq.s32.totalorder %s20, 0
      %p276 = por %p274, %p275
      %p277 = scmp.ne.s32.totalorder %s266, %s269
      %p278 = scmp.eq.s32.totalorder %s25, 1
      %p279 = por %p277, %p278
      %p280 = scmp.ne.s32.totalorder %s269, %s270
      %p281 = scmp.eq.s32.totalorder %s25, 0
      %p282 = por %p280, %p281
      %p283 = scmp.ne.s32.totalorder %s269, %s270
      %p284 = scmp.eq.s32.totalorder %s26, 1
      %p285 = por %p283, %p284
      %p287 = scmp.ne.s32.totalorder %s270, %s286
      %p288 = scmp.eq.s32.totalorder %s26, 0
      %p289 = por %p287, %p288
      %p290 = scmp.le.s32.totalorder 1, %s20
      %p291 = scmp.lt.s32.totalorder %s20, 3
      %p292 = pnand %p290, %p291
      %p293 = pneg %p292
      // Predicated region
      $region9: #{bottleneck_forward_nhwc.1} parent=5 // pred_check
        _
      $region10: #{bottleneck_forward_nhwc.1} parent=5 // pred_check_branch
        %295 = sbr.rel (%p292) target = $region12
      $region11: #{bottleneck_forward_nhwc.1} parent=5 // pred_region
        %s296 = ssub.s32 %s20, 1
        // Predicated region
        $region13: #{bottleneck_forward_nhwc.1} parent=11 // pred_check
          %p297 = pneg %p67
        $region14: #{bottleneck_forward_nhwc.1} parent=11 // pred_check_branch
          %299 = sbr.rel (%p297) target = $region16
        $region15: #{bottleneck_forward_nhwc.1} parent=11 // pred_region
          _
        $region16: #{bottleneck_forward_nhwc.1} parent=11 // pred_fallthru
          _
        // Predicated region
        $region17: #{bottleneck_forward_nhwc.1} parent=11 // pred_check
          %p300 = pneg %p88
        $region18: #{bottleneck_forward_nhwc.1} parent=11 // pred_check_branch
          %302 = sbr.rel (%p300) target = $region20
        $region19: #{bottleneck_forward_nhwc.1} parent=11 // pred_region
          _
        $region20: #{bottleneck_forward_nhwc.1} parent=11 // pred_fallthru
          _
        // Predicated region
        $region21: #{bottleneck_forward_nhwc.1} parent=11 // pred_check
          %p303 = pneg %p109
        $region22: #{bottleneck_forward_nhwc.1} parent=11 // pred_check_branch
          %305 = sbr.rel (%p303) target = $region24
        $region23: #{bottleneck_forward_nhwc.1} parent=11 // pred_region
          _
        $region24: #{bottleneck_forward_nhwc.1} parent=11 // pred_fallthru
          _
        // Predicated region
        $region25: #{bottleneck_forward_nhwc.1} parent=11 // pred_check
          %p306 = pneg %p130
        $region26: #{bottleneck_forward_nhwc.1} parent=11 // pred_check_branch
          %308 = sbr.rel (%p306) target = $region28
        $region27: #{bottleneck_forward_nhwc.1} parent=11 // pred_region
          _
        $region28: #{bottleneck_forward_nhwc.1} parent=11 // pred_fallthru
          _
        // Predicated region
        $region29: #{bottleneck_forward_nhwc.1} parent=11 // pred_check
          %p309 = pneg %p151
        $region30: #{bottleneck_forward_nhwc.1} parent=11 // pred_check_branch
          %311 = sbr.rel (%p309) target = $region32
        $region31: #{bottleneck_forward_nhwc.1} parent=11 // pred_region
          _
        $region32: #{bottleneck_forward_nhwc.1} parent=11 // pred_fallthru
          _
        // Predicated region
        $region33: #{bottleneck_forward_nhwc.1} parent=11 // pred_check
          %p312 = pneg %p172
        $region34: #{bottleneck_forward_nhwc.1} parent=11 // pred_check_branch
          %314 = sbr.rel (%p312) target = $region36
        $region35: #{bottleneck_forward_nhwc.1} parent=11 // pred_region
          _
        $region36: #{bottleneck_forward_nhwc.1} parent=11 // pred_fallthru
          _
        // Predicated region
        $region37: #{bottleneck_forward_nhwc.1} parent=11 // pred_check
          %p315 = pneg %p193
        $region38: #{bottleneck_forward_nhwc.1} parent=11 // pred_check_branch
          %317 = sbr.rel (%p315) target = $region40
        $region39: #{bottleneck_forward_nhwc.1} parent=11 // pred_region
          _
        $region40: #{bottleneck_forward_nhwc.1} parent=11 // pred_fallthru
          _
        // Predicated region
        $region41: #{bottleneck_forward_nhwc.1} parent=11 // pred_check
          %p318 = pneg %p214
        $region42: #{bottleneck_forward_nhwc.1} parent=11 // pred_check_branch
          %320 = sbr.rel (%p318) target = $region44
        $region43: #{bottleneck_forward_nhwc.1} parent=11 // pred_region
          _
        $region44: #{bottleneck_forward_nhwc.1} parent=11 // pred_fallthru
          _
        // Predicated region
        $region45: #{bottleneck_forward_nhwc.1} parent=11 // pred_check
          %p321 = pneg %p235
        $region46: #{bottleneck_forward_nhwc.1} parent=11 // pred_check_branch
          %323 = sbr.rel (%p321) target = $region48
        $region47: #{bottleneck_forward_nhwc.1} parent=11 // pred_region
          _
        $region48: #{bottleneck_forward_nhwc.1} parent=11 // pred_fallthru
          _
        // Predicated region
        $region49: #{bottleneck_forward_nhwc.1} parent=11 // pred_check
          %p324 = pneg %p256
        $region50: #{bottleneck_forward_nhwc.1} parent=11 // pred_check_branch
          %326 = sbr.rel (%p324) target = $region52
        $region51: #{bottleneck_forward_nhwc.1} parent=11 // pred_region
          _
        $region52: #{bottleneck_forward_nhwc.1} parent=11 // pred_fallthru
          _
      $region12: #{bottleneck_forward_nhwc.1} parent=5 // pred_fallthru
        _
      %p327 = scmp.lt.s32.totalorder %s20, 2
      // Predicated region
      $region53: #{bottleneck_forward_nhwc.1} parent=5 // pred_check
        %p328 = pneg %p327
      $region54: #{bottleneck_forward_nhwc.1} parent=5 // pred_check_branch
        %330 = sbr.rel (%p328) target = $region56
      $region55: #{bottleneck_forward_nhwc.1} parent=5 // pred_region
        // Predicated region
        $region57: #{bottleneck_forward_nhwc.1} parent=55 // pred_check
          %p331 = pneg %p40
        $region58: #{bottleneck_forward_nhwc.1} parent=55 // pred_check_branch
          %333 = sbr.rel (%p331) target = $region60
        $region59: #{bottleneck_forward_nhwc.1} parent=55 // pred_region
          %p334 = scmp.lt.s32.totalorder %s20, 1
          %s335 = scalar_select %p334, %s20, 1
          %s336 = smul.addr %s335, 42
          %s337 = smul.addr %s336, 4
          %s338 = scalar_lea.vmem %s0, %s337
        $region60: #{bottleneck_forward_nhwc.1} parent=55 // pred_fallthru
          _
      $region56: #{bottleneck_forward_nhwc.1} parent=5 // pred_fallthru
        _
      %p339 = scmp.le.s32.totalorder 1, %s20
      %p340 = scmp.lt.s32.totalorder %s20, 3
      %p341 = pnand %p339, %p340
      %p342 = pneg %p341
      // Predicated region
      $region61: #{bottleneck_forward_nhwc.1} parent=5 // pred_check
        _
      $region62: #{bottleneck_forward_nhwc.1} parent=5 // pred_check_branch
        %344 = sbr.rel (%p341) target = $region64
      $region63: #{bottleneck_forward_nhwc.1} parent=5 // pred_region
        %s345 = ssub.s32 %s20, 1
        %p346 = scmp.lt.s32.totalorder %s25, 1
        %s347 = scalar_select %p346, %s25, 1
        %s348 = smul.addr %s347, 42
        %s349 = smul.addr %s348, 4
        %s350 = scalar_lea.vmem %s0, %s349
        %p351 = pneg %p46
        %p352 = pneg %p43
        %p353 = pneg %p67
        %p354 = pneg %p64
        %p355 = pneg %p88
        %p356 = pneg %p85
        %p357 = pneg %p109
        %p358 = pneg %p106
        %p359 = pneg %p130
        %p360 = pneg %p127
        %p361 = pneg %p151
        %p362 = pneg %p148
        %p363 = pneg %p172
        %p364 = pneg %p169
        %p365 = pneg %p193
        %p366 = pneg %p190
        %p367 = pneg %p214
        %p368 = pneg %p211
        %p369 = pneg %p235
        %p370 = pneg %p232
        %p371 = pneg %p256
        %p372 = pneg %p253
        %p373 = pneg %p282
        %p374 = pneg %p279
        %s375 = sand.u32 %s269, 1
        %s376 = scalar_lea.sflag [#allocation4], %s375
        %s377 = sand.u32 %s269, 1
        %s378 = smul.addr %s377, 32
        %s379 = scalar_lea.vmem [#allocation3], %s378
        %p380 = scmp.lt.s32.totalorder %s25, 1
        %s381 = scalar_select %p380, %s25, 1
        %s382 = smul.addr %s381, 42
        %s383 = smul.addr %s382, 4
        %s384 = scalar_lea.vmem %s0, %s383
        %v386 = vld [vmem:[%s384] sm:$0xf]
        %v387 = vld [vmem:[%s384 + $0x4] sm:$0xf]
        %v388 = vld [vmem:[%s384 + $0x8] sm:$0xf]
        %v389 = vld [vmem:[%s384 + $0xc] sm:$0xf]
        %v390 = vld [vmem:[%s384 + $0x10] sm:$0xf]
        %v391 = vld [vmem:[%s384 + $0x14] sm:$0xf]
        %v392 = vld [vmem:[%s384 + $0x18] sm:$0xf]
        %v393 = vld [vmem:[%s384 + $0x1c] sm:$0xf]
        %v394 = vld [vmem:[%s384 + $0x20] sm:$0xf]
        %v395 = vld [vmem:[%s384 + $0x24] sm:$0xf]
        %v396 = vld [vmem:[%s384 + $0x28] sm:$0xf]
        %v397 = vld [vmem:[%s384 + $0x2c] sm:$0xf]
        %v398 = vld [vmem:[%s384 + $0x30] sm:$0xf]
        %v399 = vld [vmem:[%s384 + $0x34] sm:$0xf]
        %v400 = vld [vmem:[%s384 + $0x38] sm:$0xf]
        %v401 = vld [vmem:[%s384 + $0x3c] sm:$0xf]
        %v402 = vld [vmem:[%s384 + $0x40] sm:$0xf]
        %v403 = vld [vmem:[%s384 + $0x44] sm:$0xf]
        %v404 = vld [vmem:[%s384 + $0x48] sm:$0xf]
        %v405 = vld [vmem:[%s384 + $0x4c] sm:$0xf]
        %v406 = vld [vmem:[%s384 + $0x50] sm:$0xf]
        %v407 = vld [vmem:[%s384 + $0x54] sm:$0xf]
        %v408 = vld [vmem:[%s384 + $0x58] sm:$0xf]
        %v409 = vld [vmem:[%s384 + $0x5c] sm:$0xf]
        %v410 = vld [vmem:[%s384 + $0x60] sm:$0xf]
        %v411 = vld [vmem:[%s384 + $0x64] sm:$0xf]
        %v412 = vld [vmem:[%s384 + $0x68] sm:$0xf]
        %v413 = vld [vmem:[%s384 + $0x6c] sm:$0xf]
        %v414 = vld [vmem:[%s384 + $0x70] sm:$0xf]
        %v415 = vld [vmem:[%s384 + $0x74] sm:$0xf]
        %v416 = vld [vmem:[%s384 + $0x78] sm:$0xf]
        %v417 = vld [vmem:[%s384 + $0x7c] sm:$0xf]
        %v418 = vld [vmem:[%s384 + $0x80] sm:$0xf]
        %v419 = vld [vmem:[%s384 + $0x84] sm:$0xf]
        %v420 = vld [vmem:[%s384 + $0x88] sm:$0xf]
        %v421 = vld [vmem:[%s384 + $0x8c] sm:$0xf]
        %v422 = vld [vmem:[%s384 + $0x90] sm:$0xf]
        %v423 = vld [vmem:[%s384 + $0x94] sm:$0xf]
        %v424 = vld [vmem:[%s384 + $0x98] sm:$0xf]
        %v425 = vld [vmem:[%s384 + $0x9c] sm:$0xf]
        %v426 = vld [vmem:[%s384 + $0xa0] sm:$0xf]
        %v427 = vld [vmem:[%s384 + $0xa4] sm:$0xf]
        %v428 = vld [vmem:[%s3] sm:$0xf]
        %v429 = vld [vmem:[%s3 + $0x4] sm:$0xf]
        %v430 = vld [vmem:[%s3 + $0x8] sm:$0xf]
        %v431 = vld [vmem:[%s3 + $0xc] sm:$0xf]
        %v432 = vld [vmem:[%s3 + $0x10] sm:$0xf]
        %v433 = vld [vmem:[%s3 + $0x14] sm:$0xf]
        %v434 = vld [vmem:[%s3 + $0x18] sm:$0xf]
        %v435 = vld [vmem:[%s3 + $0x1c] sm:$0xf]
        %v436 = vld [vmem:[%s4] sm:$0x1]
        %v438 = vlaneseq
        %v439 = vshrl.u32 %v438, 7
        %v440 = vsub.s32 0, %v439
        %v441 = vrot.slane %v436, %v440
        %v485 = vunpack.c.l.b16 %v386
        %v486 = vunpack.c.l.b16 %v387
        %v487 = vunpack.c.l.b16 %v388
        %v488 = vunpack.c.l.b16 %v389
        %v489 = vunpack.c.l.b16 %v390
        %v490 = vunpack.c.l.b16 %v391
        %v491 = vunpack.c.l.b16 %v392
        %v492 = vunpack.c.l.b16 %v393
        %v493 = vunpack.c.l.b16 %v394
        %v494 = vunpack.c.l.b16 %v395
        %v495 = vunpack.c.l.b16 %v396
        %v496 = vunpack.c.l.b16 %v397
        %v497 = vunpack.c.l.b16 %v398
        %v498 = vunpack.c.l.b16 %v399
        %v499 = vunpack.c.l.b16 %v400
        %v500 = vunpack.c.l.b16 %v401
        %v501 = vunpack.c.l.b16 %v402
        %v502 = vunpack.c.l.b16 %v403
        %v503 = vunpack.c.l.b16 %v404
        %v504 = vunpack.c.l.b16 %v405
        %v505 = vunpack.c.l.b16 %v406
        %v506 = vunpack.c.l.b16 %v407
        %v507 = vunpack.c.l.b16 %v408
        %v508 = vunpack.c.l.b16 %v409
        %v509 = vunpack.c.l.b16 %v410
        %v510 = vunpack.c.l.b16 %v411
        %v511 = vunpack.c.l.b16 %v412
        %v512 = vunpack.c.l.b16 %v413
        %v513 = vunpack.c.l.b16 %v414
        %v514 = vunpack.c.l.b16 %v415
        %v515 = vunpack.c.l.b16 %v416
        %v516 = vunpack.c.l.b16 %v417
        %v517 = vunpack.c.l.b16 %v418
        %v518 = vunpack.c.l.b16 %v419
        %v519 = vunpack.c.l.b16 %v420
        %v520 = vunpack.c.l.b16 %v421
        %v521 = vunpack.c.l.b16 %v422
        %v522 = vunpack.c.l.b16 %v423
        %v523 = vunpack.c.l.b16 %v424
        %v524 = vunpack.c.l.b16 %v425
        %v525 = vunpack.c.l.b16 %v426
        %v526 = vunpack.c.l.b16 %v427
        %v527 = vpack.c.b16 %v486, %v485
        %v528 = vpack.c.b16 %v488, %v487
        %v529 = vpack.c.b16 %v490, %v489
        %v530 = vpack.c.b16 %v492, %v491
        %v531 = vpack.c.b16 %v494, %v493
        %v532 = vpack.c.b16 %v496, %v495
        %v533 = vpack.c.b16 %v498, %v497
        %v534 = vpack.c.b16 %v500, %v499
        %v535 = vpack.c.b16 %v502, %v501
        %v536 = vpack.c.b16 %v504, %v503
        %v537 = vpack.c.b16 %v506, %v505
        %v538 = vpack.c.b16 %v508, %v507
        %v539 = vpack.c.b16 %v510, %v509
        %v540 = vpack.c.b16 %v512, %v511
        %v541 = vpack.c.b16 %v514, %v513
        %v542 = vpack.c.b16 %v516, %v515
        %v543 = vpack.c.b16 %v518, %v517
        %v544 = vpack.c.b16 %v520, %v519
        %v545 = vpack.c.b16 %v522, %v521
        %v546 = vpack.c.b16 %v524, %v523
        %v547 = vpack.c.b16 %v526, %v525
        %v556 = vunpack.c.l.b16 %v428
        %v557 = vunpack.c.l.b16 %v429
        %v558 = vunpack.c.l.b16 %v430
        %v559 = vunpack.c.l.b16 %v431
        %v560 = vunpack.c.l.b16 %v432
        %v561 = vunpack.c.l.b16 %v433
        %v562 = vunpack.c.l.b16 %v434
        %v563 = vunpack.c.l.b16 %v435
        %v564 = vpack.c.b16 %v557, %v556
        %v565 = vpack.c.b16 %v559, %v558
        %v566 = vpack.c.b16 %v561, %v560
        %v567 = vpack.c.b16 %v563, %v562
        %vm572 = vcmask 523264
        %v574 = vsel %vm572, %v527, 0
        %v577 = vsel %vm572, %v528, 0
        %v580 = vsel %vm572, %v529, 0
        %v583 = vsel %vm572, %v530, 0
        %v586 = vsel %vm572, %v531, 0
        %v589 = vsel %vm572, %v532, 0
        %v592 = vsel %vm572, %v533, 0
        %v595 = vsel %vm572, %v534, 0
        %v598 = vsel %vm572, %v535, 0
        %v601 = vsel %vm572, %v536, 0
        %v604 = vsel %vm572, %v537, 0
        %v607 = vsel %vm572, %v538, 0
        %v610 = vsel %vm572, %v539, 0
        %v613 = vsel %vm572, %v540, 0
        %v616 = vsel %vm572, %v541, 0
        %v619 = vsel %vm572, %v542, 0
        %v622 = vsel %vm572, %v543, 0
        %v625 = vsel %vm572, %v544, 0
        %v628 = vsel %vm572, %v545, 0
        %v631 = vsel %vm572, %v546, 0
        %v634 = vsel %vm572, %v547, 0
        %636 = vmatprep.subr.bf16.mxu0 0
        %637 = vmatpush1.bf16.msra.mxu0 0
        %638 = vmatprep.subr.bf16.mxu0 0
        %639 = vmatpush1.bf16.msra.mxu0 0
        %640 = vmatprep.subr.bf16.mxu0 0
        %641 = vmatpush1.bf16.msra.mxu0 0
        %642 = vmatprep.subr.bf16.mxu0 0
        %643 = vmatpush1.bf16.msra.mxu0 0
        %644 = vmatprep.subr.bf16.mxu0 0
        %645 = vmatpush1.bf16.msra.mxu0 %v567
        %646 = vmatprep.subr.bf16.mxu0 0
        %647 = vmatpush1.bf16.msra.mxu0 %v566
        %648 = vmatprep.subr.bf16.mxu0 0
        %649 = vmatpush1.bf16.msra.mxu0 %v565
        %650 = vmatprep.subr.bf16.mxu0 0
        %651 = vmatpush1.bf16.msra.mxu0 %v564
        %652 = vmatprep.subr.bf16.mxu0 0
        %653 = vmatpush2.bf16.msra.mxu0 0
        %654 = vmatprep.subr.bf16.mxu0 0
        %655 = vmatpush2.bf16.msra.mxu0 0
        %656 = vmatprep.subr.bf16.mxu0 0
        %657 = vmatpush2.bf16.msra.mxu0 0
        %658 = vmatprep.subr.bf16.mxu0 0
        %659 = vmatpush2.bf16.msra.mxu0 0
        %660 = vmatprep.subr.bf16.mxu0 0
        %661 = vmatpush2.bf16.msra.mxu0 0
        %662 = vmatprep.subr.bf16.mxu0 0
        %663 = vmatpush2.bf16.msra.mxu0 0
        %664 = vmatprep.subr.bf16.mxu0 0
        %665 = vmatpush2.bf16.msra.mxu0 0
        %666 = vmatprep.subr.bf16.mxu0 0
        %667 = vmatpush2.bf16.msra.mxu0 0
        %668 = vmatprep.mubr.bf16.mxu0 0
        %669 = vmatmul.mubr.bf16.gmra.mxu0 %v574
        %v670 = vpop.f32.mrf.mxu0
        %v671 = vadd.f32 %v441, %v670
        %v672 = vpop.f32.mrf.mxu0
        %v673 = vpop.f32.mrf.mxu0
        %v674 = vadd.f32 %v441, %v673
        %v675 = vpop.f32.mrf.mxu0
        %676 = vmatprep.mubr.bf16.mxu0 0
        %677 = vmatmul.mubr.bf16.gmra.mxu0 %v577
        %v678 = vpop.f32.mrf.mxu0
        %v679 = vadd.f32 %v441, %v678
        %v680 = vpop.f32.mrf.mxu0
        %v681 = vpop.f32.mrf.mxu0
        %v682 = vadd.f32 %v441, %v681
        %v683 = vpop.f32.mrf.mxu0
        %684 = vmatprep.mubr.bf16.mxu0 0
        %685 = vmatmul.mubr.bf16.gmra.mxu0 %v580
        %v686 = vpop.f32.mrf.mxu0
        %v687 = vadd.f32 %v441, %v686
        %v688 = vpop.f32.mrf.mxu0
        %v689 = vpop.f32.mrf.mxu0
        %v690 = vadd.f32 %v441, %v689
        %v691 = vpop.f32.mrf.mxu0
        %692 = vmatprep.mubr.bf16.mxu0 0
        %693 = vmatmul.mubr.bf16.gmra.mxu0 %v583
        %v694 = vpop.f32.mrf.mxu0
        %v695 = vadd.f32 %v441, %v694
        %v696 = vpop.f32.mrf.mxu0
        %v697 = vpop.f32.mrf.mxu0
        %v698 = vadd.f32 %v441, %v697
        %v699 = vpop.f32.mrf.mxu0
        %700 = vmatprep.mubr.bf16.mxu0 0
        %701 = vmatmul.mubr.bf16.gmra.mxu0 %v586
        %v702 = vpop.f32.mrf.mxu0
        %v703 = vadd.f32 %v441, %v702
        %v704 = vpop.f32.mrf.mxu0
        %v705 = vpop.f32.mrf.mxu0
        %v706 = vadd.f32 %v441, %v705
        %v707 = vpop.f32.mrf.mxu0
        %708 = vmatprep.mubr.bf16.mxu0 0
        %709 = vmatmul.mubr.bf16.gmra.mxu0 %v589
        %v710 = vpop.f32.mrf.mxu0
        %v711 = vadd.f32 %v441, %v710
        %v712 = vpop.f32.mrf.mxu0
        %v713 = vpop.f32.mrf.mxu0
        %v714 = vadd.f32 %v441, %v713
        %v715 = vpop.f32.mrf.mxu0
        %716 = vmatprep.mubr.bf16.mxu0 0
        %717 = vmatmul.mubr.bf16.gmra.mxu0 %v592
        %v718 = vpop.f32.mrf.mxu0
        %v719 = vadd.f32 %v441, %v718
        %v720 = vpop.f32.mrf.mxu0
        %v721 = vpop.f32.mrf.mxu0
        %v722 = vadd.f32 %v441, %v721
        %v723 = vpop.f32.mrf.mxu0
        %724 = vmatprep.mubr.bf16.mxu0 0
        %725 = vmatmul.mubr.bf16.gmra.mxu0 %v595
        %v726 = vpop.f32.mrf.mxu0
        %v727 = vadd.f32 %v441, %v726
        %v728 = vpop.f32.mrf.mxu0
        %v729 = vpop.f32.mrf.mxu0
        %v730 = vadd.f32 %v441, %v729
        %v731 = vpop.f32.mrf.mxu0
        %732 = vmatprep.mubr.bf16.mxu0 0
        %733 = vmatmul.mubr.bf16.gmra.mxu0 %v598
        %v734 = vpop.f32.mrf.mxu0
        %v735 = vadd.f32 %v441, %v734
        %v736 = vpop.f32.mrf.mxu0
        %v737 = vpop.f32.mrf.mxu0
        %v738 = vadd.f32 %v441, %v737
        %v739 = vpop.f32.mrf.mxu0
        %740 = vmatprep.mubr.bf16.mxu0 0
        %741 = vmatmul.mubr.bf16.gmra.mxu0 %v601
        %v742 = vpop.f32.mrf.mxu0
        %v743 = vadd.f32 %v441, %v742
        %v744 = vpop.f32.mrf.mxu0
        %v745 = vpop.f32.mrf.mxu0
        %v746 = vadd.f32 %v441, %v745
        %v747 = vpop.f32.mrf.mxu0
        %748 = vmatprep.mubr.bf16.mxu0 0
        %749 = vmatmul.mubr.bf16.gmra.mxu0 %v604
        %v750 = vpop.f32.mrf.mxu0
        %v751 = vadd.f32 %v441, %v750
        %v752 = vpop.f32.mrf.mxu0
        %v753 = vpop.f32.mrf.mxu0
        %v754 = vadd.f32 %v441, %v753
        %v755 = vpop.f32.mrf.mxu0
        %756 = vmatprep.mubr.bf16.mxu0 0
        %757 = vmatmul.mubr.bf16.gmra.mxu0 %v607
        %v758 = vpop.f32.mrf.mxu0
        %v759 = vadd.f32 %v441, %v758
        %v760 = vpop.f32.mrf.mxu0
        %v761 = vpop.f32.mrf.mxu0
        %v762 = vadd.f32 %v441, %v761
        %v763 = vpop.f32.mrf.mxu0
        %764 = vmatprep.mubr.bf16.mxu0 0
        %765 = vmatmul.mubr.bf16.gmra.mxu0 %v610
        %v766 = vpop.f32.mrf.mxu0
        %v767 = vadd.f32 %v441, %v766
        %v768 = vpop.f32.mrf.mxu0
        %v769 = vpop.f32.mrf.mxu0
        %v770 = vadd.f32 %v441, %v769
        %v771 = vpop.f32.mrf.mxu0
        %772 = vmatprep.mubr.bf16.mxu0 0
        %773 = vmatmul.mubr.bf16.gmra.mxu0 %v613
        %v774 = vpop.f32.mrf.mxu0
        %v775 = vadd.f32 %v441, %v774
        %v776 = vpop.f32.mrf.mxu0
        %v777 = vpop.f32.mrf.mxu0
        %v778 = vadd.f32 %v441, %v777
        %v779 = vpop.f32.mrf.mxu0
        %780 = vmatprep.mubr.bf16.mxu0 0
        %781 = vmatmul.mubr.bf16.gmra.mxu0 %v616
        %v782 = vpop.f32.mrf.mxu0
        %v783 = vadd.f32 %v441, %v782
        %v784 = vpop.f32.mrf.mxu0
        %v785 = vpop.f32.mrf.mxu0
        %v786 = vadd.f32 %v441, %v785
        %v787 = vpop.f32.mrf.mxu0
        %788 = vmatprep.mubr.bf16.mxu0 0
        %789 = vmatmul.mubr.bf16.gmra.mxu0 %v619
        %v790 = vpop.f32.mrf.mxu0
        %v791 = vadd.f32 %v441, %v790
        %v792 = vpop.f32.mrf.mxu0
        %v793 = vpop.f32.mrf.mxu0
        %v794 = vadd.f32 %v441, %v793
        %v795 = vpop.f32.mrf.mxu0
        %796 = vmatprep.mubr.bf16.mxu0 0
        %797 = vmatmul.mubr.bf16.gmra.mxu0 %v622
        %v798 = vpop.f32.mrf.mxu0
        %v799 = vadd.f32 %v441, %v798
        %v800 = vpop.f32.mrf.mxu0
        %v801 = vpop.f32.mrf.mxu0
        %v802 = vadd.f32 %v441, %v801
        %v803 = vpop.f32.mrf.mxu0
        %804 = vmatprep.mubr.bf16.mxu0 0
        %805 = vmatmul.mubr.bf16.gmra.mxu0 %v625
        %v806 = vpop.f32.mrf.mxu0
        %v807 = vadd.f32 %v441, %v806
        %v808 = vpop.f32.mrf.mxu0
        %v809 = vpop.f32.mrf.mxu0
        %v810 = vadd.f32 %v441, %v809
        %v811 = vpop.f32.mrf.mxu0
        %812 = vmatprep.mubr.bf16.mxu0 0
        %813 = vmatmul.mubr.bf16.gmra.mxu0 %v628
        %v814 = vpop.f32.mrf.mxu0
        %v815 = vadd.f32 %v441, %v814
        %v816 = vpop.f32.mrf.mxu0
        %v817 = vpop.f32.mrf.mxu0
        %v818 = vadd.f32 %v441, %v817
        %v819 = vpop.f32.mrf.mxu0
        %820 = vmatprep.mubr.bf16.mxu0 0
        %821 = vmatmul.mubr.bf16.gmra.mxu0 %v631
        %v822 = vpop.f32.mrf.mxu0
        %v823 = vadd.f32 %v441, %v822
        %v824 = vpop.f32.mrf.mxu0
        %v825 = vpop.f32.mrf.mxu0
        %v826 = vadd.f32 %v441, %v825
        %v827 = vpop.f32.mrf.mxu0
        %828 = vmatprep.mubr.bf16.mxu0 0
        %829 = vmatmul.mubr.bf16.gmra.mxu0 %v634
        %v830 = vpop.f32.mrf.mxu0
        %v831 = vadd.f32 %v441, %v830
        %v832 = vpop.f32.mrf.mxu0
        %v833 = vpop.f32.mrf.mxu0
        %v834 = vadd.f32 %v441, %v833
        %v835 = vpop.f32.mrf.mxu0
        %836 = vdwg.mxu0
        %v837 = vmax.f32 %v671, 0.0
        %v838 = vmax.f32 %v674, 0.0
        %v839 = vmax.f32 %v679, 0.0
        %v840 = vmax.f32 %v682, 0.0
        %v841 = vmax.f32 %v687, 0.0
        %v842 = vmax.f32 %v690, 0.0
        %v843 = vmax.f32 %v695, 0.0
        %v844 = vmax.f32 %v698, 0.0
        %v845 = vmax.f32 %v703, 0.0
        %v846 = vmax.f32 %v706, 0.0
        %v847 = vmax.f32 %v711, 0.0
        %v848 = vmax.f32 %v714, 0.0
        %v849 = vmax.f32 %v719, 0.0
        %v850 = vmax.f32 %v722, 0.0
        %v851 = vmax.f32 %v727, 0.0
        %v852 = vmax.f32 %v730, 0.0
        %v853 = vmax.f32 %v735, 0.0
        %v854 = vmax.f32 %v738, 0.0
        %v855 = vmax.f32 %v743, 0.0
        %v856 = vmax.f32 %v746, 0.0
        %v857 = vmax.f32 %v751, 0.0
        %v858 = vmax.f32 %v754, 0.0
        %v859 = vmax.f32 %v759, 0.0
        %v860 = vmax.f32 %v762, 0.0
        %v861 = vmax.f32 %v767, 0.0
        %v862 = vmax.f32 %v770, 0.0
        %v863 = vmax.f32 %v775, 0.0
        %v864 = vmax.f32 %v778, 0.0
        %v865 = vmax.f32 %v783, 0.0
        %v866 = vmax.f32 %v786, 0.0
        %v867 = vmax.f32 %v791, 0.0
        %v868 = vmax.f32 %v794, 0.0
        %v869 = vmax.f32 %v799, 0.0
        %v870 = vmax.f32 %v802, 0.0
        %v871 = vmax.f32 %v807, 0.0
        %v872 = vmax.f32 %v810, 0.0
        %v873 = vmax.f32 %v815, 0.0
        %v874 = vmax.f32 %v818, 0.0
        %v875 = vmax.f32 %v823, 0.0
        %v876 = vmax.f32 %v826, 0.0
        %v877 = vmax.f32 %v831, 0.0
        %v878 = vmax.f32 %v834, 0.0
        %v879 = vld [vmem:[%s1] sm:$0xff]
        %v880 = vld [vmem:[%s1 + $0x8] sm:$0xff]
        %v881 = vld [vmem:[%s1 + $0x10] sm:$0xff]
        %v882 = vld [vmem:[%s1 + $0x18] sm:$0xff]
        %v883 = vld [vmem:[%s1 + $0x20] sm:$0xff]
        %v884 = vld [vmem:[%s1 + $0x28] sm:$0xff]
        %v885 = vld [vmem:[%s1 + $0x30] sm:$0xff]
        %v886 = vld [vmem:[%s1 + $0x38] sm:$0xff]
        %v887 = vld [vmem:[%s1 + $0x40] sm:$0xff]
        %v888 = vld [vmem:[%s1 + $0x48] sm:$0xff]
        %v889 = vld [vmem:[%s1 + $0x50] sm:$0xff]
        %v890 = vld [vmem:[%s1 + $0x58] sm:$0xff]
        %v891 = vld [vmem:[%s1 + $0x60] sm:$0xff]
        %v892 = vld [vmem:[%s1 + $0x68] sm:$0xff]
        %v893 = vld [vmem:[%s1 + $0x70] sm:$0xff]
        %v894 = vld [vmem:[%s1 + $0x78] sm:$0xff]
        %v895 = vld [vmem:[%s1 + $0x80] sm:$0xff]
        %v896 = vld [vmem:[%s1 + $0x88] sm:$0xff]
        %v897 = vld [vmem:[%s1 + $0x90] sm:$0xff]
        %v898 = vld [vmem:[%s1 + $0x98] sm:$0xff]
        %v899 = vld [vmem:[%s1 + $0xa0] sm:$0xff]
        %v900 = vld [vmem:[%s1 + $0xa8] sm:$0xff]
        %v901 = vld [vmem:[%s1 + $0xb0] sm:$0xff]
        %v902 = vld [vmem:[%s1 + $0xb8] sm:$0xff]
        %v903 = vld [vmem:[%s1 + $0xc0] sm:$0xff]
        %v904 = vld [vmem:[%s1 + $0xc8] sm:$0xff]
        %v905 = vld [vmem:[%s1 + $0xd0] sm:$0xff]
        %v906 = vld [vmem:[%s1 + $0xd8] sm:$0xff]
        %v907 = vld [vmem:[%s1 + $0xe0] sm:$0xff]
        %v908 = vld [vmem:[%s1 + $0xe8] sm:$0xff]
        %v909 = vld [vmem:[%s1 + $0xf0] sm:$0xff]
        %v910 = vld [vmem:[%s1 + $0xf8] sm:$0xff]
        %v911 = vld [vmem:[%s1 + $0x100] sm:$0xff]
        %v912 = vld [vmem:[%s1 + $0x108] sm:$0xff]
        %v913 = vld [vmem:[%s1 + $0x110] sm:$0xff]
        %v914 = vld [vmem:[%s1 + $0x118] sm:$0xff]
        %v915 = vld [vmem:[%s1 + $0x120] sm:$0xff]
        %v916 = vld [vmem:[%s1 + $0x128] sm:$0xff]
        %v917 = vld [vmem:[%s1 + $0x130] sm:$0xff]
        %v918 = vld [vmem:[%s1 + $0x138] sm:$0xff]
        %v919 = vld [vmem:[%s1 + $0x140] sm:$0xff]
        %v920 = vld [vmem:[%s1 + $0x148] sm:$0xff]
        %922 = vset.pattern.permute.xlu0 0
        %923 = vperm.xlu0 %922, %v879
        %v924 = vpop.permute.xlu0 %923
        %927 = vset.pattern.permute.xlu0 0
        %928 = vperm.xlu0 %927, %v880
        %v929 = vpop.permute.xlu0 %928
        %932 = vset.pattern.permute.xlu0 0
        %933 = vperm.xlu0 %932, %v881
        %v934 = vpop.permute.xlu0 %933
        %937 = vset.pattern.permute.xlu0 0
        %938 = vperm.xlu0 %937, %v882
        %v939 = vpop.permute.xlu0 %938
        %942 = vset.pattern.permute.xlu0 0
        %943 = vperm.xlu0 %942, %v883
        %v944 = vpop.permute.xlu0 %943
        %947 = vset.pattern.permute.xlu0 0
        %948 = vperm.xlu0 %947, %v884
        %v949 = vpop.permute.xlu0 %948
        %952 = vset.pattern.permute.xlu0 0
        %953 = vperm.xlu0 %952, %v885
        %v954 = vpop.permute.xlu0 %953
        %957 = vset.pattern.permute.xlu0 0
        %958 = vperm.xlu0 %957, %v886
        %v959 = vpop.permute.xlu0 %958
        %962 = vset.pattern.permute.xlu0 0
        %963 = vperm.xlu0 %962, %v887
        %v964 = vpop.permute.xlu0 %963
        %967 = vset.pattern.permute.xlu0 0
        %968 = vperm.xlu0 %967, %v888
        %v969 = vpop.permute.xlu0 %968
        %972 = vset.pattern.permute.xlu0 0
        %973 = vperm.xlu0 %972, %v889
        %v974 = vpop.permute.xlu0 %973
        %977 = vset.pattern.permute.xlu0 0
        %978 = vperm.xlu0 %977, %v890
        %v979 = vpop.permute.xlu0 %978
        %982 = vset.pattern.permute.xlu0 0
        %983 = vperm.xlu0 %982, %v891
        %v984 = vpop.permute.xlu0 %983
        %987 = vset.pattern.permute.xlu0 0
        %988 = vperm.xlu0 %987, %v892
        %v989 = vpop.permute.xlu0 %988
        %992 = vset.pattern.permute.xlu0 0
        %993 = vperm.xlu0 %992, %v893
        %v994 = vpop.permute.xlu0 %993
        %997 = vset.pattern.permute.xlu0 0
        %998 = vperm.xlu0 %997, %v894
        %v999 = vpop.permute.xlu0 %998
        %1002 = vset.pattern.permute.xlu0 0
        %1003 = vperm.xlu0 %1002, %v895
        %v1004 = vpop.permute.xlu0 %1003
        %1007 = vset.pattern.permute.xlu0 0
        %1008 = vperm.xlu0 %1007, %v896
        %v1009 = vpop.permute.xlu0 %1008
        %1012 = vset.pattern.permute.xlu0 0
        %1013 = vperm.xlu0 %1012, %v897
        %v1014 = vpop.permute.xlu0 %1013
        %1017 = vset.pattern.permute.xlu0 0
        %1018 = vperm.xlu0 %1017, %v898
        %v1019 = vpop.permute.xlu0 %1018
        %1022 = vset.pattern.permute.xlu0 0
        %1023 = vperm.xlu0 %1022, %v899
        %v1024 = vpop.permute.xlu0 %1023
        %1027 = vset.pattern.permute.xlu0 0
        %1028 = vperm.xlu0 %1027, %v900
        %v1029 = vpop.permute.xlu0 %1028
        %1032 = vset.pattern.permute.xlu0 0
        %1033 = vperm.xlu0 %1032, %v901
        %v1034 = vpop.permute.xlu0 %1033
        %1037 = vset.pattern.permute.xlu0 0
        %1038 = vperm.xlu0 %1037, %v902
        %v1039 = vpop.permute.xlu0 %1038
        %1042 = vset.pattern.permute.xlu0 0
        %1043 = vperm.xlu0 %1042, %v903
        %v1044 = vpop.permute.xlu0 %1043
        %1047 = vset.pattern.permute.xlu0 0
        %1048 = vperm.xlu0 %1047, %v904
        %v1049 = vpop.permute.xlu0 %1048
        %1052 = vset.pattern.permute.xlu0 0
        %1053 = vperm.xlu0 %1052, %v905
        %v1054 = vpop.permute.xlu0 %1053
        %1057 = vset.pattern.permute.xlu0 0
        %1058 = vperm.xlu0 %1057, %v906
        %v1059 = vpop.permute.xlu0 %1058
        %1062 = vset.pattern.permute.xlu0 0
        %1063 = vperm.xlu0 %1062, %v907
        %v1064 = vpop.permute.xlu0 %1063
        %1067 = vset.pattern.permute.xlu0 0
        %1068 = vperm.xlu0 %1067, %v908
        %v1069 = vpop.permute.xlu0 %1068
        %1072 = vset.pattern.permute.xlu0 0
        %1073 = vperm.xlu0 %1072, %v909
        %v1074 = vpop.permute.xlu0 %1073
        %1077 = vset.pattern.permute.xlu0 0
        %1078 = vperm.xlu0 %1077, %v910
        %v1079 = vpop.permute.xlu0 %1078
        %1082 = vset.pattern.permute.xlu0 0
        %1083 = vperm.xlu0 %1082, %v911
        %v1084 = vpop.permute.xlu0 %1083
        %1087 = vset.pattern.permute.xlu0 0
        %1088 = vperm.xlu0 %1087, %v912
        %v1089 = vpop.permute.xlu0 %1088
        %1092 = vset.pattern.permute.xlu0 0
        %1093 = vperm.xlu0 %1092, %v913
        %v1094 = vpop.permute.xlu0 %1093
        %1097 = vset.pattern.permute.xlu0 0
        %1098 = vperm.xlu0 %1097, %v914
        %v1099 = vpop.permute.xlu0 %1098
        %1102 = vset.pattern.permute.xlu0 0
        %1103 = vperm.xlu0 %1102, %v915
        %v1104 = vpop.permute.xlu0 %1103
        %1107 = vset.pattern.permute.xlu0 0
        %1108 = vperm.xlu0 %1107, %v916
        %v1109 = vpop.permute.xlu0 %1108
        %1112 = vset.pattern.permute.xlu0 0
        %1113 = vperm.xlu0 %1112, %v917
        %v1114 = vpop.permute.xlu0 %1113
        %1117 = vset.pattern.permute.xlu0 0
        %1118 = vperm.xlu0 %1117, %v918
        %v1119 = vpop.permute.xlu0 %1118
        %1122 = vset.pattern.permute.xlu0 0
        %1123 = vperm.xlu0 %1122, %v919
        %v1124 = vpop.permute.xlu0 %1123
        %1127 = vset.pattern.permute.xlu0 0
        %1128 = vperm.xlu0 %1127, %v920
        %v1129 = vpop.permute.xlu0 %1128
        %v1131 = vmul.f32 %v837, %v924
        %v1132 = vmul.f32 %v838, %v929
        %v1133 = vmul.f32 %v839, %v934
        %v1134 = vmul.f32 %v840, %v939
        %v1135 = vmul.f32 %v841, %v944
        %v1136 = vmul.f32 %v842, %v949
        %v1137 = vmul.f32 %v843, %v954
        %v1138 = vmul.f32 %v844, %v959
        %v1139 = vmul.f32 %v845, %v964
        %v1140 = vmul.f32 %v846, %v969
        %v1141 = vmul.f32 %v847, %v974
        %v1142 = vmul.f32 %v848, %v979
        %v1143 = vmul.f32 %v849, %v984
        %v1144 = vmul.f32 %v850, %v989
        %v1145 = vmul.f32 %v851, %v994
        %v1146 = vmul.f32 %v852, %v999
        %v1147 = vmul.f32 %v853, %v1004
        %v1148 = vmul.f32 %v854, %v1009
        %v1149 = vmul.f32 %v855, %v1014
        %v1150 = vmul.f32 %v856, %v1019
        %v1151 = vmul.f32 %v857, %v1024
        %v1152 = vmul.f32 %v858, %v1029
        %v1153 = vmul.f32 %v859, %v1034
        %v1154 = vmul.f32 %v860, %v1039
        %v1155 = vmul.f32 %v861, %v1044
        %v1156 = vmul.f32 %v862, %v1049
        %v1157 = vmul.f32 %v863, %v1054
        %v1158 = vmul.f32 %v864, %v1059
        %v1159 = vmul.f32 %v865, %v1064
        %v1160 = vmul.f32 %v866, %v1069
        %v1161 = vmul.f32 %v867, %v1074
        %v1162 = vmul.f32 %v868, %v1079
        %v1163 = vmul.f32 %v869, %v1084
        %v1164 = vmul.f32 %v870, %v1089
        %v1165 = vmul.f32 %v871, %v1094
        %v1166 = vmul.f32 %v872, %v1099
        %v1167 = vmul.f32 %v873, %v1104
        %v1168 = vmul.f32 %v874, %v1109
        %v1169 = vmul.f32 %v875, %v1114
        %v1170 = vmul.f32 %v876, %v1119
        %v1171 = vmul.f32 %v877, %v1124
        %v1172 = vmul.f32 %v878, %v1129
        %v1173 = vpack.c.bf16 %v1132, %v1131
        %v1174 = vpack.c.bf16 %v1134, %v1133
        %v1175 = vpack.c.bf16 %v1136, %v1135
        %v1176 = vpack.c.bf16 %v1138, %v1137
        %v1177 = vpack.c.bf16 %v1140, %v1139
        %v1178 = vpack.c.bf16 %v1142, %v1141
        %v1179 = vpack.c.bf16 %v1144, %v1143
        %v1180 = vpack.c.bf16 %v1146, %v1145
        %v1181 = vpack.c.bf16 %v1148, %v1147
        %v1182 = vpack.c.bf16 %v1150, %v1149
        %v1183 = vpack.c.bf16 %v1152, %v1151
        %v1184 = vpack.c.bf16 %v1154, %v1153
        %v1185 = vpack.c.bf16 %v1156, %v1155
        %v1186 = vpack.c.bf16 %v1158, %v1157
        %v1187 = vpack.c.bf16 %v1160, %v1159
        %v1188 = vpack.c.bf16 %v1162, %v1161
        %v1189 = vpack.c.bf16 %v1164, %v1163
        %v1190 = vpack.c.bf16 %v1166, %v1165
        %v1191 = vpack.c.bf16 %v1168, %v1167
        %v1192 = vpack.c.bf16 %v1170, %v1169
        %v1193 = vpack.c.bf16 %v1172, %v1171
        %v1215 = vunpack.c.l.b16 %v1173
        %v1216 = vunpack.c.h.b16 %v1173
        %v1217 = vunpack.c.l.b16 %v1174
        %v1218 = vunpack.c.h.b16 %v1174
        %v1219 = vunpack.c.l.b16 %v1175
        %v1220 = vunpack.c.h.b16 %v1175
        %v1221 = vunpack.c.l.b16 %v1176
        %v1222 = vunpack.c.h.b16 %v1176
        %v1223 = vunpack.c.l.b16 %v1177
        %v1224 = vunpack.c.h.b16 %v1177
        %v1225 = vunpack.c.l.b16 %v1178
        %v1226 = vunpack.c.h.b16 %v1178
        %v1227 = vunpack.c.l.b16 %v1179
        %v1228 = vunpack.c.h.b16 %v1179
        %v1229 = vunpack.c.l.b16 %v1180
        %v1230 = vunpack.c.h.b16 %v1180
        %v1231 = vunpack.c.l.b16 %v1181
        %v1232 = vunpack.c.h.b16 %v1181
        %v1233 = vunpack.c.l.b16 %v1182
        %v1234 = vunpack.c.h.b16 %v1182
        %v1235 = vunpack.c.l.b16 %v1183
        %v1236 = vunpack.c.h.b16 %v1183
        %v1237 = vunpack.c.l.b16 %v1184
        %v1238 = vunpack.c.h.b16 %v1184
        %v1239 = vunpack.c.l.b16 %v1185
        %v1240 = vunpack.c.h.b16 %v1185
        %v1241 = vunpack.c.l.b16 %v1186
        %v1242 = vunpack.c.h.b16 %v1186
        %v1243 = vunpack.c.l.b16 %v1187
        %v1244 = vunpack.c.h.b16 %v1187
        %v1245 = vunpack.c.l.b16 %v1188
        %v1246 = vunpack.c.h.b16 %v1188
        %v1247 = vunpack.c.l.b16 %v1189
        %v1248 = vunpack.c.h.b16 %v1189
        %v1249 = vunpack.c.l.b16 %v1190
        %v1250 = vunpack.c.h.b16 %v1190
        %v1251 = vunpack.c.l.b16 %v1191
        %v1252 = vunpack.c.h.b16 %v1191
        %v1253 = vunpack.c.l.b16 %v1192
        %v1254 = vunpack.c.h.b16 %v1192
        %v1255 = vunpack.c.l.b16 %v1193
        %v1256 = vunpack.c.h.b16 %v1193
        %v1257 = vpack.c.b16 %v1215, %v1215
        %v1258 = vpack.c.b16 %v1216, %v1216
        %v1259 = vpack.c.b16 %v1217, %v1217
        %v1260 = vpack.c.b16 %v1218, %v1218
        %v1261 = vpack.c.b16 %v1219, %v1219
        %v1262 = vpack.c.b16 %v1220, %v1220
        %v1263 = vpack.c.b16 %v1221, %v1221
        %v1264 = vpack.c.b16 %v1222, %v1222
        %v1265 = vpack.c.b16 %v1223, %v1223
        %v1266 = vpack.c.b16 %v1224, %v1224
        %v1267 = vpack.c.b16 %v1225, %v1225
        %v1268 = vpack.c.b16 %v1226, %v1226
        %v1269 = vpack.c.b16 %v1227, %v1227
        %v1270 = vpack.c.b16 %v1228, %v1228
        %v1271 = vpack.c.b16 %v1229, %v1229
        %v1272 = vpack.c.b16 %v1230, %v1230
        %v1273 = vpack.c.b16 %v1231, %v1231
        %v1274 = vpack.c.b16 %v1232, %v1232
        %v1275 = vpack.c.b16 %v1233, %v1233
        %v1276 = vpack.c.b16 %v1234, %v1234
        %v1277 = vpack.c.b16 %v1235, %v1235
        %v1278 = vpack.c.b16 %v1236, %v1236
        %v1279 = vpack.c.b16 %v1237, %v1237
        %v1280 = vpack.c.b16 %v1238, %v1238
        %v1281 = vpack.c.b16 %v1239, %v1239
        %v1282 = vpack.c.b16 %v1240, %v1240
        %v1283 = vpack.c.b16 %v1241, %v1241
        %v1284 = vpack.c.b16 %v1242, %v1242
        %v1285 = vpack.c.b16 %v1243, %v1243
        %v1286 = vpack.c.b16 %v1244, %v1244
        %v1287 = vpack.c.b16 %v1245, %v1245
        %v1288 = vpack.c.b16 %v1246, %v1246
        %v1289 = vpack.c.b16 %v1247, %v1247
        %v1290 = vpack.c.b16 %v1248, %v1248
        %v1291 = vpack.c.b16 %v1249, %v1249
        %v1292 = vpack.c.b16 %v1250, %v1250
        %v1293 = vpack.c.b16 %v1251, %v1251
        %v1294 = vpack.c.b16 %v1252, %v1252
        %v1295 = vpack.c.b16 %v1253, %v1253
        %v1296 = vpack.c.b16 %v1254, %v1254
        %v1297 = vpack.c.b16 %v1255, %v1255
        %v1298 = vpack.c.b16 %v1256, %v1256
        %vm1341 = vcmask 257024
        %1342 = vst.msk [vmem:[#allocation2] sm:$0xf] %vm1341, %v1257
        %1343 = vst.msk [vmem:[#allocation2 + $0x4] sm:$0xf] %vm1341, %v1258
        %1344 = vst.msk [vmem:[#allocation2 + $0x8] sm:$0xf] %vm1341, %v1259
        %1345 = vst.msk [vmem:[#allocation2 + $0xc] sm:$0xf] %vm1341, %v1260
        %1346 = vst.msk [vmem:[#allocation2 + $0x10] sm:$0xf] %vm1341, %v1261
        %1347 = vst.msk [vmem:[#allocation2 + $0x14] sm:$0xf] %vm1341, %v1262
        %1348 = vst.msk [vmem:[#allocation2 + $0x18] sm:$0xf] %vm1341, %v1263
        %1349 = vst.msk [vmem:[#allocation2 + $0x1c] sm:$0xf] %vm1341, %v1264
        %1350 = vst.msk [vmem:[#allocation2 + $0x20] sm:$0xf] %vm1341, %v1265
        %1351 = vst.msk [vmem:[#allocation2 + $0x24] sm:$0xf] %vm1341, %v1266
        %1352 = vst.msk [vmem:[#allocation2 + $0x28] sm:$0xf] %vm1341, %v1267
        %1353 = vst.msk [vmem:[#allocation2 + $0x2c] sm:$0xf] %vm1341, %v1268
        %1354 = vst.msk [vmem:[#allocation2 + $0x30] sm:$0xf] %vm1341, %v1269
        %1355 = vst.msk [vmem:[#allocation2 + $0x34] sm:$0xf] %vm1341, %v1270
        %1356 = vst.msk [vmem:[#allocation2 + $0x38] sm:$0xf] %vm1341, %v1271
        %1357 = vst.msk [vmem:[#allocation2 + $0x3c] sm:$0xf] %vm1341, %v1272
        %1358 = vst.msk [vmem:[#allocation2 + $0x40] sm:$0xf] %vm1341, %v1273
        %1359 = vst.msk [vmem:[#allocation2 + $0x44] sm:$0xf] %vm1341, %v1274
        %1360 = vst.msk [vmem:[#allocation2 + $0x48] sm:$0xf] %vm1341, %v1275
        %1361 = vst.msk [vmem:[#allocation2 + $0x4c] sm:$0xf] %vm1341, %v1276
        %1362 = vst.msk [vmem:[#allocation2 + $0x50] sm:$0xf] %vm1341, %v1277
        %1363 = vst.msk [vmem:[#allocation2 + $0x54] sm:$0xf] %vm1341, %v1278
        %1364 = vst.msk [vmem:[#allocation2 + $0x58] sm:$0xf] %vm1341, %v1279
        %1365 = vst.msk [vmem:[#allocation2 + $0x5c] sm:$0xf] %vm1341, %v1280
        %1366 = vst.msk [vmem:[#allocation2 + $0x60] sm:$0xf] %vm1341, %v1281
        %1367 = vst.msk [vmem:[#allocation2 + $0x64] sm:$0xf] %vm1341, %v1282
        %1368 = vst.msk [vmem:[#allocation2 + $0x68] sm:$0xf] %vm1341, %v1283
        %1369 = vst.msk [vmem:[#allocation2 + $0x6c] sm:$0xf] %vm1341, %v1284
        %1370 = vst.msk [vmem:[#allocation2 + $0x70] sm:$0xf] %vm1341, %v1285
        %1371 = vst.msk [vmem:[#allocation2 + $0x74] sm:$0xf] %vm1341, %v1286
        %1372 = vst.msk [vmem:[#allocation2 + $0x78] sm:$0xf] %vm1341, %v1287
        %1373 = vst.msk [vmem:[#allocation2 + $0x7c] sm:$0xf] %vm1341, %v1288
        %1374 = vst.msk [vmem:[#allocation2 + $0x80] sm:$0xf] %vm1341, %v1289
        %1375 = vst.msk [vmem:[#allocation2 + $0x84] sm:$0xf] %vm1341, %v1290
        %1376 = vst.msk [vmem:[#allocation2 + $0x88] sm:$0xf] %vm1341, %v1291
        %1377 = vst.msk [vmem:[#allocation2 + $0x8c] sm:$0xf] %vm1341, %v1292
        %1378 = vst.msk [vmem:[#allocation2 + $0x90] sm:$0xf] %vm1341, %v1293
        %1379 = vst.msk [vmem:[#allocation2 + $0x94] sm:$0xf] %vm1341, %v1294
        %1380 = vst.msk [vmem:[#allocation2 + $0x98] sm:$0xf] %vm1341, %v1295
        %1381 = vst.msk [vmem:[#allocation2 + $0x9c] sm:$0xf] %vm1341, %v1296
        %1382 = vst.msk [vmem:[#allocation2 + $0xa0] sm:$0xf] %vm1341, %v1297
        %1383 = vst.msk [vmem:[#allocation2 + $0xa4] sm:$0xf] %vm1341, %v1298
        %v1384 = vld [vmem:[#allocation2] sm:$0xf]
        %v1385 = vld [vmem:[#allocation2 + $0x4] sm:$0xf]
        %v1386 = vld [vmem:[#allocation2 + $0x8] sm:$0xf]
        %v1387 = vld [vmem:[#allocation2 + $0xc] sm:$0xf]
        %v1388 = vld [vmem:[#allocation2 + $0x10] sm:$0xf]
        %v1389 = vld [vmem:[#allocation2 + $0x14] sm:$0xf]
        %v1390 = vld [vmem:[#allocation2 + $0x18] sm:$0xf]
        %v1391 = vld [vmem:[#allocation2 + $0x1c] sm:$0xf]
        %v1392 = vld [vmem:[#allocation2 + $0x20] sm:$0xf]
        %v1393 = vld [vmem:[#allocation2 + $0x24] sm:$0xf]
        %v1394 = vld [vmem:[#allocation2 + $0x28] sm:$0xf]
        %v1395 = vld [vmem:[#allocation2 + $0x2c] sm:$0xf]
        %v1396 = vld [vmem:[#allocation2 + $0x30] sm:$0xf]
        %v1397 = vld [vmem:[#allocation2 + $0x34] sm:$0xf]
        %v1398 = vld [vmem:[#allocation2 + $0x38] sm:$0xf]
        %v1399 = vld [vmem:[#allocation2 + $0x3c] sm:$0xf]
        %v1400 = vld [vmem:[#allocation2 + $0x40] sm:$0xf]
        %v1401 = vld [vmem:[#allocation2 + $0x44] sm:$0xf]
        %v1402 = vld [vmem:[#allocation2 + $0x48] sm:$0xf]
        %v1403 = vld [vmem:[#allocation2 + $0x4c] sm:$0xf]
        %v1404 = vld [vmem:[#allocation2 + $0x50] sm:$0xf]
        %v1405 = vld [vmem:[#allocation2 + $0x54] sm:$0xf]
        %v1406 = vld [vmem:[#allocation2 + $0x58] sm:$0xf]
        %v1407 = vld [vmem:[#allocation2 + $0x5c] sm:$0xf]
        %v1408 = vld [vmem:[#allocation2 + $0x60] sm:$0xf]
        %v1409 = vld [vmem:[#allocation2 + $0x64] sm:$0xf]
        %v1410 = vld [vmem:[#allocation2 + $0x68] sm:$0xf]
        %v1411 = vld [vmem:[#allocation2 + $0x6c] sm:$0xf]
        %v1412 = vld [vmem:[#allocation2 + $0x70] sm:$0xf]
        %v1413 = vld [vmem:[#allocation2 + $0x74] sm:$0xf]
        %v1414 = vld [vmem:[#allocation2 + $0x78] sm:$0xf]
        %v1415 = vld [vmem:[#allocation2 + $0x7c] sm:$0xf]
        %v1416 = vld [vmem:[#allocation2 + $0x80] sm:$0xf]
        %v1417 = vld [vmem:[#allocation2 + $0x84] sm:$0xf]
        %v1418 = vld [vmem:[#allocation2 + $0x88] sm:$0xf]
        %v1419 = vld [vmem:[#allocation2 + $0x8c] sm:$0xf]
        %v1420 = vld [vmem:[%s5] sm:$0xf]
        %v1421 = vld [vmem:[%s5 + $0x4] sm:$0xf]
        %v1422 = vld [vmem:[%s5 + $0x8] sm:$0xf]
        %v1423 = vld [vmem:[%s5 + $0xc] sm:$0xf]
        %v1424 = vld [vmem:[#allocation2 + $0x90] sm:$0x1]
        %s1425 = scalar_lea.vmem %s5, 16
        %v1426 = vld [vmem:[%s1425] sm:$0xf]
        %v1427 = vld [vmem:[%s1425 + $0x4] sm:$0xf]
        %v1428 = vld [vmem:[%s1425 + $0x8] sm:$0xf]
        %v1429 = vld [vmem:[%s1425 + $0xc] sm:$0xf]
        %v1467 = vunpack.c.l.b16 %v1384
        %v1468 = vunpack.c.l.b16 %v1385
        %v1469 = vunpack.c.l.b16 %v1386
        %v1470 = vunpack.c.l.b16 %v1387
        %v1471 = vunpack.c.l.b16 %v1388
        %v1472 = vunpack.c.l.b16 %v1389
        %v1473 = vunpack.c.l.b16 %v1390
        %v1474 = vunpack.c.l.b16 %v1391
        %v1475 = vunpack.c.l.b16 %v1392
        %v1476 = vunpack.c.l.b16 %v1393
        %v1477 = vunpack.c.l.b16 %v1394
        %v1478 = vunpack.c.l.b16 %v1395
        %v1479 = vunpack.c.l.b16 %v1396
        %v1480 = vunpack.c.l.b16 %v1397
        %v1481 = vunpack.c.l.b16 %v1398
        %v1482 = vunpack.c.l.b16 %v1399
        %v1483 = vunpack.c.l.b16 %v1400
        %v1484 = vunpack.c.l.b16 %v1401
        %v1485 = vunpack.c.l.b16 %v1402
        %v1486 = vunpack.c.l.b16 %v1403
        %v1487 = vunpack.c.l.b16 %v1404
        %v1488 = vunpack.c.l.b16 %v1405
        %v1489 = vunpack.c.l.b16 %v1406
        %v1490 = vunpack.c.l.b16 %v1407
        %v1491 = vunpack.c.l.b16 %v1408
        %v1492 = vunpack.c.l.b16 %v1409
        %v1493 = vunpack.c.l.b16 %v1410
        %v1494 = vunpack.c.l.b16 %v1411
        %v1495 = vunpack.c.l.b16 %v1412
        %v1496 = vunpack.c.l.b16 %v1413
        %v1497 = vunpack.c.l.b16 %v1414
        %v1498 = vunpack.c.l.b16 %v1415
        %v1499 = vunpack.c.l.b16 %v1416
        %v1500 = vunpack.c.l.b16 %v1417
        %v1501 = vunpack.c.l.b16 %v1418
        %v1502 = vunpack.c.l.b16 %v1419
        %v1503 = vunpack.c.l.b16 %v1424
        %v1504 = vpack.c.b16 %v1468, %v1467
        %v1505 = vpack.c.b16 %v1470, %v1469
        %v1506 = vpack.c.b16 %v1472, %v1471
        %v1507 = vpack.c.b16 %v1474, %v1473
        %v1508 = vpack.c.b16 %v1476, %v1475
        %v1509 = vpack.c.b16 %v1478, %v1477
        %v1510 = vpack.c.b16 %v1480, %v1479
        %v1511 = vpack.c.b16 %v1482, %v1481
        %v1512 = vpack.c.b16 %v1484, %v1483
        %v1513 = vpack.c.b16 %v1486, %v1485
        %v1514 = vpack.c.b16 %v1488, %v1487
        %v1515 = vpack.c.b16 %v1490, %v1489
        %v1516 = vpack.c.b16 %v1492, %v1491
        %v1517 = vpack.c.b16 %v1494, %v1493
        %v1518 = vpack.c.b16 %v1496, %v1495
        %v1519 = vpack.c.b16 %v1498, %v1497
        %v1520 = vpack.c.b16 %v1500, %v1499
        %v1521 = vpack.c.b16 %v1502, %v1501
        %v1522 = vpack.c.b16 %v1503, %v1503
        %vm1523 = vsmask.f32 7424
        %v1525 = vshrl.u32 %v1504, 16
        %v1527 = vshll.u32 %v1504, 16
        %v1529 = vrot.slane %v1527, 1
        %v1530 = vor.u32 %v1525, %v1529
        %v1532 = vshll.u32 %v1505, 16
        %v1534 = vrot.slane %v1532, 1
        %v1535 = vsel %vm1523, %v1530, %v1534
        %v1536 = vshrl.u32 %v1505, 16
        %v1538 = vor.u32 %v1536, %v1534
        %v1540 = vshll.u32 %v1506, 16
        %v1542 = vrot.slane %v1540, 1
        %v1543 = vsel %vm1523, %v1538, %v1542
        %v1544 = vshrl.u32 %v1506, 16
        %v1546 = vor.u32 %v1544, %v1542
        %v1548 = vshll.u32 %v1507, 16
        %v1550 = vrot.slane %v1548, 1
        %v1551 = vsel %vm1523, %v1546, %v1550
        %v1552 = vshrl.u32 %v1507, 16
        %v1554 = vor.u32 %v1552, %v1550
        %v1556 = vshll.u32 %v1508, 16
        %v1558 = vrot.slane %v1556, 1
        %v1559 = vsel %vm1523, %v1554, %v1558
        %v1560 = vshrl.u32 %v1508, 16
        %v1562 = vor.u32 %v1560, %v1558
        %v1564 = vshll.u32 %v1509, 16
        %v1566 = vrot.slane %v1564, 1
        %v1567 = vsel %vm1523, %v1562, %v1566
        %v1568 = vshrl.u32 %v1509, 16
        %v1570 = vor.u32 %v1568, %v1566
        %v1572 = vshll.u32 %v1510, 16
        %v1574 = vrot.slane %v1572, 1
        %v1575 = vsel %vm1523, %v1570, %v1574
        %v1576 = vshrl.u32 %v1510, 16
        %v1578 = vor.u32 %v1576, %v1574
        %v1580 = vshll.u32 %v1511, 16
        %v1582 = vrot.slane %v1580, 1
        %v1583 = vsel %vm1523, %v1578, %v1582
        %v1584 = vshrl.u32 %v1511, 16
        %v1586 = vor.u32 %v1584, %v1582
        %v1588 = vshll.u32 %v1512, 16
        %v1590 = vrot.slane %v1588, 1
        %v1591 = vsel %vm1523, %v1586, %v1590
        %v1592 = vshrl.u32 %v1512, 16
        %v1594 = vor.u32 %v1592, %v1590
        %v1596 = vshll.u32 %v1513, 16
        %v1598 = vrot.slane %v1596, 1
        %v1599 = vsel %vm1523, %v1594, %v1598
        %v1600 = vshrl.u32 %v1513, 16
        %v1602 = vor.u32 %v1600, %v1598
        %v1604 = vshll.u32 %v1514, 16
        %v1606 = vrot.slane %v1604, 1
        %v1607 = vsel %vm1523, %v1602, %v1606
        %v1608 = vshrl.u32 %v1514, 16
        %v1610 = vor.u32 %v1608, %v1606
        %v1612 = vshll.u32 %v1515, 16
        %v1614 = vrot.slane %v1612, 1
        %v1615 = vsel %vm1523, %v1610, %v1614
        %v1616 = vshrl.u32 %v1515, 16
        %v1618 = vor.u32 %v1616, %v1614
        %v1620 = vshll.u32 %v1516, 16
        %v1622 = vrot.slane %v1620, 1
        %v1623 = vsel %vm1523, %v1618, %v1622
        %v1624 = vshrl.u32 %v1516, 16
        %v1626 = vor.u32 %v1624, %v1622
        %v1628 = vshll.u32 %v1517, 16
        %v1630 = vrot.slane %v1628, 1
        %v1631 = vsel %vm1523, %v1626, %v1630
        %v1632 = vshrl.u32 %v1517, 16
        %v1634 = vor.u32 %v1632, %v1630
        %v1636 = vshll.u32 %v1518, 16
        %v1638 = vrot.slane %v1636, 1
        %v1639 = vsel %vm1523, %v1634, %v1638
        %v1640 = vshrl.u32 %v1518, 16
        %v1642 = vor.u32 %v1640, %v1638
        %v1644 = vshll.u32 %v1519, 16
        %v1646 = vrot.slane %v1644, 1
        %v1647 = vsel %vm1523, %v1642, %v1646
        %v1648 = vshrl.u32 %v1519, 16
        %v1650 = vor.u32 %v1648, %v1646
        %v1652 = vshll.u32 %v1520, 16
        %v1654 = vrot.slane %v1652, 1
        %v1655 = vsel %vm1523, %v1650, %v1654
        %v1656 = vshrl.u32 %v1520, 16
        %v1658 = vor.u32 %v1656, %v1654
        %v1660 = vshll.u32 %v1521, 16
        %v1662 = vrot.slane %v1660, 1
        %v1663 = vsel %vm1523, %v1658, %v1662
        %v1664 = vshrl.u32 %v1521, 16
        %v1666 = vor.u32 %v1664, %v1662
        %v1668 = vshll.u32 %v1522, 16
        %v1670 = vrot.slane %v1668, 1
        %v1671 = vsel %vm1523, %v1666, %v1670
        %v1676 = vunpack.c.l.b16 %v1426
        %v1677 = vunpack.c.l.b16 %v1427
        %v1678 = vunpack.c.l.b16 %v1428
        %v1679 = vunpack.c.l.b16 %v1429
        %v1680 = vpack.c.b16 %v1677, %v1676
        %v1681 = vpack.c.b16 %v1679, %v1678
        %vm1684 = vcmask 261120
        %v1686 = vsel %vm1684, %v1535, 0
        %v1689 = vsel %vm1684, %v1543, 0
        %v1692 = vsel %vm1684, %v1551, 0
        %v1695 = vsel %vm1684, %v1559, 0
        %v1698 = vsel %vm1684, %v1567, 0
        %v1701 = vsel %vm1684, %v1575, 0
        %v1704 = vsel %vm1684, %v1583, 0
        %v1707 = vsel %vm1684, %v1591, 0
        %v1710 = vsel %vm1684, %v1599, 0
        %v1713 = vsel %vm1684, %v1607, 0
        %v1716 = vsel %vm1684, %v1615, 0
        %v1719 = vsel %vm1684, %v1623, 0
        %v1722 = vsel %vm1684, %v1631, 0
        %v1725 = vsel %vm1684, %v1639, 0
        %v1728 = vsel %vm1684, %v1647, 0
        %v1731 = vsel %vm1684, %v1655, 0
        %v1734 = vsel %vm1684, %v1663, 0
        %v1737 = vsel %vm1684, %v1671, 0
        %1739 = vmatprep.subr.bf16.mxu0 0
        %1740 = vmatpush1.bf16.msra.mxu0 0
        %1741 = vmatprep.subr.bf16.mxu0 0
        %1742 = vmatpush1.bf16.msra.mxu0 0
        %1743 = vmatprep.subr.bf16.mxu0 0
        %1744 = vmatpush1.bf16.msra.mxu0 0
        %1745 = vmatprep.subr.bf16.mxu0 0
        %1746 = vmatpush1.bf16.msra.mxu0 0
        %1747 = vmatprep.subr.bf16.mxu0 0
        %1748 = vmatpush1.bf16.msra.mxu0 0
        %1749 = vmatprep.subr.bf16.mxu0 0
        %1750 = vmatpush1.bf16.msra.mxu0 0
        %1751 = vmatprep.subr.bf16.mxu0 0
        %1752 = vmatpush1.bf16.msra.mxu0 %v1681
        %1753 = vmatprep.subr.bf16.mxu0 0
        %1754 = vmatpush1.bf16.msra.mxu0 %v1680
        %1755 = vmatprep.subr.bf16.mxu0 0
        %1756 = vmatpush2.bf16.msra.mxu0 0
        %1757 = vmatprep.subr.bf16.mxu0 0
        %1758 = vmatpush2.bf16.msra.mxu0 0
        %1759 = vmatprep.subr.bf16.mxu0 0
        %1760 = vmatpush2.bf16.msra.mxu0 0
        %1761 = vmatprep.subr.bf16.mxu0 0
        %1762 = vmatpush2.bf16.msra.mxu0 0
        %1763 = vmatprep.subr.bf16.mxu0 0
        %1764 = vmatpush2.bf16.msra.mxu0 0
        %1765 = vmatprep.subr.bf16.mxu0 0
        %1766 = vmatpush2.bf16.msra.mxu0 0
        %1767 = vmatprep.subr.bf16.mxu0 0
        %1768 = vmatpush2.bf16.msra.mxu0 0
        %1769 = vmatprep.subr.bf16.mxu0 0
        %1770 = vmatpush2.bf16.msra.mxu0 0
        %1771 = vmatprep.mubr.bf16.mxu0 0
        %1772 = vmatmul.mubr.bf16.gmra.mxu0 %v1686
        %v1773 = vpop.f32.mrf.mxu0
        %v1774 = vadd.f32 0.0, %v1773
        %v1775 = vpop.f32.mrf.mxu0
        %v1776 = vpop.f32.mrf.mxu0
        %v1777 = vadd.f32 0.0, %v1776
        %v1778 = vpop.f32.mrf.mxu0
        %1779 = vmatprep.mubr.bf16.mxu0 0
        %1780 = vmatmul.mubr.bf16.gmra.mxu0 %v1689
        %v1781 = vpop.f32.mrf.mxu0
        %v1782 = vadd.f32 0.0, %v1781
        %v1783 = vpop.f32.mrf.mxu0
        %v1784 = vpop.f32.mrf.mxu0
        %v1785 = vadd.f32 0.0, %v1784
        %v1786 = vpop.f32.mrf.mxu0
        %1787 = vmatprep.mubr.bf16.mxu0 0
        %1788 = vmatmul.mubr.bf16.gmra.mxu0 %v1692
        %v1789 = vpop.f32.mrf.mxu0
        %v1790 = vadd.f32 0.0, %v1789
        %v1791 = vpop.f32.mrf.mxu0
        %v1792 = vpop.f32.mrf.mxu0
        %v1793 = vadd.f32 0.0, %v1792
        %v1794 = vpop.f32.mrf.mxu0
        %1795 = vmatprep.mubr.bf16.mxu0 0
        %1796 = vmatmul.mubr.bf16.gmra.mxu0 %v1695
        %v1797 = vpop.f32.mrf.mxu0
        %v1798 = vadd.f32 0.0, %v1797
        %v1799 = vpop.f32.mrf.mxu0
        %v1800 = vpop.f32.mrf.mxu0
        %v1801 = vadd.f32 0.0, %v1800
        %v1802 = vpop.f32.mrf.mxu0
        %1803 = vmatprep.mubr.bf16.mxu0 0
        %1804 = vmatmul.mubr.bf16.gmra.mxu0 %v1698
        %v1805 = vpop.f32.mrf.mxu0
        %v1806 = vadd.f32 0.0, %v1805
        %v1807 = vpop.f32.mrf.mxu0
        %v1808 = vpop.f32.mrf.mxu0
        %v1809 = vadd.f32 0.0, %v1808
        %v1810 = vpop.f32.mrf.mxu0
        %1811 = vmatprep.mubr.bf16.mxu0 0
        %1812 = vmatmul.mubr.bf16.gmra.mxu0 %v1701
        %v1813 = vpop.f32.mrf.mxu0
        %v1814 = vadd.f32 0.0, %v1813
        %v1815 = vpop.f32.mrf.mxu0
        %v1816 = vpop.f32.mrf.mxu0
        %v1817 = vadd.f32 0.0, %v1816
        %v1818 = vpop.f32.mrf.mxu0
        %1819 = vmatprep.mubr.bf16.mxu0 0
        %1820 = vmatmul.mubr.bf16.gmra.mxu0 %v1704
        %v1821 = vpop.f32.mrf.mxu0
        %v1822 = vadd.f32 0.0, %v1821
        %v1823 = vpop.f32.mrf.mxu0
        %v1824 = vpop.f32.mrf.mxu0
        %v1825 = vadd.f32 0.0, %v1824
        %v1826 = vpop.f32.mrf.mxu0
        %1827 = vmatprep.mubr.bf16.mxu0 0
        %1828 = vmatmul.mubr.bf16.gmra.mxu0 %v1707
        %v1829 = vpop.f32.mrf.mxu0
        %v1830 = vadd.f32 0.0, %v1829
        %v1831 = vpop.f32.mrf.mxu0
        %v1832 = vpop.f32.mrf.mxu0
        %v1833 = vadd.f32 0.0, %v1832
        %v1834 = vpop.f32.mrf.mxu0
        %1835 = vmatprep.mubr.bf16.mxu0 0
        %1836 = vmatmul.mubr.bf16.gmra.mxu0 %v1710
        %v1837 = vpop.f32.mrf.mxu0
        %v1838 = vadd.f32 0.0, %v1837
        %v1839 = vpop.f32.mrf.mxu0
        %v1840 = vpop.f32.mrf.mxu0
        %v1841 = vadd.f32 0.0, %v1840
        %v1842 = vpop.f32.mrf.mxu0
        %1843 = vmatprep.mubr.bf16.mxu0 0
        %1844 = vmatmul.mubr.bf16.gmra.mxu0 %v1713
        %v1845 = vpop.f32.mrf.mxu0
        %v1846 = vadd.f32 0.0, %v1845
        %v1847 = vpop.f32.mrf.mxu0
        %v1848 = vpop.f32.mrf.mxu0
        %v1849 = vadd.f32 0.0, %v1848
        %v1850 = vpop.f32.mrf.mxu0
        %1851 = vmatprep.mubr.bf16.mxu0 0
        %1852 = vmatmul.mubr.bf16.gmra.mxu0 %v1716
        %v1853 = vpop.f32.mrf.mxu0
        %v1854 = vadd.f32 0.0, %v1853
        %v1855 = vpop.f32.mrf.mxu0
        %v1856 = vpop.f32.mrf.mxu0
        %v1857 = vadd.f32 0.0, %v1856
        %v1858 = vpop.f32.mrf.mxu0
        %1859 = vmatprep.mubr.bf16.mxu0 0
        %1860 = vmatmul.mubr.bf16.gmra.mxu0 %v1719
        %v1861 = vpop.f32.mrf.mxu0
        %v1862 = vadd.f32 0.0, %v1861
        %v1863 = vpop.f32.mrf.mxu0
        %v1864 = vpop.f32.mrf.mxu0
        %v1865 = vadd.f32 0.0, %v1864
        %v1866 = vpop.f32.mrf.mxu0
        %1867 = vmatprep.mubr.bf16.mxu0 0
        %1868 = vmatmul.mubr.bf16.gmra.mxu0 %v1722
        %v1869 = vpop.f32.mrf.mxu0
        %v1870 = vadd.f32 0.0, %v1869
        %v1871 = vpop.f32.mrf.mxu0
        %v1872 = vpop.f32.mrf.mxu0
        %v1873 = vadd.f32 0.0, %v1872
        %v1874 = vpop.f32.mrf.mxu0
        %1875 = vmatprep.mubr.bf16.mxu0 0
        %1876 = vmatmul.mubr.bf16.gmra.mxu0 %v1725
        %v1877 = vpop.f32.mrf.mxu0
        %v1878 = vadd.f32 0.0, %v1877
        %v1879 = vpop.f32.mrf.mxu0
        %v1880 = vpop.f32.mrf.mxu0
        %v1881 = vadd.f32 0.0, %v1880
        %v1882 = vpop.f32.mrf.mxu0
        %1883 = vmatprep.mubr.bf16.mxu0 0
        %1884 = vmatmul.mubr.bf16.gmra.mxu0 %v1728
        %v1885 = vpop.f32.mrf.mxu0
        %v1886 = vadd.f32 0.0, %v1885
        %v1887 = vpop.f32.mrf.mxu0
        %v1888 = vpop.f32.mrf.mxu0
        %v1889 = vadd.f32 0.0, %v1888
        %v1890 = vpop.f32.mrf.mxu0
        %1891 = vmatprep.mubr.bf16.mxu0 0
        %1892 = vmatmul.mubr.bf16.gmra.mxu0 %v1731
        %v1893 = vpop.f32.mrf.mxu0
        %v1894 = vadd.f32 0.0, %v1893
        %v1895 = vpop.f32.mrf.mxu0
        %v1896 = vpop.f32.mrf.mxu0
        %v1897 = vadd.f32 0.0, %v1896
        %v1898 = vpop.f32.mrf.mxu0
        %1899 = vmatprep.mubr.bf16.mxu0 0
        %1900 = vmatmul.mubr.bf16.gmra.mxu0 %v1734
        %v1901 = vpop.f32.mrf.mxu0
        %v1902 = vadd.f32 0.0, %v1901
        %v1903 = vpop.f32.mrf.mxu0
        %v1904 = vpop.f32.mrf.mxu0
        %v1905 = vadd.f32 0.0, %v1904
        %v1906 = vpop.f32.mrf.mxu0
        %1907 = vmatprep.mubr.bf16.mxu0 0
        %1908 = vmatmul.mubr.bf16.gmra.mxu0 %v1737
        %v1909 = vpop.f32.mrf.mxu0
        %v1910 = vadd.f32 0.0, %v1909
        %v1911 = vpop.f32.mrf.mxu0
        %v1912 = vpop.f32.mrf.mxu0
        %v1913 = vadd.f32 0.0, %v1912
        %v1914 = vpop.f32.mrf.mxu0
        %1915 = vdwg.mxu0
        %v1920 = vunpack.c.l.b16 %v1420
        %v1921 = vunpack.c.l.b16 %v1421
        %v1922 = vunpack.c.l.b16 %v1422
        %v1923 = vunpack.c.l.b16 %v1423
        %v1924 = vpack.c.b16 %v1921, %v1920
        %v1925 = vpack.c.b16 %v1923, %v1922
        %v1928 = vsel %vm1684, %v1504, 0
        %v1930 = vsel %vm1684, %v1505, 0
        %v1932 = vsel %vm1684, %v1506, 0
        %v1934 = vsel %vm1684, %v1507, 0
        %v1936 = vsel %vm1684, %v1508, 0
        %v1938 = vsel %vm1684, %v1509, 0
        %v1940 = vsel %vm1684, %v1510, 0
        %v1942 = vsel %vm1684, %v1511, 0
        %v1944 = vsel %vm1684, %v1512, 0
        %v1946 = vsel %vm1684, %v1513, 0
        %v1948 = vsel %vm1684, %v1514, 0
        %v1950 = vsel %vm1684, %v1515, 0
        %v1952 = vsel %vm1684, %v1516, 0
        %v1954 = vsel %vm1684, %v1517, 0
        %v1956 = vsel %vm1684, %v1518, 0
        %v1958 = vsel %vm1684, %v1519, 0
        %v1960 = vsel %vm1684, %v1520, 0
        %v1962 = vsel %vm1684, %v1521, 0
        %1964 = vmatprep.subr.bf16.mxu0 0
        %1965 = vmatpush1.bf16.msra.mxu0 0
        %1966 = vmatprep.subr.bf16.mxu0 0
        %1967 = vmatpush1.bf16.msra.mxu0 0
        %1968 = vmatprep.subr.bf16.mxu0 0
        %1969 = vmatpush1.bf16.msra.mxu0 0
        %1970 = vmatprep.subr.bf16.mxu0 0
        %1971 = vmatpush1.bf16.msra.mxu0 0
        %1972 = vmatprep.subr.bf16.mxu0 0
        %1973 = vmatpush1.bf16.msra.mxu0 0
        %1974 = vmatprep.subr.bf16.mxu0 0
        %1975 = vmatpush1.bf16.msra.mxu0 0
        %1976 = vmatprep.subr.bf16.mxu0 0
        %1977 = vmatpush1.bf16.msra.mxu0 %v1925
        %1978 = vmatprep.subr.bf16.mxu0 0
        %1979 = vmatpush1.bf16.msra.mxu0 %v1924
        %1980 = vmatprep.subr.bf16.mxu0 0
        %1981 = vmatpush2.bf16.msra.mxu0 0
        %1982 = vmatprep.subr.bf16.mxu0 0
        %1983 = vmatpush2.bf16.msra.mxu0 0
        %1984 = vmatprep.subr.bf16.mxu0 0
        %1985 = vmatpush2.bf16.msra.mxu0 0
        %1986 = vmatprep.subr.bf16.mxu0 0
        %1987 = vmatpush2.bf16.msra.mxu0 0
        %1988 = vmatprep.subr.bf16.mxu0 0
        %1989 = vmatpush2.bf16.msra.mxu0 0
        %1990 = vmatprep.subr.bf16.mxu0 0
        %1991 = vmatpush2.bf16.msra.mxu0 0
        %1992 = vmatprep.subr.bf16.mxu0 0
        %1993 = vmatpush2.bf16.msra.mxu0 0
        %1994 = vmatprep.subr.bf16.mxu0 0
        %1995 = vmatpush2.bf16.msra.mxu0 0
        %1996 = vmatprep.mubr.bf16.mxu0 0
        %1997 = vmatmul.mubr.bf16.gmra.mxu0 %v1928
        %v1998 = vpop.f32.mrf.mxu0
        %v1999 = vadd.f32 %v1774, %v1998
        %v2000 = vpop.f32.mrf.mxu0
        %v2001 = vpop.f32.mrf.mxu0
        %v2002 = vadd.f32 %v1777, %v2001
        %v2003 = vpop.f32.mrf.mxu0
        %2004 = vmatprep.mubr.bf16.mxu0 0
        %2005 = vmatmul.mubr.bf16.gmra.mxu0 %v1930
        %v2006 = vpop.f32.mrf.mxu0
        %v2007 = vadd.f32 %v1782, %v2006
        %v2008 = vpop.f32.mrf.mxu0
        %v2009 = vpop.f32.mrf.mxu0
        %v2010 = vadd.f32 %v1785, %v2009
        %v2011 = vpop.f32.mrf.mxu0
        %2012 = vmatprep.mubr.bf16.mxu0 0
        %2013 = vmatmul.mubr.bf16.gmra.mxu0 %v1932
        %v2014 = vpop.f32.mrf.mxu0
        %v2015 = vadd.f32 %v1790, %v2014
        %v2016 = vpop.f32.mrf.mxu0
        %v2017 = vpop.f32.mrf.mxu0
        %v2018 = vadd.f32 %v1793, %v2017
        %v2019 = vpop.f32.mrf.mxu0
        %2020 = vmatprep.mubr.bf16.mxu0 0
        %2021 = vmatmul.mubr.bf16.gmra.mxu0 %v1934
        %v2022 = vpop.f32.mrf.mxu0
        %v2023 = vadd.f32 %v1798, %v2022
        %v2024 = vpop.f32.mrf.mxu0
        %v2025 = vpop.f32.mrf.mxu0
        %v2026 = vadd.f32 %v1801, %v2025
        %v2027 = vpop.f32.mrf.mxu0
        %2028 = vmatprep.mubr.bf16.mxu0 0
        %2029 = vmatmul.mubr.bf16.gmra.mxu0 %v1936
        %v2030 = vpop.f32.mrf.mxu0
        %v2031 = vadd.f32 %v1806, %v2030
        %v2032 = vpop.f32.mrf.mxu0
        %v2033 = vpop.f32.mrf.mxu0
        %v2034 = vadd.f32 %v1809, %v2033
        %v2035 = vpop.f32.mrf.mxu0
        %2036 = vmatprep.mubr.bf16.mxu0 0
        %2037 = vmatmul.mubr.bf16.gmra.mxu0 %v1938
        %v2038 = vpop.f32.mrf.mxu0
        %v2039 = vadd.f32 %v1814, %v2038
        %v2040 = vpop.f32.mrf.mxu0
        %v2041 = vpop.f32.mrf.mxu0
        %v2042 = vadd.f32 %v1817, %v2041
        %v2043 = vpop.f32.mrf.mxu0
        %2044 = vmatprep.mubr.bf16.mxu0 0
        %2045 = vmatmul.mubr.bf16.gmra.mxu0 %v1940
        %v2046 = vpop.f32.mrf.mxu0
        %v2047 = vadd.f32 %v1822, %v2046
        %v2048 = vpop.f32.mrf.mxu0
        %v2049 = vpop.f32.mrf.mxu0
        %v2050 = vadd.f32 %v1825, %v2049
        %v2051 = vpop.f32.mrf.mxu0
        %2052 = vmatprep.mubr.bf16.mxu0 0
        %2053 = vmatmul.mubr.bf16.gmra.mxu0 %v1942
        %v2054 = vpop.f32.mrf.mxu0
        %v2055 = vadd.f32 %v1830, %v2054
        %v2056 = vpop.f32.mrf.mxu0
        %v2057 = vpop.f32.mrf.mxu0
        %v2058 = vadd.f32 %v1833, %v2057
        %v2059 = vpop.f32.mrf.mxu0
        %2060 = vmatprep.mubr.bf16.mxu0 0
        %2061 = vmatmul.mubr.bf16.gmra.mxu0 %v1944
        %v2062 = vpop.f32.mrf.mxu0
        %v2063 = vadd.f32 %v1838, %v2062
        %v2064 = vpop.f32.mrf.mxu0
        %v2065 = vpop.f32.mrf.mxu0
        %v2066 = vadd.f32 %v1841, %v2065
        %v2067 = vpop.f32.mrf.mxu0
        %2068 = vmatprep.mubr.bf16.mxu0 0
        %2069 = vmatmul.mubr.bf16.gmra.mxu0 %v1946
        %v2070 = vpop.f32.mrf.mxu0
        %v2071 = vadd.f32 %v1846, %v2070
        %v2072 = vpop.f32.mrf.mxu0
        %v2073 = vpop.f32.mrf.mxu0
        %v2074 = vadd.f32 %v1849, %v2073
        %v2075 = vpop.f32.mrf.mxu0
        %2076 = vmatprep.mubr.bf16.mxu0 0
        %2077 = vmatmul.mubr.bf16.gmra.mxu0 %v1948
        %v2078 = vpop.f32.mrf.mxu0
        %v2079 = vadd.f32 %v1854, %v2078
        %v2080 = vpop.f32.mrf.mxu0
        %v2081 = vpop.f32.mrf.mxu0
        %v2082 = vadd.f32 %v1857, %v2081
        %v2083 = vpop.f32.mrf.mxu0
        %2084 = vmatprep.mubr.bf16.mxu0 0
        %2085 = vmatmul.mubr.bf16.gmra.mxu0 %v1950
        %v2086 = vpop.f32.mrf.mxu0
        %v2087 = vadd.f32 %v1862, %v2086
        %v2088 = vpop.f32.mrf.mxu0
        %v2089 = vpop.f32.mrf.mxu0
        %v2090 = vadd.f32 %v1865, %v2089
        %v2091 = vpop.f32.mrf.mxu0
        %2092 = vmatprep.mubr.bf16.mxu0 0
        %2093 = vmatmul.mubr.bf16.gmra.mxu0 %v1952
        %v2094 = vpop.f32.mrf.mxu0
        %v2095 = vadd.f32 %v1870, %v2094
        %v2096 = vpop.f32.mrf.mxu0
        %v2097 = vpop.f32.mrf.mxu0
        %v2098 = vadd.f32 %v1873, %v2097
        %v2099 = vpop.f32.mrf.mxu0
        %2100 = vmatprep.mubr.bf16.mxu0 0
        %2101 = vmatmul.mubr.bf16.gmra.mxu0 %v1954
        %v2102 = vpop.f32.mrf.mxu0
        %v2103 = vadd.f32 %v1878, %v2102
        %v2104 = vpop.f32.mrf.mxu0
        %v2105 = vpop.f32.mrf.mxu0
        %v2106 = vadd.f32 %v1881, %v2105
        %v2107 = vpop.f32.mrf.mxu0
        %2108 = vmatprep.mubr.bf16.mxu0 0
        %2109 = vmatmul.mubr.bf16.gmra.mxu0 %v1956
        %v2110 = vpop.f32.mrf.mxu0
        %v2111 = vadd.f32 %v1886, %v2110
        %v2112 = vpop.f32.mrf.mxu0
        %v2113 = vpop.f32.mrf.mxu0
        %v2114 = vadd.f32 %v1889, %v2113
        %v2115 = vpop.f32.mrf.mxu0
        %2116 = vmatprep.mubr.bf16.mxu0 0
        %2117 = vmatmul.mubr.bf16.gmra.mxu0 %v1958
        %v2118 = vpop.f32.mrf.mxu0
        %v2119 = vadd.f32 %v1894, %v2118
        %v2120 = vpop.f32.mrf.mxu0
        %v2121 = vpop.f32.mrf.mxu0
        %v2122 = vadd.f32 %v1897, %v2121
        %v2123 = vpop.f32.mrf.mxu0
        %2124 = vmatprep.mubr.bf16.mxu0 0
        %2125 = vmatmul.mubr.bf16.gmra.mxu0 %v1960
        %v2126 = vpop.f32.mrf.mxu0
        %v2127 = vadd.f32 %v1902, %v2126
        %v2128 = vpop.f32.mrf.mxu0
        %v2129 = vpop.f32.mrf.mxu0
        %v2130 = vadd.f32 %v1905, %v2129
        %v2131 = vpop.f32.mrf.mxu0
        %2132 = vmatprep.mubr.bf16.mxu0 0
        %2133 = vmatmul.mubr.bf16.gmra.mxu0 %v1962
        %v2134 = vpop.f32.mrf.mxu0
        %v2135 = vadd.f32 %v1910, %v2134
        %v2136 = vpop.f32.mrf.mxu0
        %v2137 = vpop.f32.mrf.mxu0
        %v2138 = vadd.f32 %v1913, %v2137
        %v2139 = vpop.f32.mrf.mxu0
        %2140 = vdwg.mxu0
        %v2141 = vld [vmem:[#allocation2] sm:$0xe]
        %s2142 = scalar_lea.vmem %s5, 32
        %v2143 = vld [vmem:[%s2142] sm:$0xf]
        %v2144 = vld [vmem:[%s2142 + $0x4] sm:$0xf]
        %v2145 = vld [vmem:[%s2142 + $0x8] sm:$0xf]
        %v2146 = vld [vmem:[%s2142 + $0xc] sm:$0xf]
        %v2148 = vunpack.c.l.b16 %v2141
        %v2149 = vpack.c.b16 %v1468, %v2148
        %vm2150 = vcmask 1046528
        %v2151 = vrot.slane %v2149, 1
        %v2152 = vrot.slane %v1505, 1
        %v2153 = vsel %vm2150, %v2151, %v2152
        %v2154 = vrot.slane %v1506, 1
        %v2155 = vsel %vm2150, %v2152, %v2154
        %v2156 = vrot.slane %v1507, 1
        %v2157 = vsel %vm2150, %v2154, %v2156
        %v2158 = vrot.slane %v1508, 1
        %v2159 = vsel %vm2150, %v2156, %v2158
        %v2160 = vrot.slane %v1509, 1
        %v2161 = vsel %vm2150, %v2158, %v2160
        %v2162 = vrot.slane %v1510, 1
        %v2163 = vsel %vm2150, %v2160, %v2162
        %v2164 = vrot.slane %v1511, 1
        %v2165 = vsel %vm2150, %v2162, %v2164
        %v2166 = vrot.slane %v1512, 1
        %v2167 = vsel %vm2150, %v2164, %v2166
        %v2168 = vrot.slane %v1513, 1
        %v2169 = vsel %vm2150, %v2166, %v2168
        %v2170 = vrot.slane %v1514, 1
        %v2171 = vsel %vm2150, %v2168, %v2170
        %v2172 = vrot.slane %v1515, 1
        %v2173 = vsel %vm2150, %v2170, %v2172
        %v2174 = vrot.slane %v1516, 1
        %v2175 = vsel %vm2150, %v2172, %v2174
        %v2176 = vrot.slane %v1517, 1
        %v2177 = vsel %vm2150, %v2174, %v2176
        %v2178 = vrot.slane %v1518, 1
        %v2179 = vsel %vm2150, %v2176, %v2178
        %v2180 = vrot.slane %v1519, 1
        %v2181 = vsel %vm2150, %v2178, %v2180
        %v2182 = vrot.slane %v1520, 1
        %v2183 = vsel %vm2150, %v2180, %v2182
        %v2184 = vrot.slane %v1521, 1
        %v2185 = vsel %vm2150, %v2182, %v2184
        %v2186 = vrot.slane %v1522, 1
        %v2187 = vsel %vm2150, %v2184, %v2186
        %v2192 = vunpack.c.l.b16 %v2143
        %v2193 = vunpack.c.l.b16 %v2144
        %v2194 = vunpack.c.l.b16 %v2145
        %v2195 = vunpack.c.l.b16 %v2146
        %v2196 = vpack.c.b16 %v2193, %v2192
        %v2197 = vpack.c.b16 %v2195, %v2194
        %v2201 = vsel %vm1684, %v2153, 0
        %v2204 = vsel %vm1684, %v2155, 0
        %v2207 = vsel %vm1684, %v2157, 0
        %v2210 = vsel %vm1684, %v2159, 0
        %v2213 = vsel %vm1684, %v2161, 0
        %v2216 = vsel %vm1684, %v2163, 0
        %v2219 = vsel %vm1684, %v2165, 0
        %v2222 = vsel %vm1684, %v2167, 0
        %v2225 = vsel %vm1684, %v2169, 0
        %v2228 = vsel %vm1684, %v2171, 0
        %v2231 = vsel %vm1684, %v2173, 0
        %v2234 = vsel %vm1684, %v2175, 0
        %v2237 = vsel %vm1684, %v2177, 0
        %v2240 = vsel %vm1684, %v2179, 0
        %v2243 = vsel %vm1684, %v2181, 0
        %v2246 = vsel %vm1684, %v2183, 0
        %v2249 = vsel %vm1684, %v2185, 0
        %v2252 = vsel %vm1684, %v2187, 0
        %2254 = vmatprep.subr.bf16.mxu0 0
        %2255 = vmatpush1.bf16.msra.mxu0 0
        %2256 = vmatprep.subr.bf16.mxu0 0
        %2257 = vmatpush1.bf16.msra.mxu0 0
        %2258 = vmatprep.subr.bf16.mxu0 0
        %2259 = vmatpush1.bf16.msra.mxu0 0
        %2260 = vmatprep.subr.bf16.mxu0 0
        %2261 = vmatpush1.bf16.msra.mxu0 0
        %2262 = vmatprep.subr.bf16.mxu0 0
        %2263 = vmatpush1.bf16.msra.mxu0 0
        %2264 = vmatprep.subr.bf16.mxu0 0
        %2265 = vmatpush1.bf16.msra.mxu0 0
        %2266 = vmatprep.subr.bf16.mxu0 0
        %2267 = vmatpush1.bf16.msra.mxu0 %v2197
        %2268 = vmatprep.subr.bf16.mxu0 0
        %2269 = vmatpush1.bf16.msra.mxu0 %v2196
        %2270 = vmatprep.subr.bf16.mxu0 0
        %2271 = vmatpush2.bf16.msra.mxu0 0
        %2272 = vmatprep.subr.bf16.mxu0 0
        %2273 = vmatpush2.bf16.msra.mxu0 0
        %2274 = vmatprep.subr.bf16.mxu0 0
        %2275 = vmatpush2.bf16.msra.mxu0 0
        %2276 = vmatprep.subr.bf16.mxu0 0
        %2277 = vmatpush2.bf16.msra.mxu0 0
        %2278 = vmatprep.subr.bf16.mxu0 0
        %2279 = vmatpush2.bf16.msra.mxu0 0
        %2280 = vmatprep.subr.bf16.mxu0 0
        %2281 = vmatpush2.bf16.msra.mxu0 0
        %2282 = vmatprep.subr.bf16.mxu0 0
        %2283 = vmatpush2.bf16.msra.mxu0 0
        %2284 = vmatprep.subr.bf16.mxu0 0
        %2285 = vmatpush2.bf16.msra.mxu0 0
        %2286 = vmatprep.mubr.bf16.mxu0 0
        %2287 = vmatmul.mubr.bf16.gmra.mxu0 %v2201
        %v2288 = vpop.f32.mrf.mxu0
        %v2289 = vadd.f32 0.0, %v2288
        %v2290 = vpop.f32.mrf.mxu0
        %v2291 = vpop.f32.mrf.mxu0
        %v2292 = vadd.f32 0.0, %v2291
        %v2293 = vpop.f32.mrf.mxu0
        %2294 = vmatprep.mubr.bf16.mxu0 0
        %2295 = vmatmul.mubr.bf16.gmra.mxu0 %v2204
        %v2296 = vpop.f32.mrf.mxu0
        %v2297 = vadd.f32 0.0, %v2296
        %v2298 = vpop.f32.mrf.mxu0
        %v2299 = vpop.f32.mrf.mxu0
        %v2300 = vadd.f32 0.0, %v2299
        %v2301 = vpop.f32.mrf.mxu0
        %2302 = vmatprep.mubr.bf16.mxu0 0
        %2303 = vmatmul.mubr.bf16.gmra.mxu0 %v2207
        %v2304 = vpop.f32.mrf.mxu0
        %v2305 = vadd.f32 0.0, %v2304
        %v2306 = vpop.f32.mrf.mxu0
        %v2307 = vpop.f32.mrf.mxu0
        %v2308 = vadd.f32 0.0, %v2307
        %v2309 = vpop.f32.mrf.mxu0
        %2310 = vmatprep.mubr.bf16.mxu0 0
        %2311 = vmatmul.mubr.bf16.gmra.mxu0 %v2210
        %v2312 = vpop.f32.mrf.mxu0
        %v2313 = vadd.f32 0.0, %v2312
        %v2314 = vpop.f32.mrf.mxu0
        %v2315 = vpop.f32.mrf.mxu0
        %v2316 = vadd.f32 0.0, %v2315
        %v2317 = vpop.f32.mrf.mxu0
        %2318 = vmatprep.mubr.bf16.mxu0 0
        %2319 = vmatmul.mubr.bf16.gmra.mxu0 %v2213
        %v2320 = vpop.f32.mrf.mxu0
        %v2321 = vadd.f32 0.0, %v2320
        %v2322 = vpop.f32.mrf.mxu0
        %v2323 = vpop.f32.mrf.mxu0
        %v2324 = vadd.f32 0.0, %v2323
        %v2325 = vpop.f32.mrf.mxu0
        %2326 = vmatprep.mubr.bf16.mxu0 0
        %2327 = vmatmul.mubr.bf16.gmra.mxu0 %v2216
        %v2328 = vpop.f32.mrf.mxu0
        %v2329 = vadd.f32 0.0, %v2328
        %v2330 = vpop.f32.mrf.mxu0
        %v2331 = vpop.f32.mrf.mxu0
        %v2332 = vadd.f32 0.0, %v2331
        %v2333 = vpop.f32.mrf.mxu0
        %2334 = vmatprep.mubr.bf16.mxu0 0
        %2335 = vmatmul.mubr.bf16.gmra.mxu0 %v2219
        %v2336 = vpop.f32.mrf.mxu0
        %v2337 = vadd.f32 0.0, %v2336
        %v2338 = vpop.f32.mrf.mxu0
        %v2339 = vpop.f32.mrf.mxu0
        %v2340 = vadd.f32 0.0, %v2339
        %v2341 = vpop.f32.mrf.mxu0
        %2342 = vmatprep.mubr.bf16.mxu0 0
        %2343 = vmatmul.mubr.bf16.gmra.mxu0 %v2222
        %v2344 = vpop.f32.mrf.mxu0
        %v2345 = vadd.f32 0.0, %v2344
        %v2346 = vpop.f32.mrf.mxu0
        %v2347 = vpop.f32.mrf.mxu0
        %v2348 = vadd.f32 0.0, %v2347
        %v2349 = vpop.f32.mrf.mxu0
        %2350 = vmatprep.mubr.bf16.mxu0 0
        %2351 = vmatmul.mubr.bf16.gmra.mxu0 %v2225
        %v2352 = vpop.f32.mrf.mxu0
        %v2353 = vadd.f32 0.0, %v2352
        %v2354 = vpop.f32.mrf.mxu0
        %v2355 = vpop.f32.mrf.mxu0
        %v2356 = vadd.f32 0.0, %v2355
        %v2357 = vpop.f32.mrf.mxu0
        %2358 = vmatprep.mubr.bf16.mxu0 0
        %2359 = vmatmul.mubr.bf16.gmra.mxu0 %v2228
        %v2360 = vpop.f32.mrf.mxu0
        %v2361 = vadd.f32 0.0, %v2360
        %v2362 = vpop.f32.mrf.mxu0
        %v2363 = vpop.f32.mrf.mxu0
        %v2364 = vadd.f32 0.0, %v2363
        %v2365 = vpop.f32.mrf.mxu0
        %2366 = vmatprep.mubr.bf16.mxu0 0
        %2367 = vmatmul.mubr.bf16.gmra.mxu0 %v2231
        %v2368 = vpop.f32.mrf.mxu0
        %v2369 = vadd.f32 0.0, %v2368
        %v2370 = vpop.f32.mrf.mxu0
        %v2371 = vpop.f32.mrf.mxu0
        %v2372 = vadd.f32 0.0, %v2371
        %v2373 = vpop.f32.mrf.mxu0
        %2374 = vmatprep.mubr.bf16.mxu0 0
        %2375 = vmatmul.mubr.bf16.gmra.mxu0 %v2234
        %v2376 = vpop.f32.mrf.mxu0
        %v2377 = vadd.f32 0.0, %v2376
        %v2378 = vpop.f32.mrf.mxu0
        %v2379 = vpop.f32.mrf.mxu0
        %v2380 = vadd.f32 0.0, %v2379
        %v2381 = vpop.f32.mrf.mxu0
        %2382 = vmatprep.mubr.bf16.mxu0 0
        %2383 = vmatmul.mubr.bf16.gmra.mxu0 %v2237
        %v2384 = vpop.f32.mrf.mxu0
        %v2385 = vadd.f32 0.0, %v2384
        %v2386 = vpop.f32.mrf.mxu0
        %v2387 = vpop.f32.mrf.mxu0
        %v2388 = vadd.f32 0.0, %v2387
        %v2389 = vpop.f32.mrf.mxu0
        %2390 = vmatprep.mubr.bf16.mxu0 0
        %2391 = vmatmul.mubr.bf16.gmra.mxu0 %v2240
        %v2392 = vpop.f32.mrf.mxu0
        %v2393 = vadd.f32 0.0, %v2392
        %v2394 = vpop.f32.mrf.mxu0
        %v2395 = vpop.f32.mrf.mxu0
        %v2396 = vadd.f32 0.0, %v2395
        %v2397 = vpop.f32.mrf.mxu0
        %2398 = vmatprep.mubr.bf16.mxu0 0
        %2399 = vmatmul.mubr.bf16.gmra.mxu0 %v2243
        %v2400 = vpop.f32.mrf.mxu0
        %v2401 = vadd.f32 0.0, %v2400
        %v2402 = vpop.f32.mrf.mxu0
        %v2403 = vpop.f32.mrf.mxu0
        %v2404 = vadd.f32 0.0, %v2403
        %v2405 = vpop.f32.mrf.mxu0
        %2406 = vmatprep.mubr.bf16.mxu0 0
        %2407 = vmatmul.mubr.bf16.gmra.mxu0 %v2246
        %v2408 = vpop.f32.mrf.mxu0
        %v2409 = vadd.f32 0.0, %v2408
        %v2410 = vpop.f32.mrf.mxu0
        %v2411 = vpop.f32.mrf.mxu0
        %v2412 = vadd.f32 0.0, %v2411
        %v2413 = vpop.f32.mrf.mxu0
        %2414 = vmatprep.mubr.bf16.mxu0 0
        %2415 = vmatmul.mubr.bf16.gmra.mxu0 %v2249
        %v2416 = vpop.f32.mrf.mxu0
        %v2417 = vadd.f32 0.0, %v2416
        %v2418 = vpop.f32.mrf.mxu0
        %v2419 = vpop.f32.mrf.mxu0
        %v2420 = vadd.f32 0.0, %v2419
        %v2421 = vpop.f32.mrf.mxu0
        %2422 = vmatprep.mubr.bf16.mxu0 0
        %2423 = vmatmul.mubr.bf16.gmra.mxu0 %v2252
        %v2424 = vpop.f32.mrf.mxu0
        %v2425 = vadd.f32 0.0, %v2424
        %v2426 = vpop.f32.mrf.mxu0
        %v2427 = vpop.f32.mrf.mxu0
        %v2428 = vadd.f32 0.0, %v2427
        %v2429 = vpop.f32.mrf.mxu0
        %2430 = vdwg.mxu0
        %v2431 = vadd.f32 %v1999, %v2289
        %v2432 = vadd.f32 %v2002, %v2292
        %v2433 = vadd.f32 %v2007, %v2297
        %v2434 = vadd.f32 %v2010, %v2300
        %v2435 = vadd.f32 %v2015, %v2305
        %v2436 = vadd.f32 %v2018, %v2308
        %v2437 = vadd.f32 %v2023, %v2313
        %v2438 = vadd.f32 %v2026, %v2316
        %v2439 = vadd.f32 %v2031, %v2321
        %v2440 = vadd.f32 %v2034, %v2324
        %v2441 = vadd.f32 %v2039, %v2329
        %v2442 = vadd.f32 %v2042, %v2332
        %v2443 = vadd.f32 %v2047, %v2337
        %v2444 = vadd.f32 %v2050, %v2340
        %v2445 = vadd.f32 %v2055, %v2345
        %v2446 = vadd.f32 %v2058, %v2348
        %v2447 = vadd.f32 %v2063, %v2353
        %v2448 = vadd.f32 %v2066, %v2356
        %v2449 = vadd.f32 %v2071, %v2361
        %v2450 = vadd.f32 %v2074, %v2364
        %v2451 = vadd.f32 %v2079, %v2369
        %v2452 = vadd.f32 %v2082, %v2372
        %v2453 = vadd.f32 %v2087, %v2377
        %v2454 = vadd.f32 %v2090, %v2380
        %v2455 = vadd.f32 %v2095, %v2385
        %v2456 = vadd.f32 %v2098, %v2388
        %v2457 = vadd.f32 %v2103, %v2393
        %v2458 = vadd.f32 %v2106, %v2396
        %v2459 = vadd.f32 %v2111, %v2401
        %v2460 = vadd.f32 %v2114, %v2404
        %v2461 = vadd.f32 %v2119, %v2409
        %v2462 = vadd.f32 %v2122, %v2412
        %v2463 = vadd.f32 %v2127, %v2417
        %v2464 = vadd.f32 %v2130, %v2420
        %v2465 = vadd.f32 %v2135, %v2425
        %v2466 = vadd.f32 %v2138, %v2428
        %v2467 = vld [vmem:[#allocation2 + $0x8] sm:$0xe]
        %v2468 = vld [vmem:[#allocation2 + $0xc] sm:$0xf]
        %v2469 = vld [vmem:[#allocation2 + $0x10] sm:$0xf]
        %v2470 = vld [vmem:[#allocation2 + $0x14] sm:$0xf]
        %v2471 = vld [vmem:[#allocation2 + $0x18] sm:$0xf]
        %v2472 = vld [vmem:[#allocation2 + $0x1c] sm:$0xf]
        %v2473 = vld [vmem:[#allocation2 + $0x20] sm:$0xf]
        %v2474 = vld [vmem:[#allocation2 + $0x24] sm:$0xf]
        %v2475 = vld [vmem:[#allocation2 + $0x28] sm:$0xf]
        %v2476 = vld [vmem:[#allocation2 + $0x2c] sm:$0xf]
        %v2477 = vld [vmem:[#allocation2 + $0x30] sm:$0xf]
        %v2478 = vld [vmem:[#allocation2 + $0x34] sm:$0xf]
        %v2479 = vld [vmem:[#allocation2 + $0x38] sm:$0xf]
        %v2480 = vld [vmem:[#allocation2 + $0x3c] sm:$0xf]
        %v2481 = vld [vmem:[#allocation2 + $0x40] sm:$0xf]
        %v2482 = vld [vmem:[#allocation2 + $0x44] sm:$0xf]
        %v2483 = vld [vmem:[#allocation2 + $0x48] sm:$0xf]
        %v2484 = vld [vmem:[#allocation2 + $0x4c] sm:$0xf]
        %v2485 = vld [vmem:[#allocation2 + $0x50] sm:$0xf]
        %v2486 = vld [vmem:[#allocation2 + $0x54] sm:$0xf]
        %v2487 = vld [vmem:[#allocation2 + $0x58] sm:$0xf]
        %v2488 = vld [vmem:[#allocation2 + $0x5c] sm:$0xf]
        %v2489 = vld [vmem:[#allocation2 + $0x60] sm:$0xf]
        %v2490 = vld [vmem:[#allocation2 + $0x64] sm:$0xf]
        %v2491 = vld [vmem:[#allocation2 + $0x68] sm:$0xf]
        %v2492 = vld [vmem:[#allocation2 + $0x6c] sm:$0xf]
        %v2493 = vld [vmem:[#allocation2 + $0x70] sm:$0xf]
        %v2494 = vld [vmem:[#allocation2 + $0x74] sm:$0xf]
        %v2495 = vld [vmem:[#allocation2 + $0x78] sm:$0xf]
        %v2496 = vld [vmem:[#allocation2 + $0x7c] sm:$0xf]
        %v2497 = vld [vmem:[#allocation2 + $0x80] sm:$0xf]
        %v2498 = vld [vmem:[#allocation2 + $0x84] sm:$0xf]
        %v2499 = vld [vmem:[#allocation2 + $0x88] sm:$0xf]
        %v2500 = vld [vmem:[#allocation2 + $0x8c] sm:$0xf]
        %v2501 = vld [vmem:[#allocation2 + $0x90] sm:$0xf]
        %v2502 = vld [vmem:[#allocation2 + $0x94] sm:$0xf]
        %v2503 = vld [vmem:[#allocation2 + $0x98] sm:$0x1]
        %s2504 = scalar_lea.vmem %s5, 48
        %v2505 = vld [vmem:[%s2504] sm:$0xf]
        %v2506 = vld [vmem:[%s2504 + $0x4] sm:$0xf]
        %v2507 = vld [vmem:[%s2504 + $0x8] sm:$0xf]
        %v2508 = vld [vmem:[%s2504 + $0xc] sm:$0xf]
        %v2546 = vunpack.c.l.b16 %v2467
        %v2547 = vunpack.c.l.b16 %v2468
        %v2548 = vunpack.c.l.b16 %v2469
        %v2549 = vunpack.c.l.b16 %v2470
        %v2550 = vunpack.c.l.b16 %v2471
        %v2551 = vunpack.c.l.b16 %v2472
        %v2552 = vunpack.c.l.b16 %v2473
        %v2553 = vunpack.c.l.b16 %v2474
        %v2554 = vunpack.c.l.b16 %v2475
        %v2555 = vunpack.c.l.b16 %v2476
        %v2556 = vunpack.c.l.b16 %v2477
        %v2557 = vunpack.c.l.b16 %v2478
        %v2558 = vunpack.c.l.b16 %v2479
        %v2559 = vunpack.c.l.b16 %v2480
        %v2560 = vunpack.c.l.b16 %v2481
        %v2561 = vunpack.c.l.b16 %v2482
        %v2562 = vunpack.c.l.b16 %v2483
        %v2563 = vunpack.c.l.b16 %v2484
        %v2564 = vunpack.c.l.b16 %v2485
        %v2565 = vunpack.c.l.b16 %v2486
        %v2566 = vunpack.c.l.b16 %v2487
        %v2567 = vunpack.c.l.b16 %v2488
        %v2568 = vunpack.c.l.b16 %v2489
        %v2569 = vunpack.c.l.b16 %v2490
        %v2570 = vunpack.c.l.b16 %v2491
        %v2571 = vunpack.c.l.b16 %v2492
        %v2572 = vunpack.c.l.b16 %v2493
        %v2573 = vunpack.c.l.b16 %v2494
        %v2574 = vunpack.c.l.b16 %v2495
        %v2575 = vunpack.c.l.b16 %v2496
        %v2576 = vunpack.c.l.b16 %v2497
        %v2577 = vunpack.c.l.b16 %v2498
        %v2578 = vunpack.c.l.b16 %v2499
        %v2579 = vunpack.c.l.b16 %v2500
        %v2580 = vunpack.c.l.b16 %v2501
        %v2581 = vunpack.c.l.b16 %v2502
        %v2582 = vunpack.c.l.b16 %v2503
        %v2583 = vpack.c.b16 %v2547, %v2546
        %v2584 = vpack.c.b16 %v2549, %v2548
        %v2585 = vpack.c.b16 %v2551, %v2550
        %v2586 = vpack.c.b16 %v2553, %v2552
        %v2587 = vpack.c.b16 %v2555, %v2554
        %v2588 = vpack.c.b16 %v2557, %v2556
        %v2589 = vpack.c.b16 %v2559, %v2558
        %v2590 = vpack.c.b16 %v2561, %v2560
        %v2591 = vpack.c.b16 %v2563, %v2562
        %v2592 = vpack.c.b16 %v2565, %v2564
        %v2593 = vpack.c.b16 %v2567, %v2566
        %v2594 = vpack.c.b16 %v2569, %v2568
        %v2595 = vpack.c.b16 %v2571, %v2570
        %v2596 = vpack.c.b16 %v2573, %v2572
        %v2597 = vpack.c.b16 %v2575, %v2574
        %v2598 = vpack.c.b16 %v2577, %v2576
        %v2599 = vpack.c.b16 %v2579, %v2578
        %v2600 = vpack.c.b16 %v2581, %v2580
        %v2601 = vpack.c.b16 %v2582, %v2582
        %v2602 = vrot.slane %v2583, 1
        %v2603 = vrot.slane %v2584, 1
        %v2604 = vsel %vm2150, %v2602, %v2603
        %v2605 = vrot.slane %v2585, 1
        %v2606 = vsel %vm2150, %v2603, %v2605
        %v2607 = vrot.slane %v2586, 1
        %v2608 = vsel %vm2150, %v2605, %v2607
        %v2609 = vrot.slane %v2587, 1
        %v2610 = vsel %vm2150, %v2607, %v2609
        %v2611 = vrot.slane %v2588, 1
        %v2612 = vsel %vm2150, %v2609, %v2611
        %v2613 = vrot.slane %v2589, 1
        %v2614 = vsel %vm2150, %v2611, %v2613
        %v2615 = vrot.slane %v2590, 1
        %v2616 = vsel %vm2150, %v2613, %v2615
        %v2617 = vrot.slane %v2591, 1
        %v2618 = vsel %vm2150, %v2615, %v2617
        %v2619 = vrot.slane %v2592, 1
        %v2620 = vsel %vm2150, %v2617, %v2619
        %v2621 = vrot.slane %v2593, 1
        %v2622 = vsel %vm2150, %v2619, %v2621
        %v2623 = vrot.slane %v2594, 1
        %v2624 = vsel %vm2150, %v2621, %v2623
        %v2625 = vrot.slane %v2595, 1
        %v2626 = vsel %vm2150, %v2623, %v2625
        %v2627 = vrot.slane %v2596, 1
        %v2628 = vsel %vm2150, %v2625, %v2627
        %v2629 = vrot.slane %v2597, 1
        %v2630 = vsel %vm2150, %v2627, %v2629
        %v2631 = vrot.slane %v2598, 1
        %v2632 = vsel %vm2150, %v2629, %v2631
        %v2633 = vrot.slane %v2599, 1
        %v2634 = vsel %vm2150, %v2631, %v2633
        %v2635 = vrot.slane %v2600, 1
        %v2636 = vsel %vm2150, %v2633, %v2635
        %v2637 = vrot.slane %v2601, 1
        %v2638 = vsel %vm2150, %v2635, %v2637
        %v2643 = vunpack.c.l.b16 %v2505
        %v2644 = vunpack.c.l.b16 %v2506
        %v2645 = vunpack.c.l.b16 %v2507
        %v2646 = vunpack.c.l.b16 %v2508
        %v2647 = vpack.c.b16 %v2644, %v2643
        %v2648 = vpack.c.b16 %v2646, %v2645
        %v2652 = vsel %vm1684, %v2604, 0
        %v2655 = vsel %vm1684, %v2606, 0
        %v2658 = vsel %vm1684, %v2608, 0
        %v2661 = vsel %vm1684, %v2610, 0
        %v2664 = vsel %vm1684, %v2612, 0
        %v2667 = vsel %vm1684, %v2614, 0
        %v2670 = vsel %vm1684, %v2616, 0
        %v2673 = vsel %vm1684, %v2618, 0
        %v2676 = vsel %vm1684, %v2620, 0
        %v2679 = vsel %vm1684, %v2622, 0
        %v2682 = vsel %vm1684, %v2624, 0
        %v2685 = vsel %vm1684, %v2626, 0
        %v2688 = vsel %vm1684, %v2628, 0
        %v2691 = vsel %vm1684, %v2630, 0
        %v2694 = vsel %vm1684, %v2632, 0
        %v2697 = vsel %vm1684, %v2634, 0
        %v2700 = vsel %vm1684, %v2636, 0
        %v2703 = vsel %vm1684, %v2638, 0
        %2705 = vmatprep.subr.bf16.mxu0 0
        %2706 = vmatpush1.bf16.msra.mxu0 0
        %2707 = vmatprep.subr.bf16.mxu0 0
        %2708 = vmatpush1.bf16.msra.mxu0 0
        %2709 = vmatprep.subr.bf16.mxu0 0
        %2710 = vmatpush1.bf16.msra.mxu0 0
        %2711 = vmatprep.subr.bf16.mxu0 0
        %2712 = vmatpush1.bf16.msra.mxu0 0
        %2713 = vmatprep.subr.bf16.mxu0 0
        %2714 = vmatpush1.bf16.msra.mxu0 0
        %2715 = vmatprep.subr.bf16.mxu0 0
        %2716 = vmatpush1.bf16.msra.mxu0 0
        %2717 = vmatprep.subr.bf16.mxu0 0
        %2718 = vmatpush1.bf16.msra.mxu0 %v2648
        %2719 = vmatprep.subr.bf16.mxu0 0
        %2720 = vmatpush1.bf16.msra.mxu0 %v2647
        %2721 = vmatprep.subr.bf16.mxu0 0
        %2722 = vmatpush2.bf16.msra.mxu0 0
        %2723 = vmatprep.subr.bf16.mxu0 0
        %2724 = vmatpush2.bf16.msra.mxu0 0
        %2725 = vmatprep.subr.bf16.mxu0 0
        %2726 = vmatpush2.bf16.msra.mxu0 0
        %2727 = vmatprep.subr.bf16.mxu0 0
        %2728 = vmatpush2.bf16.msra.mxu0 0
        %2729 = vmatprep.subr.bf16.mxu0 0
        %2730 = vmatpush2.bf16.msra.mxu0 0
        %2731 = vmatprep.subr.bf16.mxu0 0
        %2732 = vmatpush2.bf16.msra.mxu0 0
        %2733 = vmatprep.subr.bf16.mxu0 0
        %2734 = vmatpush2.bf16.msra.mxu0 0
        %2735 = vmatprep.subr.bf16.mxu0 0
        %2736 = vmatpush2.bf16.msra.mxu0 0
        %2737 = vmatprep.mubr.bf16.mxu0 0
        %2738 = vmatmul.mubr.bf16.gmra.mxu0 %v2652
        %v2739 = vpop.f32.mrf.mxu0
        %v2740 = vadd.f32 0.0, %v2739
        %v2741 = vpop.f32.mrf.mxu0
        %v2742 = vpop.f32.mrf.mxu0
        %v2743 = vadd.f32 0.0, %v2742
        %v2744 = vpop.f32.mrf.mxu0
        %2745 = vmatprep.mubr.bf16.mxu0 0
        %2746 = vmatmul.mubr.bf16.gmra.mxu0 %v2655
        %v2747 = vpop.f32.mrf.mxu0
        %v2748 = vadd.f32 0.0, %v2747
        %v2749 = vpop.f32.mrf.mxu0
        %v2750 = vpop.f32.mrf.mxu0
        %v2751 = vadd.f32 0.0, %v2750
        %v2752 = vpop.f32.mrf.mxu0
        %2753 = vmatprep.mubr.bf16.mxu0 0
        %2754 = vmatmul.mubr.bf16.gmra.mxu0 %v2658
        %v2755 = vpop.f32.mrf.mxu0
        %v2756 = vadd.f32 0.0, %v2755
        %v2757 = vpop.f32.mrf.mxu0
        %v2758 = vpop.f32.mrf.mxu0
        %v2759 = vadd.f32 0.0, %v2758
        %v2760 = vpop.f32.mrf.mxu0
        %2761 = vmatprep.mubr.bf16.mxu0 0
        %2762 = vmatmul.mubr.bf16.gmra.mxu0 %v2661
        %v2763 = vpop.f32.mrf.mxu0
        %v2764 = vadd.f32 0.0, %v2763
        %v2765 = vpop.f32.mrf.mxu0
        %v2766 = vpop.f32.mrf.mxu0
        %v2767 = vadd.f32 0.0, %v2766
        %v2768 = vpop.f32.mrf.mxu0
        %2769 = vmatprep.mubr.bf16.mxu0 0
        %2770 = vmatmul.mubr.bf16.gmra.mxu0 %v2664
        %v2771 = vpop.f32.mrf.mxu0
        %v2772 = vadd.f32 0.0, %v2771
        %v2773 = vpop.f32.mrf.mxu0
        %v2774 = vpop.f32.mrf.mxu0
        %v2775 = vadd.f32 0.0, %v2774
        %v2776 = vpop.f32.mrf.mxu0
        %2777 = vmatprep.mubr.bf16.mxu0 0
        %2778 = vmatmul.mubr.bf16.gmra.mxu0 %v2667
        %v2779 = vpop.f32.mrf.mxu0
        %v2780 = vadd.f32 0.0, %v2779
        %v2781 = vpop.f32.mrf.mxu0
        %v2782 = vpop.f32.mrf.mxu0
        %v2783 = vadd.f32 0.0, %v2782
        %v2784 = vpop.f32.mrf.mxu0
        %2785 = vmatprep.mubr.bf16.mxu0 0
        %2786 = vmatmul.mubr.bf16.gmra.mxu0 %v2670
        %v2787 = vpop.f32.mrf.mxu0
        %v2788 = vadd.f32 0.0, %v2787
        %v2789 = vpop.f32.mrf.mxu0
        %v2790 = vpop.f32.mrf.mxu0
        %v2791 = vadd.f32 0.0, %v2790
        %v2792 = vpop.f32.mrf.mxu0
        %2793 = vmatprep.mubr.bf16.mxu0 0
        %2794 = vmatmul.mubr.bf16.gmra.mxu0 %v2673
        %v2795 = vpop.f32.mrf.mxu0
        %v2796 = vadd.f32 0.0, %v2795
        %v2797 = vpop.f32.mrf.mxu0
        %v2798 = vpop.f32.mrf.mxu0
        %v2799 = vadd.f32 0.0, %v2798
        %v2800 = vpop.f32.mrf.mxu0
        %2801 = vmatprep.mubr.bf16.mxu0 0
        %2802 = vmatmul.mubr.bf16.gmra.mxu0 %v2676
        %v2803 = vpop.f32.mrf.mxu0
        %v2804 = vadd.f32 0.0, %v2803
        %v2805 = vpop.f32.mrf.mxu0
        %v2806 = vpop.f32.mrf.mxu0
        %v2807 = vadd.f32 0.0, %v2806
        %v2808 = vpop.f32.mrf.mxu0
        %2809 = vmatprep.mubr.bf16.mxu0 0
        %2810 = vmatmul.mubr.bf16.gmra.mxu0 %v2679
        %v2811 = vpop.f32.mrf.mxu0
        %v2812 = vadd.f32 0.0, %v2811
        %v2813 = vpop.f32.mrf.mxu0
        %v2814 = vpop.f32.mrf.mxu0
        %v2815 = vadd.f32 0.0, %v2814
        %v2816 = vpop.f32.mrf.mxu0
        %2817 = vmatprep.mubr.bf16.mxu0 0
        %2818 = vmatmul.mubr.bf16.gmra.mxu0 %v2682
        %v2819 = vpop.f32.mrf.mxu0
        %v2820 = vadd.f32 0.0, %v2819
        %v2821 = vpop.f32.mrf.mxu0
        %v2822 = vpop.f32.mrf.mxu0
        %v2823 = vadd.f32 0.0, %v2822
        %v2824 = vpop.f32.mrf.mxu0
        %2825 = vmatprep.mubr.bf16.mxu0 0
        %2826 = vmatmul.mubr.bf16.gmra.mxu0 %v2685
        %v2827 = vpop.f32.mrf.mxu0
        %v2828 = vadd.f32 0.0, %v2827
        %v2829 = vpop.f32.mrf.mxu0
        %v2830 = vpop.f32.mrf.mxu0
        %v2831 = vadd.f32 0.0, %v2830
        %v2832 = vpop.f32.mrf.mxu0
        %2833 = vmatprep.mubr.bf16.mxu0 0
        %2834 = vmatmul.mubr.bf16.gmra.mxu0 %v2688
        %v2835 = vpop.f32.mrf.mxu0
        %v2836 = vadd.f32 0.0, %v2835
        %v2837 = vpop.f32.mrf.mxu0
        %v2838 = vpop.f32.mrf.mxu0
        %v2839 = vadd.f32 0.0, %v2838
        %v2840 = vpop.f32.mrf.mxu0
        %2841 = vmatprep.mubr.bf16.mxu0 0
        %2842 = vmatmul.mubr.bf16.gmra.mxu0 %v2691
        %v2843 = vpop.f32.mrf.mxu0
        %v2844 = vadd.f32 0.0, %v2843
        %v2845 = vpop.f32.mrf.mxu0
        %v2846 = vpop.f32.mrf.mxu0
        %v2847 = vadd.f32 0.0, %v2846
        %v2848 = vpop.f32.mrf.mxu0
        %2849 = vmatprep.mubr.bf16.mxu0 0
        %2850 = vmatmul.mubr.bf16.gmra.mxu0 %v2694
        %v2851 = vpop.f32.mrf.mxu0
        %v2852 = vadd.f32 0.0, %v2851
        %v2853 = vpop.f32.mrf.mxu0
        %v2854 = vpop.f32.mrf.mxu0
        %v2855 = vadd.f32 0.0, %v2854
        %v2856 = vpop.f32.mrf.mxu0
        %2857 = vmatprep.mubr.bf16.mxu0 0
        %2858 = vmatmul.mubr.bf16.gmra.mxu0 %v2697
        %v2859 = vpop.f32.mrf.mxu0
        %v2860 = vadd.f32 0.0, %v2859
        %v2861 = vpop.f32.mrf.mxu0
        %v2862 = vpop.f32.mrf.mxu0
        %v2863 = vadd.f32 0.0, %v2862
        %v2864 = vpop.f32.mrf.mxu0
        %2865 = vmatprep.mubr.bf16.mxu0 0
        %2866 = vmatmul.mubr.bf16.gmra.mxu0 %v2700
        %v2867 = vpop.f32.mrf.mxu0
        %v2868 = vadd.f32 0.0, %v2867
        %v2869 = vpop.f32.mrf.mxu0
        %v2870 = vpop.f32.mrf.mxu0
        %v2871 = vadd.f32 0.0, %v2870
        %v2872 = vpop.f32.mrf.mxu0
        %2873 = vmatprep.mubr.bf16.mxu0 0
        %2874 = vmatmul.mubr.bf16.gmra.mxu0 %v2703
        %v2875 = vpop.f32.mrf.mxu0
        %v2876 = vadd.f32 0.0, %v2875
        %v2877 = vpop.f32.mrf.mxu0
        %v2878 = vpop.f32.mrf.mxu0
        %v2879 = vadd.f32 0.0, %v2878
        %v2880 = vpop.f32.mrf.mxu0
        %2881 = vdwg.mxu0
        %v2882 = vadd.f32 %v2431, %v2740
        %v2883 = vadd.f32 %v2432, %v2743
        %v2884 = vadd.f32 %v2433, %v2748
        %v2885 = vadd.f32 %v2434, %v2751
        %v2886 = vadd.f32 %v2435, %v2756
        %v2887 = vadd.f32 %v2436, %v2759
        %v2888 = vadd.f32 %v2437, %v2764
        %v2889 = vadd.f32 %v2438, %v2767
        %v2890 = vadd.f32 %v2439, %v2772
        %v2891 = vadd.f32 %v2440, %v2775
        %v2892 = vadd.f32 %v2441, %v2780
        %v2893 = vadd.f32 %v2442, %v2783
        %v2894 = vadd.f32 %v2443, %v2788
        %v2895 = vadd.f32 %v2444, %v2791
        %v2896 = vadd.f32 %v2445, %v2796
        %v2897 = vadd.f32 %v2446, %v2799
        %v2898 = vadd.f32 %v2447, %v2804
        %v2899 = vadd.f32 %v2448, %v2807
        %v2900 = vadd.f32 %v2449, %v2812
        %v2901 = vadd.f32 %v2450, %v2815
        %v2902 = vadd.f32 %v2451, %v2820
        %v2903 = vadd.f32 %v2452, %v2823
        %v2904 = vadd.f32 %v2453, %v2828
        %v2905 = vadd.f32 %v2454, %v2831
        %v2906 = vadd.f32 %v2455, %v2836
        %v2907 = vadd.f32 %v2456, %v2839
        %v2908 = vadd.f32 %v2457, %v2844
        %v2909 = vadd.f32 %v2458, %v2847
        %v2910 = vadd.f32 %v2459, %v2852
        %v2911 = vadd.f32 %v2460, %v2855
        %v2912 = vadd.f32 %v2461, %v2860
        %v2913 = vadd.f32 %v2462, %v2863
        %v2914 = vadd.f32 %v2463, %v2868
        %v2915 = vadd.f32 %v2464, %v2871
        %v2916 = vadd.f32 %v2465, %v2876
        %v2917 = vadd.f32 %v2466, %v2879
        %v2918 = vld [vmem:[#allocation2 + $0x98] sm:$0x3]
        %s2919 = scalar_lea.vmem %s5, 64
        %v2920 = vld [vmem:[%s2919] sm:$0xf]
        %v2921 = vld [vmem:[%s2919 + $0x4] sm:$0xf]
        %v2922 = vld [vmem:[%s2919 + $0x8] sm:$0xf]
        %v2923 = vld [vmem:[%s2919 + $0xc] sm:$0xf]
        %v2925 = vunpack.c.l.b16 %v2918
        %v2926 = vpack.c.b16 %v2925, %v2925
        %vm2927 = vsmask.f32 6400
        %v2929 = vshrl.u32 %v2583, 16
        %v2931 = vrot.slane %v2929, 1
        %v2932 = vshll.u32 %v2583, 16
        %v2934 = vrot.slane %v2932, 2
        %v2935 = vor.u32 %v2931, %v2934
        %v2937 = vshrl.u32 %v2584, 16
        %v2939 = vrot.slane %v2937, 1
        %v2940 = vshll.u32 %v2584, 16
        %v2942 = vrot.slane %v2940, 2
        %v2943 = vor.u32 %v2939, %v2942
        %v2944 = vsel %vm2927, %v2935, %v2943
        %v2946 = vshrl.u32 %v2585, 16
        %v2948 = vrot.slane %v2946, 1
        %v2949 = vshll.u32 %v2585, 16
        %v2951 = vrot.slane %v2949, 2
        %v2952 = vor.u32 %v2948, %v2951
        %v2953 = vsel %vm2927, %v2943, %v2952
        %v2955 = vshrl.u32 %v2586, 16
        %v2957 = vrot.slane %v2955, 1
        %v2958 = vshll.u32 %v2586, 16
        %v2960 = vrot.slane %v2958, 2
        %v2961 = vor.u32 %v2957, %v2960
        %v2962 = vsel %vm2927, %v2952, %v2961
        %v2964 = vshrl.u32 %v2587, 16
        %v2966 = vrot.slane %v2964, 1
        %v2967 = vshll.u32 %v2587, 16
        %v2969 = vrot.slane %v2967, 2
        %v2970 = vor.u32 %v2966, %v2969
        %v2971 = vsel %vm2927, %v2961, %v2970
        %v2973 = vshrl.u32 %v2588, 16
        %v2975 = vrot.slane %v2973, 1
        %v2976 = vshll.u32 %v2588, 16
        %v2978 = vrot.slane %v2976, 2
        %v2979 = vor.u32 %v2975, %v2978
        %v2980 = vsel %vm2927, %v2970, %v2979
        %v2982 = vshrl.u32 %v2589, 16
        %v2984 = vrot.slane %v2982, 1
        %v2985 = vshll.u32 %v2589, 16
        %v2987 = vrot.slane %v2985, 2
        %v2988 = vor.u32 %v2984, %v2987
        %v2989 = vsel %vm2927, %v2979, %v2988
        %v2991 = vshrl.u32 %v2590, 16
        %v2993 = vrot.slane %v2991, 1
        %v2994 = vshll.u32 %v2590, 16
        %v2996 = vrot.slane %v2994, 2
        %v2997 = vor.u32 %v2993, %v2996
        %v2998 = vsel %vm2927, %v2988, %v2997
        %v3000 = vshrl.u32 %v2591, 16
        %v3002 = vrot.slane %v3000, 1
        %v3003 = vshll.u32 %v2591, 16
        %v3005 = vrot.slane %v3003, 2
        %v3006 = vor.u32 %v3002, %v3005
        %v3007 = vsel %vm2927, %v2997, %v3006
        %v3009 = vshrl.u32 %v2592, 16
        %v3011 = vrot.slane %v3009, 1
        %v3012 = vshll.u32 %v2592, 16
        %v3014 = vrot.slane %v3012, 2
        %v3015 = vor.u32 %v3011, %v3014
        %v3016 = vsel %vm2927, %v3006, %v3015
        %v3018 = vshrl.u32 %v2593, 16
        %v3020 = vrot.slane %v3018, 1
        %v3021 = vshll.u32 %v2593, 16
        %v3023 = vrot.slane %v3021, 2
        %v3024 = vor.u32 %v3020, %v3023
        %v3025 = vsel %vm2927, %v3015, %v3024
        %v3027 = vshrl.u32 %v2594, 16
        %v3029 = vrot.slane %v3027, 1
        %v3030 = vshll.u32 %v2594, 16
        %v3032 = vrot.slane %v3030, 2
        %v3033 = vor.u32 %v3029, %v3032
        %v3034 = vsel %vm2927, %v3024, %v3033
        %v3036 = vshrl.u32 %v2595, 16
        %v3038 = vrot.slane %v3036, 1
        %v3039 = vshll.u32 %v2595, 16
        %v3041 = vrot.slane %v3039, 2
        %v3042 = vor.u32 %v3038, %v3041
        %v3043 = vsel %vm2927, %v3033, %v3042
        %v3045 = vshrl.u32 %v2596, 16
        %v3047 = vrot.slane %v3045, 1
        %v3048 = vshll.u32 %v2596, 16
        %v3050 = vrot.slane %v3048, 2
        %v3051 = vor.u32 %v3047, %v3050
        %v3052 = vsel %vm2927, %v3042, %v3051
        %v3054 = vshrl.u32 %v2597, 16
        %v3056 = vrot.slane %v3054, 1
        %v3057 = vshll.u32 %v2597, 16
        %v3059 = vrot.slane %v3057, 2
        %v3060 = vor.u32 %v3056, %v3059
        %v3061 = vsel %vm2927, %v3051, %v3060
        %v3063 = vshrl.u32 %v2598, 16
        %v3065 = vrot.slane %v3063, 1
        %v3066 = vshll.u32 %v2598, 16
        %v3068 = vrot.slane %v3066, 2
        %v3069 = vor.u32 %v3065, %v3068
        %v3070 = vsel %vm2927, %v3060, %v3069
        %v3072 = vshrl.u32 %v2599, 16
        %v3074 = vrot.slane %v3072, 1
        %v3075 = vshll.u32 %v2599, 16
        %v3077 = vrot.slane %v3075, 2
        %v3078 = vor.u32 %v3074, %v3077
        %v3079 = vsel %vm2927, %v3069, %v3078
        %v3081 = vshrl.u32 %v2600, 16
        %v3083 = vrot.slane %v3081, 1
        %v3084 = vshll.u32 %v2600, 16
        %v3086 = vrot.slane %v3084, 2
        %v3087 = vor.u32 %v3083, %v3086
        %v3088 = vsel %vm2927, %v3078, %v3087
        %v3090 = vshrl.u32 %v2926, 16
        %v3092 = vrot.slane %v3090, 1
        %v3093 = vshll.u32 %v2926, 16
        %v3095 = vrot.slane %v3093, 2
        %v3096 = vor.u32 %v3092, %v3095
        %v3097 = vsel %vm2927, %v3087, %v3096
        %v3102 = vunpack.c.l.b16 %v2920
        %v3103 = vunpack.c.l.b16 %v2921
        %v3104 = vunpack.c.l.b16 %v2922
        %v3105 = vunpack.c.l.b16 %v2923
        %v3106 = vpack.c.b16 %v3103, %v3102
        %v3107 = vpack.c.b16 %v3105, %v3104
        %v3111 = vsel %vm1684, %v2944, 0
        %v3114 = vsel %vm1684, %v2953, 0
        %v3117 = vsel %vm1684, %v2962, 0
        %v3120 = vsel %vm1684, %v2971, 0
        %v3123 = vsel %vm1684, %v2980, 0
        %v3126 = vsel %vm1684, %v2989, 0
        %v3129 = vsel %vm1684, %v2998, 0
        %v3132 = vsel %vm1684, %v3007, 0
        %v3135 = vsel %vm1684, %v3016, 0
        %v3138 = vsel %vm1684, %v3025, 0
        %v3141 = vsel %vm1684, %v3034, 0
        %v3144 = vsel %vm1684, %v3043, 0
        %v3147 = vsel %vm1684, %v3052, 0
        %v3150 = vsel %vm1684, %v3061, 0
        %v3153 = vsel %vm1684, %v3070, 0
        %v3156 = vsel %vm1684, %v3079, 0
        %v3159 = vsel %vm1684, %v3088, 0
        %v3162 = vsel %vm1684, %v3097, 0
        %3164 = vmatprep.subr.bf16.mxu0 0
        %3165 = vmatpush1.bf16.msra.mxu0 0
        %3166 = vmatprep.subr.bf16.mxu0 0
        %3167 = vmatpush1.bf16.msra.mxu0 0
        %3168 = vmatprep.subr.bf16.mxu0 0
        %3169 = vmatpush1.bf16.msra.mxu0 0
        %3170 = vmatprep.subr.bf16.mxu0 0
        %3171 = vmatpush1.bf16.msra.mxu0 0
        %3172 = vmatprep.subr.bf16.mxu0 0
        %3173 = vmatpush1.bf16.msra.mxu0 0
        %3174 = vmatprep.subr.bf16.mxu0 0
        %3175 = vmatpush1.bf16.msra.mxu0 0
        %3176 = vmatprep.subr.bf16.mxu0 0
        %3177 = vmatpush1.bf16.msra.mxu0 %v3107
        %3178 = vmatprep.subr.bf16.mxu0 0
        %3179 = vmatpush1.bf16.msra.mxu0 %v3106
        %3180 = vmatprep.subr.bf16.mxu0 0
        %3181 = vmatpush2.bf16.msra.mxu0 0
        %3182 = vmatprep.subr.bf16.mxu0 0
        %3183 = vmatpush2.bf16.msra.mxu0 0
        %3184 = vmatprep.subr.bf16.mxu0 0
        %3185 = vmatpush2.bf16.msra.mxu0 0
        %3186 = vmatprep.subr.bf16.mxu0 0
        %3187 = vmatpush2.bf16.msra.mxu0 0
        %3188 = vmatprep.subr.bf16.mxu0 0
        %3189 = vmatpush2.bf16.msra.mxu0 0
        %3190 = vmatprep.subr.bf16.mxu0 0
        %3191 = vmatpush2.bf16.msra.mxu0 0
        %3192 = vmatprep.subr.bf16.mxu0 0
        %3193 = vmatpush2.bf16.msra.mxu0 0
        %3194 = vmatprep.subr.bf16.mxu0 0
        %3195 = vmatpush2.bf16.msra.mxu0 0
        %3196 = vmatprep.mubr.bf16.mxu0 0
        %3197 = vmatmul.mubr.bf16.gmra.mxu0 %v3111
        %v3198 = vpop.f32.mrf.mxu0
        %v3199 = vadd.f32 0.0, %v3198
        %v3200 = vpop.f32.mrf.mxu0
        %v3201 = vpop.f32.mrf.mxu0
        %v3202 = vadd.f32 0.0, %v3201
        %v3203 = vpop.f32.mrf.mxu0
        %3204 = vmatprep.mubr.bf16.mxu0 0
        %3205 = vmatmul.mubr.bf16.gmra.mxu0 %v3114
        %v3206 = vpop.f32.mrf.mxu0
        %v3207 = vadd.f32 0.0, %v3206
        %v3208 = vpop.f32.mrf.mxu0
        %v3209 = vpop.f32.mrf.mxu0
        %v3210 = vadd.f32 0.0, %v3209
        %v3211 = vpop.f32.mrf.mxu0
        %3212 = vmatprep.mubr.bf16.mxu0 0
        %3213 = vmatmul.mubr.bf16.gmra.mxu0 %v3117
        %v3214 = vpop.f32.mrf.mxu0
        %v3215 = vadd.f32 0.0, %v3214
        %v3216 = vpop.f32.mrf.mxu0
        %v3217 = vpop.f32.mrf.mxu0
        %v3218 = vadd.f32 0.0, %v3217
        %v3219 = vpop.f32.mrf.mxu0
        %3220 = vmatprep.mubr.bf16.mxu0 0
        %3221 = vmatmul.mubr.bf16.gmra.mxu0 %v3120
        %v3222 = vpop.f32.mrf.mxu0
        %v3223 = vadd.f32 0.0, %v3222
        %v3224 = vpop.f32.mrf.mxu0
        %v3225 = vpop.f32.mrf.mxu0
        %v3226 = vadd.f32 0.0, %v3225
        %v3227 = vpop.f32.mrf.mxu0
        %3228 = vmatprep.mubr.bf16.mxu0 0
        %3229 = vmatmul.mubr.bf16.gmra.mxu0 %v3123
        %v3230 = vpop.f32.mrf.mxu0
        %v3231 = vadd.f32 0.0, %v3230
        %v3232 = vpop.f32.mrf.mxu0
        %v3233 = vpop.f32.mrf.mxu0
        %v3234 = vadd.f32 0.0, %v3233
        %v3235 = vpop.f32.mrf.mxu0
        %3236 = vmatprep.mubr.bf16.mxu0 0
        %3237 = vmatmul.mubr.bf16.gmra.mxu0 %v3126
        %v3238 = vpop.f32.mrf.mxu0
        %v3239 = vadd.f32 0.0, %v3238
        %v3240 = vpop.f32.mrf.mxu0
        %v3241 = vpop.f32.mrf.mxu0
        %v3242 = vadd.f32 0.0, %v3241
        %v3243 = vpop.f32.mrf.mxu0
        %3244 = vmatprep.mubr.bf16.mxu0 0
        %3245 = vmatmul.mubr.bf16.gmra.mxu0 %v3129
        %v3246 = vpop.f32.mrf.mxu0
        %v3247 = vadd.f32 0.0, %v3246
        %v3248 = vpop.f32.mrf.mxu0
        %v3249 = vpop.f32.mrf.mxu0
        %v3250 = vadd.f32 0.0, %v3249
        %v3251 = vpop.f32.mrf.mxu0
        %3252 = vmatprep.mubr.bf16.mxu0 0
        %3253 = vmatmul.mubr.bf16.gmra.mxu0 %v3132
        %v3254 = vpop.f32.mrf.mxu0
        %v3255 = vadd.f32 0.0, %v3254
        %v3256 = vpop.f32.mrf.mxu0
        %v3257 = vpop.f32.mrf.mxu0
        %v3258 = vadd.f32 0.0, %v3257
        %v3259 = vpop.f32.mrf.mxu0
        %3260 = vmatprep.mubr.bf16.mxu0 0
        %3261 = vmatmul.mubr.bf16.gmra.mxu0 %v3135
        %v3262 = vpop.f32.mrf.mxu0
        %v3263 = vadd.f32 0.0, %v3262
        %v3264 = vpop.f32.mrf.mxu0
        %v3265 = vpop.f32.mrf.mxu0
        %v3266 = vadd.f32 0.0, %v3265
        %v3267 = vpop.f32.mrf.mxu0
        %3268 = vmatprep.mubr.bf16.mxu0 0
        %3269 = vmatmul.mubr.bf16.gmra.mxu0 %v3138
        %v3270 = vpop.f32.mrf.mxu0
        %v3271 = vadd.f32 0.0, %v3270
        %v3272 = vpop.f32.mrf.mxu0
        %v3273 = vpop.f32.mrf.mxu0
        %v3274 = vadd.f32 0.0, %v3273
        %v3275 = vpop.f32.mrf.mxu0
        %3276 = vmatprep.mubr.bf16.mxu0 0
        %3277 = vmatmul.mubr.bf16.gmra.mxu0 %v3141
        %v3278 = vpop.f32.mrf.mxu0
        %v3279 = vadd.f32 0.0, %v3278
        %v3280 = vpop.f32.mrf.mxu0
        %v3281 = vpop.f32.mrf.mxu0
        %v3282 = vadd.f32 0.0, %v3281
        %v3283 = vpop.f32.mrf.mxu0
        %3284 = vmatprep.mubr.bf16.mxu0 0
        %3285 = vmatmul.mubr.bf16.gmra.mxu0 %v3144
        %v3286 = vpop.f32.mrf.mxu0
        %v3287 = vadd.f32 0.0, %v3286
        %v3288 = vpop.f32.mrf.mxu0
        %v3289 = vpop.f32.mrf.mxu0
        %v3290 = vadd.f32 0.0, %v3289
        %v3291 = vpop.f32.mrf.mxu0
        %3292 = vmatprep.mubr.bf16.mxu0 0
        %3293 = vmatmul.mubr.bf16.gmra.mxu0 %v3147
        %v3294 = vpop.f32.mrf.mxu0
        %v3295 = vadd.f32 0.0, %v3294
        %v3296 = vpop.f32.mrf.mxu0
        %v3297 = vpop.f32.mrf.mxu0
        %v3298 = vadd.f32 0.0, %v3297
        %v3299 = vpop.f32.mrf.mxu0
        %3300 = vmatprep.mubr.bf16.mxu0 0
        %3301 = vmatmul.mubr.bf16.gmra.mxu0 %v3150
        %v3302 = vpop.f32.mrf.mxu0
        %v3303 = vadd.f32 0.0, %v3302
        %v3304 = vpop.f32.mrf.mxu0
        %v3305 = vpop.f32.mrf.mxu0
        %v3306 = vadd.f32 0.0, %v3305
        %v3307 = vpop.f32.mrf.mxu0
        %3308 = vmatprep.mubr.bf16.mxu0 0
        %3309 = vmatmul.mubr.bf16.gmra.mxu0 %v3153
        %v3310 = vpop.f32.mrf.mxu0
        %v3311 = vadd.f32 0.0, %v3310
        %v3312 = vpop.f32.mrf.mxu0
        %v3313 = vpop.f32.mrf.mxu0
        %v3314 = vadd.f32 0.0, %v3313
        %v3315 = vpop.f32.mrf.mxu0
        %3316 = vmatprep.mubr.bf16.mxu0 0
        %3317 = vmatmul.mubr.bf16.gmra.mxu0 %v3156
        %v3318 = vpop.f32.mrf.mxu0
        %v3319 = vadd.f32 0.0, %v3318
        %v3320 = vpop.f32.mrf.mxu0
        %v3321 = vpop.f32.mrf.mxu0
        %v3322 = vadd.f32 0.0, %v3321
        %v3323 = vpop.f32.mrf.mxu0
        %3324 = vmatprep.mubr.bf16.mxu0 0
        %3325 = vmatmul.mubr.bf16.gmra.mxu0 %v3159
        %v3326 = vpop.f32.mrf.mxu0
        %v3327 = vadd.f32 0.0, %v3326
        %v3328 = vpop.f32.mrf.mxu0
        %v3329 = vpop.f32.mrf.mxu0
        %v3330 = vadd.f32 0.0, %v3329
        %v3331 = vpop.f32.mrf.mxu0
        %3332 = vmatprep.mubr.bf16.mxu0 0
        %3333 = vmatmul.mubr.bf16.gmra.mxu0 %v3162
        %v3334 = vpop.f32.mrf.mxu0
        %v3335 = vadd.f32 0.0, %v3334
        %v3336 = vpop.f32.mrf.mxu0
        %v3337 = vpop.f32.mrf.mxu0
        %v3338 = vadd.f32 0.0, %v3337
        %v3339 = vpop.f32.mrf.mxu0
        %3340 = vdwg.mxu0
        %v3341 = vadd.f32 %v2882, %v3199
        %v3342 = vadd.f32 %v2883, %v3202
        %v3343 = vadd.f32 %v2884, %v3207
        %v3344 = vadd.f32 %v2885, %v3210
        %v3345 = vadd.f32 %v2886, %v3215
        %v3346 = vadd.f32 %v2887, %v3218
        %v3347 = vadd.f32 %v2888, %v3223
        %v3348 = vadd.f32 %v2889, %v3226
        %v3349 = vadd.f32 %v2890, %v3231
        %v3350 = vadd.f32 %v2891, %v3234
        %v3351 = vadd.f32 %v2892, %v3239
        %v3352 = vadd.f32 %v2893, %v3242
        %v3353 = vadd.f32 %v2894, %v3247
        %v3354 = vadd.f32 %v2895, %v3250
        %v3355 = vadd.f32 %v2896, %v3255
        %v3356 = vadd.f32 %v2897, %v3258
        %v3357 = vadd.f32 %v2898, %v3263
        %v3358 = vadd.f32 %v2899, %v3266
        %v3359 = vadd.f32 %v2900, %v3271
        %v3360 = vadd.f32 %v2901, %v3274
        %v3361 = vadd.f32 %v2902, %v3279
        %v3362 = vadd.f32 %v2903, %v3282
        %v3363 = vadd.f32 %v2904, %v3287
        %v3364 = vadd.f32 %v2905, %v3290
        %v3365 = vadd.f32 %v2906, %v3295
        %v3366 = vadd.f32 %v2907, %v3298
        %v3367 = vadd.f32 %v2908, %v3303
        %v3368 = vadd.f32 %v2909, %v3306
        %v3369 = vadd.f32 %v2910, %v3311
        %v3370 = vadd.f32 %v2911, %v3314
        %v3371 = vadd.f32 %v2912, %v3319
        %v3372 = vadd.f32 %v2913, %v3322
        %v3373 = vadd.f32 %v2914, %v3327
        %v3374 = vadd.f32 %v2915, %v3330
        %v3375 = vadd.f32 %v2916, %v3335
        %v3376 = vadd.f32 %v2917, %v3338
        %v3377 = vld [vmem:[#allocation2 + $0x8] sm:$0xc]
        %s3378 = scalar_lea.vmem %s5, 80
        %v3379 = vld [vmem:[%s3378] sm:$0xf]
        %v3380 = vld [vmem:[%s3378 + $0x4] sm:$0xf]
        %v3381 = vld [vmem:[%s3378 + $0x8] sm:$0xf]
        %v3382 = vld [vmem:[%s3378 + $0xc] sm:$0xf]
        %v3384 = vunpack.c.l.b16 %v3377
        %v3385 = vpack.c.b16 %v2547, %v3384
        %vm3386 = vcmask 1045504
        %v3387 = vrot.slane %v3385, 2
        %v3388 = vrot.slane %v2584, 2
        %v3389 = vsel %vm3386, %v3387, %v3388
        %v3390 = vrot.slane %v2585, 2
        %v3391 = vsel %vm3386, %v3388, %v3390
        %v3392 = vrot.slane %v2586, 2
        %v3393 = vsel %vm3386, %v3390, %v3392
        %v3394 = vrot.slane %v2587, 2
        %v3395 = vsel %vm3386, %v3392, %v3394
        %v3396 = vrot.slane %v2588, 2
        %v3397 = vsel %vm3386, %v3394, %v3396
        %v3398 = vrot.slane %v2589, 2
        %v3399 = vsel %vm3386, %v3396, %v3398
        %v3400 = vrot.slane %v2590, 2
        %v3401 = vsel %vm3386, %v3398, %v3400
        %v3402 = vrot.slane %v2591, 2
        %v3403 = vsel %vm3386, %v3400, %v3402
        %v3404 = vrot.slane %v2592, 2
        %v3405 = vsel %vm3386, %v3402, %v3404
        %v3406 = vrot.slane %v2593, 2
        %v3407 = vsel %vm3386, %v3404, %v3406
        %v3408 = vrot.slane %v2594, 2
        %v3409 = vsel %vm3386, %v3406, %v3408
        %v3410 = vrot.slane %v2595, 2
        %v3411 = vsel %vm3386, %v3408, %v3410
        %v3412 = vrot.slane %v2596, 2
        %v3413 = vsel %vm3386, %v3410, %v3412
        %v3414 = vrot.slane %v2597, 2
        %v3415 = vsel %vm3386, %v3412, %v3414
        %v3416 = vrot.slane %v2598, 2
        %v3417 = vsel %vm3386, %v3414, %v3416
        %v3418 = vrot.slane %v2599, 2
        %v3419 = vsel %vm3386, %v3416, %v3418
        %v3420 = vrot.slane %v2600, 2
        %v3421 = vsel %vm3386, %v3418, %v3420
        %v3422 = vrot.slane %v2926, 2
        %v3423 = vsel %vm3386, %v3420, %v3422
        %v3428 = vunpack.c.l.b16 %v3379
        %v3429 = vunpack.c.l.b16 %v3380
        %v3430 = vunpack.c.l.b16 %v3381
        %v3431 = vunpack.c.l.b16 %v3382
        %v3432 = vpack.c.b16 %v3429, %v3428
        %v3433 = vpack.c.b16 %v3431, %v3430
        %v3437 = vsel %vm1684, %v3389, 0
        %v3440 = vsel %vm1684, %v3391, 0
        %v3443 = vsel %vm1684, %v3393, 0
        %v3446 = vsel %vm1684, %v3395, 0
        %v3449 = vsel %vm1684, %v3397, 0
        %v3452 = vsel %vm1684, %v3399, 0
        %v3455 = vsel %vm1684, %v3401, 0
        %v3458 = vsel %vm1684, %v3403, 0
        %v3461 = vsel %vm1684, %v3405, 0
        %v3464 = vsel %vm1684, %v3407, 0
        %v3467 = vsel %vm1684, %v3409, 0
        %v3470 = vsel %vm1684, %v3411, 0
        %v3473 = vsel %vm1684, %v3413, 0
        %v3476 = vsel %vm1684, %v3415, 0
        %v3479 = vsel %vm1684, %v3417, 0
        %v3482 = vsel %vm1684, %v3419, 0
        %v3485 = vsel %vm1684, %v3421, 0
        %v3488 = vsel %vm1684, %v3423, 0
        %3490 = vmatprep.subr.bf16.mxu0 0
        %3491 = vmatpush1.bf16.msra.mxu0 0
        %3492 = vmatprep.subr.bf16.mxu0 0
        %3493 = vmatpush1.bf16.msra.mxu0 0
        %3494 = vmatprep.subr.bf16.mxu0 0
        %3495 = vmatpush1.bf16.msra.mxu0 0
        %3496 = vmatprep.subr.bf16.mxu0 0
        %3497 = vmatpush1.bf16.msra.mxu0 0
        %3498 = vmatprep.subr.bf16.mxu0 0
        %3499 = vmatpush1.bf16.msra.mxu0 0
        %3500 = vmatprep.subr.bf16.mxu0 0
        %3501 = vmatpush1.bf16.msra.mxu0 0
        %3502 = vmatprep.subr.bf16.mxu0 0
        %3503 = vmatpush1.bf16.msra.mxu0 %v3433
        %3504 = vmatprep.subr.bf16.mxu0 0
        %3505 = vmatpush1.bf16.msra.mxu0 %v3432
        %3506 = vmatprep.subr.bf16.mxu0 0
        %3507 = vmatpush2.bf16.msra.mxu0 0
        %3508 = vmatprep.subr.bf16.mxu0 0
        %3509 = vmatpush2.bf16.msra.mxu0 0
        %3510 = vmatprep.subr.bf16.mxu0 0
        %3511 = vmatpush2.bf16.msra.mxu0 0
        %3512 = vmatprep.subr.bf16.mxu0 0
        %3513 = vmatpush2.bf16.msra.mxu0 0
        %3514 = vmatprep.subr.bf16.mxu0 0
        %3515 = vmatpush2.bf16.msra.mxu0 0
        %3516 = vmatprep.subr.bf16.mxu0 0
        %3517 = vmatpush2.bf16.msra.mxu0 0
        %3518 = vmatprep.subr.bf16.mxu0 0
        %3519 = vmatpush2.bf16.msra.mxu0 0
        %3520 = vmatprep.subr.bf16.mxu0 0
        %3521 = vmatpush2.bf16.msra.mxu0 0
        %3522 = vmatprep.mubr.bf16.mxu0 0
        %3523 = vmatmul.mubr.bf16.gmra.mxu0 %v3437
        %v3524 = vpop.f32.mrf.mxu0
        %v3525 = vadd.f32 0.0, %v3524
        %v3526 = vpop.f32.mrf.mxu0
        %v3527 = vpop.f32.mrf.mxu0
        %v3528 = vadd.f32 0.0, %v3527
        %v3529 = vpop.f32.mrf.mxu0
        %3530 = vmatprep.mubr.bf16.mxu0 0
        %3531 = vmatmul.mubr.bf16.gmra.mxu0 %v3440
        %v3532 = vpop.f32.mrf.mxu0
        %v3533 = vadd.f32 0.0, %v3532
        %v3534 = vpop.f32.mrf.mxu0
        %v3535 = vpop.f32.mrf.mxu0
        %v3536 = vadd.f32 0.0, %v3535
        %v3537 = vpop.f32.mrf.mxu0
        %3538 = vmatprep.mubr.bf16.mxu0 0
        %3539 = vmatmul.mubr.bf16.gmra.mxu0 %v3443
        %v3540 = vpop.f32.mrf.mxu0
        %v3541 = vadd.f32 0.0, %v3540
        %v3542 = vpop.f32.mrf.mxu0
        %v3543 = vpop.f32.mrf.mxu0
        %v3544 = vadd.f32 0.0, %v3543
        %v3545 = vpop.f32.mrf.mxu0
        %3546 = vmatprep.mubr.bf16.mxu0 0
        %3547 = vmatmul.mubr.bf16.gmra.mxu0 %v3446
        %v3548 = vpop.f32.mrf.mxu0
        %v3549 = vadd.f32 0.0, %v3548
        %v3550 = vpop.f32.mrf.mxu0
        %v3551 = vpop.f32.mrf.mxu0
        %v3552 = vadd.f32 0.0, %v3551
        %v3553 = vpop.f32.mrf.mxu0
        %3554 = vmatprep.mubr.bf16.mxu0 0
        %3555 = vmatmul.mubr.bf16.gmra.mxu0 %v3449
        %v3556 = vpop.f32.mrf.mxu0
        %v3557 = vadd.f32 0.0, %v3556
        %v3558 = vpop.f32.mrf.mxu0
        %v3559 = vpop.f32.mrf.mxu0
        %v3560 = vadd.f32 0.0, %v3559
        %v3561 = vpop.f32.mrf.mxu0
        %3562 = vmatprep.mubr.bf16.mxu0 0
        %3563 = vmatmul.mubr.bf16.gmra.mxu0 %v3452
        %v3564 = vpop.f32.mrf.mxu0
        %v3565 = vadd.f32 0.0, %v3564
        %v3566 = vpop.f32.mrf.mxu0
        %v3567 = vpop.f32.mrf.mxu0
        %v3568 = vadd.f32 0.0, %v3567
        %v3569 = vpop.f32.mrf.mxu0
        %3570 = vmatprep.mubr.bf16.mxu0 0
        %3571 = vmatmul.mubr.bf16.gmra.mxu0 %v3455
        %v3572 = vpop.f32.mrf.mxu0
        %v3573 = vadd.f32 0.0, %v3572
        %v3574 = vpop.f32.mrf.mxu0
        %v3575 = vpop.f32.mrf.mxu0
        %v3576 = vadd.f32 0.0, %v3575
        %v3577 = vpop.f32.mrf.mxu0
        %3578 = vmatprep.mubr.bf16.mxu0 0
        %3579 = vmatmul.mubr.bf16.gmra.mxu0 %v3458
        %v3580 = vpop.f32.mrf.mxu0
        %v3581 = vadd.f32 0.0, %v3580
        %v3582 = vpop.f32.mrf.mxu0
        %v3583 = vpop.f32.mrf.mxu0
        %v3584 = vadd.f32 0.0, %v3583
        %v3585 = vpop.f32.mrf.mxu0
        %3586 = vmatprep.mubr.bf16.mxu0 0
        %3587 = vmatmul.mubr.bf16.gmra.mxu0 %v3461
        %v3588 = vpop.f32.mrf.mxu0
        %v3589 = vadd.f32 0.0, %v3588
        %v3590 = vpop.f32.mrf.mxu0
        %v3591 = vpop.f32.mrf.mxu0
        %v3592 = vadd.f32 0.0, %v3591
        %v3593 = vpop.f32.mrf.mxu0
        %3594 = vmatprep.mubr.bf16.mxu0 0
        %3595 = vmatmul.mubr.bf16.gmra.mxu0 %v3464
        %v3596 = vpop.f32.mrf.mxu0
        %v3597 = vadd.f32 0.0, %v3596
        %v3598 = vpop.f32.mrf.mxu0
        %v3599 = vpop.f32.mrf.mxu0
        %v3600 = vadd.f32 0.0, %v3599
        %v3601 = vpop.f32.mrf.mxu0
        %3602 = vmatprep.mubr.bf16.mxu0 0
        %3603 = vmatmul.mubr.bf16.gmra.mxu0 %v3467
        %v3604 = vpop.f32.mrf.mxu0
        %v3605 = vadd.f32 0.0, %v3604
        %v3606 = vpop.f32.mrf.mxu0
        %v3607 = vpop.f32.mrf.mxu0
        %v3608 = vadd.f32 0.0, %v3607
        %v3609 = vpop.f32.mrf.mxu0
        %3610 = vmatprep.mubr.bf16.mxu0 0
        %3611 = vmatmul.mubr.bf16.gmra.mxu0 %v3470
        %v3612 = vpop.f32.mrf.mxu0
        %v3613 = vadd.f32 0.0, %v3612
        %v3614 = vpop.f32.mrf.mxu0
        %v3615 = vpop.f32.mrf.mxu0
        %v3616 = vadd.f32 0.0, %v3615
        %v3617 = vpop.f32.mrf.mxu0
        %3618 = vmatprep.mubr.bf16.mxu0 0
        %3619 = vmatmul.mubr.bf16.gmra.mxu0 %v3473
        %v3620 = vpop.f32.mrf.mxu0
        %v3621 = vadd.f32 0.0, %v3620
        %v3622 = vpop.f32.mrf.mxu0
        %v3623 = vpop.f32.mrf.mxu0
        %v3624 = vadd.f32 0.0, %v3623
        %v3625 = vpop.f32.mrf.mxu0
        %3626 = vmatprep.mubr.bf16.mxu0 0
        %3627 = vmatmul.mubr.bf16.gmra.mxu0 %v3476
        %v3628 = vpop.f32.mrf.mxu0
        %v3629 = vadd.f32 0.0, %v3628
        %v3630 = vpop.f32.mrf.mxu0
        %v3631 = vpop.f32.mrf.mxu0
        %v3632 = vadd.f32 0.0, %v3631
        %v3633 = vpop.f32.mrf.mxu0
        %3634 = vmatprep.mubr.bf16.mxu0 0
        %3635 = vmatmul.mubr.bf16.gmra.mxu0 %v3479
        %v3636 = vpop.f32.mrf.mxu0
        %v3637 = vadd.f32 0.0, %v3636
        %v3638 = vpop.f32.mrf.mxu0
        %v3639 = vpop.f32.mrf.mxu0
        %v3640 = vadd.f32 0.0, %v3639
        %v3641 = vpop.f32.mrf.mxu0
        %3642 = vmatprep.mubr.bf16.mxu0 0
        %3643 = vmatmul.mubr.bf16.gmra.mxu0 %v3482
        %v3644 = vpop.f32.mrf.mxu0
        %v3645 = vadd.f32 0.0, %v3644
        %v3646 = vpop.f32.mrf.mxu0
        %v3647 = vpop.f32.mrf.mxu0
        %v3648 = vadd.f32 0.0, %v3647
        %v3649 = vpop.f32.mrf.mxu0
        %3650 = vmatprep.mubr.bf16.mxu0 0
        %3651 = vmatmul.mubr.bf16.gmra.mxu0 %v3485
        %v3652 = vpop.f32.mrf.mxu0
        %v3653 = vadd.f32 0.0, %v3652
        %v3654 = vpop.f32.mrf.mxu0
        %v3655 = vpop.f32.mrf.mxu0
        %v3656 = vadd.f32 0.0, %v3655
        %v3657 = vpop.f32.mrf.mxu0
        %3658 = vmatprep.mubr.bf16.mxu0 0
        %3659 = vmatmul.mubr.bf16.gmra.mxu0 %v3488
        %v3660 = vpop.f32.mrf.mxu0
        %v3661 = vadd.f32 0.0, %v3660
        %v3662 = vpop.f32.mrf.mxu0
        %v3663 = vpop.f32.mrf.mxu0
        %v3664 = vadd.f32 0.0, %v3663
        %v3665 = vpop.f32.mrf.mxu0
        %3666 = vdwg.mxu0
        %v3667 = vadd.f32 %v3341, %v3525
        %v3668 = vadd.f32 %v3342, %v3528
        %v3669 = vadd.f32 %v3343, %v3533
        %v3670 = vadd.f32 %v3344, %v3536
        %v3671 = vadd.f32 %v3345, %v3541
        %v3672 = vadd.f32 %v3346, %v3544
        %v3673 = vadd.f32 %v3347, %v3549
        %v3674 = vadd.f32 %v3348, %v3552
        %v3675 = vadd.f32 %v3349, %v3557
        %v3676 = vadd.f32 %v3350, %v3560
        %v3677 = vadd.f32 %v3351, %v3565
        %v3678 = vadd.f32 %v3352, %v3568
        %v3679 = vadd.f32 %v3353, %v3573
        %v3680 = vadd.f32 %v3354, %v3576
        %v3681 = vadd.f32 %v3355, %v3581
        %v3682 = vadd.f32 %v3356, %v3584
        %v3683 = vadd.f32 %v3357, %v3589
        %v3684 = vadd.f32 %v3358, %v3592
        %v3685 = vadd.f32 %v3359, %v3597
        %v3686 = vadd.f32 %v3360, %v3600
        %v3687 = vadd.f32 %v3361, %v3605
        %v3688 = vadd.f32 %v3362, %v3608
        %v3689 = vadd.f32 %v3363, %v3613
        %v3690 = vadd.f32 %v3364, %v3616
        %v3691 = vadd.f32 %v3365, %v3621
        %v3692 = vadd.f32 %v3366, %v3624
        %v3693 = vadd.f32 %v3367, %v3629
        %v3694 = vadd.f32 %v3368, %v3632
        %v3695 = vadd.f32 %v3369, %v3637
        %v3696 = vadd.f32 %v3370, %v3640
        %v3697 = vadd.f32 %v3371, %v3645
        %v3698 = vadd.f32 %v3372, %v3648
        %v3699 = vadd.f32 %v3373, %v3653
        %v3700 = vadd.f32 %v3374, %v3656
        %v3701 = vadd.f32 %v3375, %v3661
        %v3702 = vadd.f32 %v3376, %v3664
        %v3703 = vld [vmem:[#allocation2 + $0x10] sm:$0xc]
        %v3704 = vld [vmem:[#allocation2 + $0x14] sm:$0xf]
        %v3705 = vld [vmem:[#allocation2 + $0x18] sm:$0xf]
        %v3706 = vld [vmem:[#allocation2 + $0x1c] sm:$0xf]
        %v3707 = vld [vmem:[#allocation2 + $0x20] sm:$0xf]
        %v3708 = vld [vmem:[#allocation2 + $0x24] sm:$0xf]
        %v3709 = vld [vmem:[#allocation2 + $0x28] sm:$0xf]
        %v3710 = vld [vmem:[#allocation2 + $0x2c] sm:$0xf]
        %v3711 = vld [vmem:[#allocation2 + $0x30] sm:$0xf]
        %v3712 = vld [vmem:[#allocation2 + $0x34] sm:$0xf]
        %v3713 = vld [vmem:[#allocation2 + $0x38] sm:$0xf]
        %v3714 = vld [vmem:[#allocation2 + $0x3c] sm:$0xf]
        %v3715 = vld [vmem:[#allocation2 + $0x40] sm:$0xf]
        %v3716 = vld [vmem:[#allocation2 + $0x44] sm:$0xf]
        %v3717 = vld [vmem:[#allocation2 + $0x48] sm:$0xf]
        %v3718 = vld [vmem:[#allocation2 + $0x4c] sm:$0xf]
        %v3719 = vld [vmem:[#allocation2 + $0x50] sm:$0xf]
        %v3720 = vld [vmem:[#allocation2 + $0x54] sm:$0xf]
        %v3721 = vld [vmem:[#allocation2 + $0x58] sm:$0xf]
        %v3722 = vld [vmem:[#allocation2 + $0x5c] sm:$0xf]
        %v3723 = vld [vmem:[#allocation2 + $0x60] sm:$0xf]
        %v3724 = vld [vmem:[#allocation2 + $0x64] sm:$0xf]
        %v3725 = vld [vmem:[#allocation2 + $0x68] sm:$0xf]
        %v3726 = vld [vmem:[#allocation2 + $0x6c] sm:$0xf]
        %v3727 = vld [vmem:[#allocation2 + $0x70] sm:$0xf]
        %v3728 = vld [vmem:[#allocation2 + $0x74] sm:$0xf]
        %v3729 = vld [vmem:[#allocation2 + $0x78] sm:$0xf]
        %v3730 = vld [vmem:[#allocation2 + $0x7c] sm:$0xf]
        %v3731 = vld [vmem:[#allocation2 + $0x80] sm:$0xf]
        %v3732 = vld [vmem:[#allocation2 + $0x84] sm:$0xf]
        %v3733 = vld [vmem:[#allocation2 + $0x88] sm:$0xf]
        %v3734 = vld [vmem:[#allocation2 + $0x8c] sm:$0xf]
        %v3735 = vld [vmem:[#allocation2 + $0x90] sm:$0xf]
        %v3736 = vld [vmem:[#allocation2 + $0x94] sm:$0xf]
        %v3737 = vld [vmem:[#allocation2 + $0x98] sm:$0xf]
        %v3738 = vld [vmem:[#allocation2 + $0x9c] sm:$0xf]
        %v3739 = vld [vmem:[#allocation2 + $0xa0] sm:$0x3]
        %s3740 = scalar_lea.vmem %s5, 96
        %v3741 = vld [vmem:[%s3740] sm:$0xf]
        %v3742 = vld [vmem:[%s3740 + $0x4] sm:$0xf]
        %v3743 = vld [vmem:[%s3740 + $0x8] sm:$0xf]
        %v3744 = vld [vmem:[%s3740 + $0xc] sm:$0xf]
        %v3782 = vunpack.c.l.b16 %v3703
        %v3783 = vunpack.c.l.b16 %v3704
        %v3784 = vunpack.c.l.b16 %v3705
        %v3785 = vunpack.c.l.b16 %v3706
        %v3786 = vunpack.c.l.b16 %v3707
        %v3787 = vunpack.c.l.b16 %v3708
        %v3788 = vunpack.c.l.b16 %v3709
        %v3789 = vunpack.c.l.b16 %v3710
        %v3790 = vunpack.c.l.b16 %v3711
        %v3791 = vunpack.c.l.b16 %v3712
        %v3792 = vunpack.c.l.b16 %v3713
        %v3793 = vunpack.c.l.b16 %v3714
        %v3794 = vunpack.c.l.b16 %v3715
        %v3795 = vunpack.c.l.b16 %v3716
        %v3796 = vunpack.c.l.b16 %v3717
        %v3797 = vunpack.c.l.b16 %v3718
        %v3798 = vunpack.c.l.b16 %v3719
        %v3799 = vunpack.c.l.b16 %v3720
        %v3800 = vunpack.c.l.b16 %v3721
        %v3801 = vunpack.c.l.b16 %v3722
        %v3802 = vunpack.c.l.b16 %v3723
        %v3803 = vunpack.c.l.b16 %v3724
        %v3804 = vunpack.c.l.b16 %v3725
        %v3805 = vunpack.c.l.b16 %v3726
        %v3806 = vunpack.c.l.b16 %v3727
        %v3807 = vunpack.c.l.b16 %v3728
        %v3808 = vunpack.c.l.b16 %v3729
        %v3809 = vunpack.c.l.b16 %v3730
        %v3810 = vunpack.c.l.b16 %v3731
        %v3811 = vunpack.c.l.b16 %v3732
        %v3812 = vunpack.c.l.b16 %v3733
        %v3813 = vunpack.c.l.b16 %v3734
        %v3814 = vunpack.c.l.b16 %v3735
        %v3815 = vunpack.c.l.b16 %v3736
        %v3816 = vunpack.c.l.b16 %v3737
        %v3817 = vunpack.c.l.b16 %v3738
        %v3818 = vunpack.c.l.b16 %v3739
        %v3819 = vpack.c.b16 %v3783, %v3782
        %v3820 = vpack.c.b16 %v3785, %v3784
        %v3821 = vpack.c.b16 %v3787, %v3786
        %v3822 = vpack.c.b16 %v3789, %v3788
        %v3823 = vpack.c.b16 %v3791, %v3790
        %v3824 = vpack.c.b16 %v3793, %v3792
        %v3825 = vpack.c.b16 %v3795, %v3794
        %v3826 = vpack.c.b16 %v3797, %v3796
        %v3827 = vpack.c.b16 %v3799, %v3798
        %v3828 = vpack.c.b16 %v3801, %v3800
        %v3829 = vpack.c.b16 %v3803, %v3802
        %v3830 = vpack.c.b16 %v3805, %v3804
        %v3831 = vpack.c.b16 %v3807, %v3806
        %v3832 = vpack.c.b16 %v3809, %v3808
        %v3833 = vpack.c.b16 %v3811, %v3810
        %v3834 = vpack.c.b16 %v3813, %v3812
        %v3835 = vpack.c.b16 %v3815, %v3814
        %v3836 = vpack.c.b16 %v3817, %v3816
        %v3837 = vpack.c.b16 %v3818, %v3818
        %v3838 = vrot.slane %v3819, 2
        %v3839 = vrot.slane %v3820, 2
        %v3840 = vsel %vm3386, %v3838, %v3839
        %v3841 = vrot.slane %v3821, 2
        %v3842 = vsel %vm3386, %v3839, %v3841
        %v3843 = vrot.slane %v3822, 2
        %v3844 = vsel %vm3386, %v3841, %v3843
        %v3845 = vrot.slane %v3823, 2
        %v3846 = vsel %vm3386, %v3843, %v3845
        %v3847 = vrot.slane %v3824, 2
        %v3848 = vsel %vm3386, %v3845, %v3847
        %v3849 = vrot.slane %v3825, 2
        %v3850 = vsel %vm3386, %v3847, %v3849
        %v3851 = vrot.slane %v3826, 2
        %v3852 = vsel %vm3386, %v3849, %v3851
        %v3853 = vrot.slane %v3827, 2
        %v3854 = vsel %vm3386, %v3851, %v3853
        %v3855 = vrot.slane %v3828, 2
        %v3856 = vsel %vm3386, %v3853, %v3855
        %v3857 = vrot.slane %v3829, 2
        %v3858 = vsel %vm3386, %v3855, %v3857
        %v3859 = vrot.slane %v3830, 2
        %v3860 = vsel %vm3386, %v3857, %v3859
        %v3861 = vrot.slane %v3831, 2
        %v3862 = vsel %vm3386, %v3859, %v3861
        %v3863 = vrot.slane %v3832, 2
        %v3864 = vsel %vm3386, %v3861, %v3863
        %v3865 = vrot.slane %v3833, 2
        %v3866 = vsel %vm3386, %v3863, %v3865
        %v3867 = vrot.slane %v3834, 2
        %v3868 = vsel %vm3386, %v3865, %v3867
        %v3869 = vrot.slane %v3835, 2
        %v3870 = vsel %vm3386, %v3867, %v3869
        %v3871 = vrot.slane %v3836, 2
        %v3872 = vsel %vm3386, %v3869, %v3871
        %v3873 = vrot.slane %v3837, 2
        %v3874 = vsel %vm3386, %v3871, %v3873
        %v3879 = vunpack.c.l.b16 %v3741
        %v3880 = vunpack.c.l.b16 %v3742
        %v3881 = vunpack.c.l.b16 %v3743
        %v3882 = vunpack.c.l.b16 %v3744
        %v3883 = vpack.c.b16 %v3880, %v3879
        %v3884 = vpack.c.b16 %v3882, %v3881
        %v3888 = vsel %vm1684, %v3840, 0
        %v3891 = vsel %vm1684, %v3842, 0
        %v3894 = vsel %vm1684, %v3844, 0
        %v3897 = vsel %vm1684, %v3846, 0
        %v3900 = vsel %vm1684, %v3848, 0
        %v3903 = vsel %vm1684, %v3850, 0
        %v3906 = vsel %vm1684, %v3852, 0
        %v3909 = vsel %vm1684, %v3854, 0
        %v3912 = vsel %vm1684, %v3856, 0
        %v3915 = vsel %vm1684, %v3858, 0
        %v3918 = vsel %vm1684, %v3860, 0
        %v3921 = vsel %vm1684, %v3862, 0
        %v3924 = vsel %vm1684, %v3864, 0
        %v3927 = vsel %vm1684, %v3866, 0
        %v3930 = vsel %vm1684, %v3868, 0
        %v3933 = vsel %vm1684, %v3870, 0
        %v3936 = vsel %vm1684, %v3872, 0
        %v3939 = vsel %vm1684, %v3874, 0
        %3941 = vmatprep.subr.bf16.mxu0 0
        %3942 = vmatpush1.bf16.msra.mxu0 0
        %3943 = vmatprep.subr.bf16.mxu0 0
        %3944 = vmatpush1.bf16.msra.mxu0 0
        %3945 = vmatprep.subr.bf16.mxu0 0
        %3946 = vmatpush1.bf16.msra.mxu0 0
        %3947 = vmatprep.subr.bf16.mxu0 0
        %3948 = vmatpush1.bf16.msra.mxu0 0
        %3949 = vmatprep.subr.bf16.mxu0 0
        %3950 = vmatpush1.bf16.msra.mxu0 0
        %3951 = vmatprep.subr.bf16.mxu0 0
        %3952 = vmatpush1.bf16.msra.mxu0 0
        %3953 = vmatprep.subr.bf16.mxu0 0
        %3954 = vmatpush1.bf16.msra.mxu0 %v3884
        %3955 = vmatprep.subr.bf16.mxu0 0
        %3956 = vmatpush1.bf16.msra.mxu0 %v3883
        %3957 = vmatprep.subr.bf16.mxu0 0
        %3958 = vmatpush2.bf16.msra.mxu0 0
        %3959 = vmatprep.subr.bf16.mxu0 0
        %3960 = vmatpush2.bf16.msra.mxu0 0
        %3961 = vmatprep.subr.bf16.mxu0 0
        %3962 = vmatpush2.bf16.msra.mxu0 0
        %3963 = vmatprep.subr.bf16.mxu0 0
        %3964 = vmatpush2.bf16.msra.mxu0 0
        %3965 = vmatprep.subr.bf16.mxu0 0
        %3966 = vmatpush2.bf16.msra.mxu0 0
        %3967 = vmatprep.subr.bf16.mxu0 0
        %3968 = vmatpush2.bf16.msra.mxu0 0
        %3969 = vmatprep.subr.bf16.mxu0 0
        %3970 = vmatpush2.bf16.msra.mxu0 0
        %3971 = vmatprep.subr.bf16.mxu0 0
        %3972 = vmatpush2.bf16.msra.mxu0 0
        %3973 = vmatprep.mubr.bf16.mxu0 0
        %3974 = vmatmul.mubr.bf16.gmra.mxu0 %v3888
        %v3975 = vpop.f32.mrf.mxu0
        %v3976 = vadd.f32 0.0, %v3975
        %v3977 = vpop.f32.mrf.mxu0
        %v3978 = vpop.f32.mrf.mxu0
        %v3979 = vadd.f32 0.0, %v3978
        %v3980 = vpop.f32.mrf.mxu0
        %3981 = vmatprep.mubr.bf16.mxu0 0
        %3982 = vmatmul.mubr.bf16.gmra.mxu0 %v3891
        %v3983 = vpop.f32.mrf.mxu0
        %v3984 = vadd.f32 0.0, %v3983
        %v3985 = vpop.f32.mrf.mxu0
        %v3986 = vpop.f32.mrf.mxu0
        %v3987 = vadd.f32 0.0, %v3986
        %v3988 = vpop.f32.mrf.mxu0
        %3989 = vmatprep.mubr.bf16.mxu0 0
        %3990 = vmatmul.mubr.bf16.gmra.mxu0 %v3894
        %v3991 = vpop.f32.mrf.mxu0
        %v3992 = vadd.f32 0.0, %v3991
        %v3993 = vpop.f32.mrf.mxu0
        %v3994 = vpop.f32.mrf.mxu0
        %v3995 = vadd.f32 0.0, %v3994
        %v3996 = vpop.f32.mrf.mxu0
        %3997 = vmatprep.mubr.bf16.mxu0 0
        %3998 = vmatmul.mubr.bf16.gmra.mxu0 %v3897
        %v3999 = vpop.f32.mrf.mxu0
        %v4000 = vadd.f32 0.0, %v3999
        %v4001 = vpop.f32.mrf.mxu0
        %v4002 = vpop.f32.mrf.mxu0
        %v4003 = vadd.f32 0.0, %v4002
        %v4004 = vpop.f32.mrf.mxu0
        %4005 = vmatprep.mubr.bf16.mxu0 0
        %4006 = vmatmul.mubr.bf16.gmra.mxu0 %v3900
        %v4007 = vpop.f32.mrf.mxu0
        %v4008 = vadd.f32 0.0, %v4007
        %v4009 = vpop.f32.mrf.mxu0
        %v4010 = vpop.f32.mrf.mxu0
        %v4011 = vadd.f32 0.0, %v4010
        %v4012 = vpop.f32.mrf.mxu0
        %4013 = vmatprep.mubr.bf16.mxu0 0
        %4014 = vmatmul.mubr.bf16.gmra.mxu0 %v3903
        %v4015 = vpop.f32.mrf.mxu0
        %v4016 = vadd.f32 0.0, %v4015
        %v4017 = vpop.f32.mrf.mxu0
        %v4018 = vpop.f32.mrf.mxu0
        %v4019 = vadd.f32 0.0, %v4018
        %v4020 = vpop.f32.mrf.mxu0
        %4021 = vmatprep.mubr.bf16.mxu0 0
        %4022 = vmatmul.mubr.bf16.gmra.mxu0 %v3906
        %v4023 = vpop.f32.mrf.mxu0
        %v4024 = vadd.f32 0.0, %v4023
        %v4025 = vpop.f32.mrf.mxu0
        %v4026 = vpop.f32.mrf.mxu0
        %v4027 = vadd.f32 0.0, %v4026
        %v4028 = vpop.f32.mrf.mxu0
        %4029 = vmatprep.mubr.bf16.mxu0 0
        %4030 = vmatmul.mubr.bf16.gmra.mxu0 %v3909
        %v4031 = vpop.f32.mrf.mxu0
        %v4032 = vadd.f32 0.0, %v4031
        %v4033 = vpop.f32.mrf.mxu0
        %v4034 = vpop.f32.mrf.mxu0
        %v4035 = vadd.f32 0.0, %v4034
        %v4036 = vpop.f32.mrf.mxu0
        %4037 = vmatprep.mubr.bf16.mxu0 0
        %4038 = vmatmul.mubr.bf16.gmra.mxu0 %v3912
        %v4039 = vpop.f32.mrf.mxu0
        %v4040 = vadd.f32 0.0, %v4039
        %v4041 = vpop.f32.mrf.mxu0
        %v4042 = vpop.f32.mrf.mxu0
        %v4043 = vadd.f32 0.0, %v4042
        %v4044 = vpop.f32.mrf.mxu0
        %4045 = vmatprep.mubr.bf16.mxu0 0
        %4046 = vmatmul.mubr.bf16.gmra.mxu0 %v3915
        %v4047 = vpop.f32.mrf.mxu0
        %v4048 = vadd.f32 0.0, %v4047
        %v4049 = vpop.f32.mrf.mxu0
        %v4050 = vpop.f32.mrf.mxu0
        %v4051 = vadd.f32 0.0, %v4050
        %v4052 = vpop.f32.mrf.mxu0
        %4053 = vmatprep.mubr.bf16.mxu0 0
        %4054 = vmatmul.mubr.bf16.gmra.mxu0 %v3918
        %v4055 = vpop.f32.mrf.mxu0
        %v4056 = vadd.f32 0.0, %v4055
        %v4057 = vpop.f32.mrf.mxu0
        %v4058 = vpop.f32.mrf.mxu0
        %v4059 = vadd.f32 0.0, %v4058
        %v4060 = vpop.f32.mrf.mxu0
        %4061 = vmatprep.mubr.bf16.mxu0 0
        %4062 = vmatmul.mubr.bf16.gmra.mxu0 %v3921
        %v4063 = vpop.f32.mrf.mxu0
        %v4064 = vadd.f32 0.0, %v4063
        %v4065 = vpop.f32.mrf.mxu0
        %v4066 = vpop.f32.mrf.mxu0
        %v4067 = vadd.f32 0.0, %v4066
        %v4068 = vpop.f32.mrf.mxu0
        %4069 = vmatprep.mubr.bf16.mxu0 0
        %4070 = vmatmul.mubr.bf16.gmra.mxu0 %v3924
        %v4071 = vpop.f32.mrf.mxu0
        %v4072 = vadd.f32 0.0, %v4071
        %v4073 = vpop.f32.mrf.mxu0
        %v4074 = vpop.f32.mrf.mxu0
        %v4075 = vadd.f32 0.0, %v4074
        %v4076 = vpop.f32.mrf.mxu0
        %4077 = vmatprep.mubr.bf16.mxu0 0
        %4078 = vmatmul.mubr.bf16.gmra.mxu0 %v3927
        %v4079 = vpop.f32.mrf.mxu0
        %v4080 = vadd.f32 0.0, %v4079
        %v4081 = vpop.f32.mrf.mxu0
        %v4082 = vpop.f32.mrf.mxu0
        %v4083 = vadd.f32 0.0, %v4082
        %v4084 = vpop.f32.mrf.mxu0
        %4085 = vmatprep.mubr.bf16.mxu0 0
        %4086 = vmatmul.mubr.bf16.gmra.mxu0 %v3930
        %v4087 = vpop.f32.mrf.mxu0
        %v4088 = vadd.f32 0.0, %v4087
        %v4089 = vpop.f32.mrf.mxu0
        %v4090 = vpop.f32.mrf.mxu0
        %v4091 = vadd.f32 0.0, %v4090
        %v4092 = vpop.f32.mrf.mxu0
        %4093 = vmatprep.mubr.bf16.mxu0 0
        %4094 = vmatmul.mubr.bf16.gmra.mxu0 %v3933
        %v4095 = vpop.f32.mrf.mxu0
        %v4096 = vadd.f32 0.0, %v4095
        %v4097 = vpop.f32.mrf.mxu0
        %v4098 = vpop.f32.mrf.mxu0
        %v4099 = vadd.f32 0.0, %v4098
        %v4100 = vpop.f32.mrf.mxu0
        %4101 = vmatprep.mubr.bf16.mxu0 0
        %4102 = vmatmul.mubr.bf16.gmra.mxu0 %v3936
        %v4103 = vpop.f32.mrf.mxu0
        %v4104 = vadd.f32 0.0, %v4103
        %v4105 = vpop.f32.mrf.mxu0
        %v4106 = vpop.f32.mrf.mxu0
        %v4107 = vadd.f32 0.0, %v4106
        %v4108 = vpop.f32.mrf.mxu0
        %4109 = vmatprep.mubr.bf16.mxu0 0
        %4110 = vmatmul.mubr.bf16.gmra.mxu0 %v3939
        %v4111 = vpop.f32.mrf.mxu0
        %v4112 = vadd.f32 0.0, %v4111
        %v4113 = vpop.f32.mrf.mxu0
        %v4114 = vpop.f32.mrf.mxu0
        %v4115 = vadd.f32 0.0, %v4114
        %v4116 = vpop.f32.mrf.mxu0
        %4117 = vdwg.mxu0
        %v4118 = vadd.f32 %v3667, %v3976
        %v4119 = vadd.f32 %v3668, %v3979
        %v4120 = vadd.f32 %v3669, %v3984
        %v4121 = vadd.f32 %v3670, %v3987
        %v4122 = vadd.f32 %v3671, %v3992
        %v4123 = vadd.f32 %v3672, %v3995
        %v4124 = vadd.f32 %v3673, %v4000
        %v4125 = vadd.f32 %v3674, %v4003
        %v4126 = vadd.f32 %v3675, %v4008
        %v4127 = vadd.f32 %v3676, %v4011
        %v4128 = vadd.f32 %v3677, %v4016
        %v4129 = vadd.f32 %v3678, %v4019
        %v4130 = vadd.f32 %v3679, %v4024
        %v4131 = vadd.f32 %v3680, %v4027
        %v4132 = vadd.f32 %v3681, %v4032
        %v4133 = vadd.f32 %v3682, %v4035
        %v4134 = vadd.f32 %v3683, %v4040
        %v4135 = vadd.f32 %v3684, %v4043
        %v4136 = vadd.f32 %v3685, %v4048
        %v4137 = vadd.f32 %v3686, %v4051
        %v4138 = vadd.f32 %v3687, %v4056
        %v4139 = vadd.f32 %v3688, %v4059
        %v4140 = vadd.f32 %v3689, %v4064
        %v4141 = vadd.f32 %v3690, %v4067
        %v4142 = vadd.f32 %v3691, %v4072
        %v4143 = vadd.f32 %v3692, %v4075
        %v4144 = vadd.f32 %v3693, %v4080
        %v4145 = vadd.f32 %v3694, %v4083
        %v4146 = vadd.f32 %v3695, %v4088
        %v4147 = vadd.f32 %v3696, %v4091
        %v4148 = vadd.f32 %v3697, %v4096
        %v4149 = vadd.f32 %v3698, %v4099
        %v4150 = vadd.f32 %v3699, %v4104
        %v4151 = vadd.f32 %v3700, %v4107
        %v4152 = vadd.f32 %v3701, %v4112
        %v4153 = vadd.f32 %v3702, %v4115
        %v4154 = vld [vmem:[#allocation2 + $0xa0] sm:$0x7]
        %s4155 = scalar_lea.vmem %s5, 112
        %v4156 = vld [vmem:[%s4155] sm:$0xf]
        %v4157 = vld [vmem:[%s4155 + $0x4] sm:$0xf]
        %v4158 = vld [vmem:[%s4155 + $0x8] sm:$0xf]
        %v4159 = vld [vmem:[%s4155 + $0xc] sm:$0xf]
        %v4161 = vunpack.c.l.b16 %v4154
        %v4162 = vpack.c.b16 %v4161, %v4161
        %vm4163 = vsmask.f32 5376
        %v4165 = vshrl.u32 %v3819, 16
        %v4167 = vrot.slane %v4165, 2
        %v4168 = vshll.u32 %v3819, 16
        %v4170 = vrot.slane %v4168, 3
        %v4171 = vor.u32 %v4167, %v4170
        %v4173 = vshrl.u32 %v3820, 16
        %v4175 = vrot.slane %v4173, 2
        %v4176 = vshll.u32 %v3820, 16
        %v4178 = vrot.slane %v4176, 3
        %v4179 = vor.u32 %v4175, %v4178
        %v4180 = vsel %vm4163, %v4171, %v4179
        %v4182 = vshrl.u32 %v3821, 16
        %v4184 = vrot.slane %v4182, 2
        %v4185 = vshll.u32 %v3821, 16
        %v4187 = vrot.slane %v4185, 3
        %v4188 = vor.u32 %v4184, %v4187
        %v4189 = vsel %vm4163, %v4179, %v4188
        %v4191 = vshrl.u32 %v3822, 16
        %v4193 = vrot.slane %v4191, 2
        %v4194 = vshll.u32 %v3822, 16
        %v4196 = vrot.slane %v4194, 3
        %v4197 = vor.u32 %v4193, %v4196
        %v4198 = vsel %vm4163, %v4188, %v4197
        %v4200 = vshrl.u32 %v3823, 16
        %v4202 = vrot.slane %v4200, 2
        %v4203 = vshll.u32 %v3823, 16
        %v4205 = vrot.slane %v4203, 3
        %v4206 = vor.u32 %v4202, %v4205
        %v4207 = vsel %vm4163, %v4197, %v4206
        %v4209 = vshrl.u32 %v3824, 16
        %v4211 = vrot.slane %v4209, 2
        %v4212 = vshll.u32 %v3824, 16
        %v4214 = vrot.slane %v4212, 3
        %v4215 = vor.u32 %v4211, %v4214
        %v4216 = vsel %vm4163, %v4206, %v4215
        %v4218 = vshrl.u32 %v3825, 16
        %v4220 = vrot.slane %v4218, 2
        %v4221 = vshll.u32 %v3825, 16
        %v4223 = vrot.slane %v4221, 3
        %v4224 = vor.u32 %v4220, %v4223
        %v4225 = vsel %vm4163, %v4215, %v4224
        %v4227 = vshrl.u32 %v3826, 16
        %v4229 = vrot.slane %v4227, 2
        %v4230 = vshll.u32 %v3826, 16
        %v4232 = vrot.slane %v4230, 3
        %v4233 = vor.u32 %v4229, %v4232
        %v4234 = vsel %vm4163, %v4224, %v4233
        %v4236 = vshrl.u32 %v3827, 16
        %v4238 = vrot.slane %v4236, 2
        %v4239 = vshll.u32 %v3827, 16
        %v4241 = vrot.slane %v4239, 3
        %v4242 = vor.u32 %v4238, %v4241
        %v4243 = vsel %vm4163, %v4233, %v4242
        %v4245 = vshrl.u32 %v3828, 16
        %v4247 = vrot.slane %v4245, 2
        %v4248 = vshll.u32 %v3828, 16
        %v4250 = vrot.slane %v4248, 3
        %v4251 = vor.u32 %v4247, %v4250
        %v4252 = vsel %vm4163, %v4242, %v4251
        %v4254 = vshrl.u32 %v3829, 16
        %v4256 = vrot.slane %v4254, 2
        %v4257 = vshll.u32 %v3829, 16
        %v4259 = vrot.slane %v4257, 3
        %v4260 = vor.u32 %v4256, %v4259
        %v4261 = vsel %vm4163, %v4251, %v4260
        %v4263 = vshrl.u32 %v3830, 16
        %v4265 = vrot.slane %v4263, 2
        %v4266 = vshll.u32 %v3830, 16
        %v4268 = vrot.slane %v4266, 3
        %v4269 = vor.u32 %v4265, %v4268
        %v4270 = vsel %vm4163, %v4260, %v4269
        %v4272 = vshrl.u32 %v3831, 16
        %v4274 = vrot.slane %v4272, 2
        %v4275 = vshll.u32 %v3831, 16
        %v4277 = vrot.slane %v4275, 3
        %v4278 = vor.u32 %v4274, %v4277
        %v4279 = vsel %vm4163, %v4269, %v4278
        %v4281 = vshrl.u32 %v3832, 16
        %v4283 = vrot.slane %v4281, 2
        %v4284 = vshll.u32 %v3832, 16
        %v4286 = vrot.slane %v4284, 3
        %v4287 = vor.u32 %v4283, %v4286
        %v4288 = vsel %vm4163, %v4278, %v4287
        %v4290 = vshrl.u32 %v3833, 16
        %v4292 = vrot.slane %v4290, 2
        %v4293 = vshll.u32 %v3833, 16
        %v4295 = vrot.slane %v4293, 3
        %v4296 = vor.u32 %v4292, %v4295
        %v4297 = vsel %vm4163, %v4287, %v4296
        %v4299 = vshrl.u32 %v3834, 16
        %v4301 = vrot.slane %v4299, 2
        %v4302 = vshll.u32 %v3834, 16
        %v4304 = vrot.slane %v4302, 3
        %v4305 = vor.u32 %v4301, %v4304
        %v4306 = vsel %vm4163, %v4296, %v4305
        %v4308 = vshrl.u32 %v3835, 16
        %v4310 = vrot.slane %v4308, 2
        %v4311 = vshll.u32 %v3835, 16
        %v4313 = vrot.slane %v4311, 3
        %v4314 = vor.u32 %v4310, %v4313
        %v4315 = vsel %vm4163, %v4305, %v4314
        %v4317 = vshrl.u32 %v3836, 16
        %v4319 = vrot.slane %v4317, 2
        %v4320 = vshll.u32 %v3836, 16
        %v4322 = vrot.slane %v4320, 3
        %v4323 = vor.u32 %v4319, %v4322
        %v4324 = vsel %vm4163, %v4314, %v4323
        %v4326 = vshrl.u32 %v4162, 16
        %v4328 = vrot.slane %v4326, 2
        %v4329 = vshll.u32 %v4162, 16
        %v4331 = vrot.slane %v4329, 3
        %v4332 = vor.u32 %v4328, %v4331
        %v4333 = vsel %vm4163, %v4323, %v4332
        %v4338 = vunpack.c.l.b16 %v4156
        %v4339 = vunpack.c.l.b16 %v4157
        %v4340 = vunpack.c.l.b16 %v4158
        %v4341 = vunpack.c.l.b16 %v4159
        %v4342 = vpack.c.b16 %v4339, %v4338
        %v4343 = vpack.c.b16 %v4341, %v4340
        %v4347 = vsel %vm1684, %v4180, 0
        %v4350 = vsel %vm1684, %v4189, 0
        %v4353 = vsel %vm1684, %v4198, 0
        %v4356 = vsel %vm1684, %v4207, 0
        %v4359 = vsel %vm1684, %v4216, 0
        %v4362 = vsel %vm1684, %v4225, 0
        %v4365 = vsel %vm1684, %v4234, 0
        %v4368 = vsel %vm1684, %v4243, 0
        %v4371 = vsel %vm1684, %v4252, 0
        %v4374 = vsel %vm1684, %v4261, 0
        %v4377 = vsel %vm1684, %v4270, 0
        %v4380 = vsel %vm1684, %v4279, 0
        %v4383 = vsel %vm1684, %v4288, 0
        %v4386 = vsel %vm1684, %v4297, 0
        %v4389 = vsel %vm1684, %v4306, 0
        %v4392 = vsel %vm1684, %v4315, 0
        %v4395 = vsel %vm1684, %v4324, 0
        %v4398 = vsel %vm1684, %v4333, 0
        %4400 = vmatprep.subr.bf16.mxu0 0
        %4401 = vmatpush1.bf16.msra.mxu0 0
        %4402 = vmatprep.subr.bf16.mxu0 0
        %4403 = vmatpush1.bf16.msra.mxu0 0
        %4404 = vmatprep.subr.bf16.mxu0 0
        %4405 = vmatpush1.bf16.msra.mxu0 0
        %4406 = vmatprep.subr.bf16.mxu0 0
        %4407 = vmatpush1.bf16.msra.mxu0 0
        %4408 = vmatprep.subr.bf16.mxu0 0
        %4409 = vmatpush1.bf16.msra.mxu0 0
        %4410 = vmatprep.subr.bf16.mxu0 0
        %4411 = vmatpush1.bf16.msra.mxu0 0
        %4412 = vmatprep.subr.bf16.mxu0 0
        %4413 = vmatpush1.bf16.msra.mxu0 %v4343
        %4414 = vmatprep.subr.bf16.mxu0 0
        %4415 = vmatpush1.bf16.msra.mxu0 %v4342
        %4416 = vmatprep.subr.bf16.mxu0 0
        %4417 = vmatpush2.bf16.msra.mxu0 0
        %4418 = vmatprep.subr.bf16.mxu0 0
        %4419 = vmatpush2.bf16.msra.mxu0 0
        %4420 = vmatprep.subr.bf16.mxu0 0
        %4421 = vmatpush2.bf16.msra.mxu0 0
        %4422 = vmatprep.subr.bf16.mxu0 0
        %4423 = vmatpush2.bf16.msra.mxu0 0
        %4424 = vmatprep.subr.bf16.mxu0 0
        %4425 = vmatpush2.bf16.msra.mxu0 0
        %4426 = vmatprep.subr.bf16.mxu0 0
        %4427 = vmatpush2.bf16.msra.mxu0 0
        %4428 = vmatprep.subr.bf16.mxu0 0
        %4429 = vmatpush2.bf16.msra.mxu0 0
        %4430 = vmatprep.subr.bf16.mxu0 0
        %4431 = vmatpush2.bf16.msra.mxu0 0
        %4432 = vmatprep.mubr.bf16.mxu0 0
        %4433 = vmatmul.mubr.bf16.gmra.mxu0 %v4347
        %v4434 = vpop.f32.mrf.mxu0
        %v4435 = vadd.f32 0.0, %v4434
        %v4436 = vpop.f32.mrf.mxu0
        %v4437 = vpop.f32.mrf.mxu0
        %v4438 = vadd.f32 0.0, %v4437
        %v4439 = vpop.f32.mrf.mxu0
        %4440 = vmatprep.mubr.bf16.mxu0 0
        %4441 = vmatmul.mubr.bf16.gmra.mxu0 %v4350
        %v4442 = vpop.f32.mrf.mxu0
        %v4443 = vadd.f32 0.0, %v4442
        %v4444 = vpop.f32.mrf.mxu0
        %v4445 = vpop.f32.mrf.mxu0
        %v4446 = vadd.f32 0.0, %v4445
        %v4447 = vpop.f32.mrf.mxu0
        %4448 = vmatprep.mubr.bf16.mxu0 0
        %4449 = vmatmul.mubr.bf16.gmra.mxu0 %v4353
        %v4450 = vpop.f32.mrf.mxu0
        %v4451 = vadd.f32 0.0, %v4450
        %v4452 = vpop.f32.mrf.mxu0
        %v4453 = vpop.f32.mrf.mxu0
        %v4454 = vadd.f32 0.0, %v4453
        %v4455 = vpop.f32.mrf.mxu0
        %4456 = vmatprep.mubr.bf16.mxu0 0
        %4457 = vmatmul.mubr.bf16.gmra.mxu0 %v4356
        %v4458 = vpop.f32.mrf.mxu0
        %v4459 = vadd.f32 0.0, %v4458
        %v4460 = vpop.f32.mrf.mxu0
        %v4461 = vpop.f32.mrf.mxu0
        %v4462 = vadd.f32 0.0, %v4461
        %v4463 = vpop.f32.mrf.mxu0
        %4464 = vmatprep.mubr.bf16.mxu0 0
        %4465 = vmatmul.mubr.bf16.gmra.mxu0 %v4359
        %v4466 = vpop.f32.mrf.mxu0
        %v4467 = vadd.f32 0.0, %v4466
        %v4468 = vpop.f32.mrf.mxu0
        %v4469 = vpop.f32.mrf.mxu0
        %v4470 = vadd.f32 0.0, %v4469
        %v4471 = vpop.f32.mrf.mxu0
        %4472 = vmatprep.mubr.bf16.mxu0 0
        %4473 = vmatmul.mubr.bf16.gmra.mxu0 %v4362
        %v4474 = vpop.f32.mrf.mxu0
        %v4475 = vadd.f32 0.0, %v4474
        %v4476 = vpop.f32.mrf.mxu0
        %v4477 = vpop.f32.mrf.mxu0
        %v4478 = vadd.f32 0.0, %v4477
        %v4479 = vpop.f32.mrf.mxu0
        %4480 = vmatprep.mubr.bf16.mxu0 0
        %4481 = vmatmul.mubr.bf16.gmra.mxu0 %v4365
        %v4482 = vpop.f32.mrf.mxu0
        %v4483 = vadd.f32 0.0, %v4482
        %v4484 = vpop.f32.mrf.mxu0
        %v4485 = vpop.f32.mrf.mxu0
        %v4486 = vadd.f32 0.0, %v4485
        %v4487 = vpop.f32.mrf.mxu0
        %4488 = vmatprep.mubr.bf16.mxu0 0
        %4489 = vmatmul.mubr.bf16.gmra.mxu0 %v4368
        %v4490 = vpop.f32.mrf.mxu0
        %v4491 = vadd.f32 0.0, %v4490
        %v4492 = vpop.f32.mrf.mxu0
        %v4493 = vpop.f32.mrf.mxu0
        %v4494 = vadd.f32 0.0, %v4493
        %v4495 = vpop.f32.mrf.mxu0
        %4496 = vmatprep.mubr.bf16.mxu0 0
        %4497 = vmatmul.mubr.bf16.gmra.mxu0 %v4371
        %v4498 = vpop.f32.mrf.mxu0
        %v4499 = vadd.f32 0.0, %v4498
        %v4500 = vpop.f32.mrf.mxu0
        %v4501 = vpop.f32.mrf.mxu0
        %v4502 = vadd.f32 0.0, %v4501
        %v4503 = vpop.f32.mrf.mxu0
        %4504 = vmatprep.mubr.bf16.mxu0 0
        %4505 = vmatmul.mubr.bf16.gmra.mxu0 %v4374
        %v4506 = vpop.f32.mrf.mxu0
        %v4507 = vadd.f32 0.0, %v4506
        %v4508 = vpop.f32.mrf.mxu0
        %v4509 = vpop.f32.mrf.mxu0
        %v4510 = vadd.f32 0.0, %v4509
        %v4511 = vpop.f32.mrf.mxu0
        %4512 = vmatprep.mubr.bf16.mxu0 0
        %4513 = vmatmul.mubr.bf16.gmra.mxu0 %v4377
        %v4514 = vpop.f32.mrf.mxu0
        %v4515 = vadd.f32 0.0, %v4514
        %v4516 = vpop.f32.mrf.mxu0
        %v4517 = vpop.f32.mrf.mxu0
        %v4518 = vadd.f32 0.0, %v4517
        %v4519 = vpop.f32.mrf.mxu0
        %4520 = vmatprep.mubr.bf16.mxu0 0
        %4521 = vmatmul.mubr.bf16.gmra.mxu0 %v4380
        %v4522 = vpop.f32.mrf.mxu0
        %v4523 = vadd.f32 0.0, %v4522
        %v4524 = vpop.f32.mrf.mxu0
        %v4525 = vpop.f32.mrf.mxu0
        %v4526 = vadd.f32 0.0, %v4525
        %v4527 = vpop.f32.mrf.mxu0
        %4528 = vmatprep.mubr.bf16.mxu0 0
        %4529 = vmatmul.mubr.bf16.gmra.mxu0 %v4383
        %v4530 = vpop.f32.mrf.mxu0
        %v4531 = vadd.f32 0.0, %v4530
        %v4532 = vpop.f32.mrf.mxu0
        %v4533 = vpop.f32.mrf.mxu0
        %v4534 = vadd.f32 0.0, %v4533
        %v4535 = vpop.f32.mrf.mxu0
        %4536 = vmatprep.mubr.bf16.mxu0 0
        %4537 = vmatmul.mubr.bf16.gmra.mxu0 %v4386
        %v4538 = vpop.f32.mrf.mxu0
        %v4539 = vadd.f32 0.0, %v4538
        %v4540 = vpop.f32.mrf.mxu0
        %v4541 = vpop.f32.mrf.mxu0
        %v4542 = vadd.f32 0.0, %v4541
        %v4543 = vpop.f32.mrf.mxu0
        %4544 = vmatprep.mubr.bf16.mxu0 0
        %4545 = vmatmul.mubr.bf16.gmra.mxu0 %v4389
        %v4546 = vpop.f32.mrf.mxu0
        %v4547 = vadd.f32 0.0, %v4546
        %v4548 = vpop.f32.mrf.mxu0
        %v4549 = vpop.f32.mrf.mxu0
        %v4550 = vadd.f32 0.0, %v4549
        %v4551 = vpop.f32.mrf.mxu0
        %4552 = vmatprep.mubr.bf16.mxu0 0
        %4553 = vmatmul.mubr.bf16.gmra.mxu0 %v4392
        %v4554 = vpop.f32.mrf.mxu0
        %v4555 = vadd.f32 0.0, %v4554
        %v4556 = vpop.f32.mrf.mxu0
        %v4557 = vpop.f32.mrf.mxu0
        %v4558 = vadd.f32 0.0, %v4557
        %v4559 = vpop.f32.mrf.mxu0
        %4560 = vmatprep.mubr.bf16.mxu0 0
        %4561 = vmatmul.mubr.bf16.gmra.mxu0 %v4395
        %v4562 = vpop.f32.mrf.mxu0
        %v4563 = vadd.f32 0.0, %v4562
        %v4564 = vpop.f32.mrf.mxu0
        %v4565 = vpop.f32.mrf.mxu0
        %v4566 = vadd.f32 0.0, %v4565
        %v4567 = vpop.f32.mrf.mxu0
        %4568 = vmatprep.mubr.bf16.mxu0 0
        %4569 = vmatmul.mubr.bf16.gmra.mxu0 %v4398
        %v4570 = vpop.f32.mrf.mxu0
        %v4571 = vadd.f32 0.0, %v4570
        %v4572 = vpop.f32.mrf.mxu0
        %v4573 = vpop.f32.mrf.mxu0
        %v4574 = vadd.f32 0.0, %v4573
        %v4575 = vpop.f32.mrf.mxu0
        %4576 = vdwg.mxu0
        %v4577 = vadd.f32 %v4118, %v4435
        %v4578 = vadd.f32 %v4119, %v4438
        %v4579 = vadd.f32 %v4120, %v4443
        %v4580 = vadd.f32 %v4121, %v4446
        %v4581 = vadd.f32 %v4122, %v4451
        %v4582 = vadd.f32 %v4123, %v4454
        %v4583 = vadd.f32 %v4124, %v4459
        %v4584 = vadd.f32 %v4125, %v4462
        %v4585 = vadd.f32 %v4126, %v4467
        %v4586 = vadd.f32 %v4127, %v4470
        %v4587 = vadd.f32 %v4128, %v4475
        %v4588 = vadd.f32 %v4129, %v4478
        %v4589 = vadd.f32 %v4130, %v4483
        %v4590 = vadd.f32 %v4131, %v4486
        %v4591 = vadd.f32 %v4132, %v4491
        %v4592 = vadd.f32 %v4133, %v4494
        %v4593 = vadd.f32 %v4134, %v4499
        %v4594 = vadd.f32 %v4135, %v4502
        %v4595 = vadd.f32 %v4136, %v4507
        %v4596 = vadd.f32 %v4137, %v4510
        %v4597 = vadd.f32 %v4138, %v4515
        %v4598 = vadd.f32 %v4139, %v4518
        %v4599 = vadd.f32 %v4140, %v4523
        %v4600 = vadd.f32 %v4141, %v4526
        %v4601 = vadd.f32 %v4142, %v4531
        %v4602 = vadd.f32 %v4143, %v4534
        %v4603 = vadd.f32 %v4144, %v4539
        %v4604 = vadd.f32 %v4145, %v4542
        %v4605 = vadd.f32 %v4146, %v4547
        %v4606 = vadd.f32 %v4147, %v4550
        %v4607 = vadd.f32 %v4148, %v4555
        %v4608 = vadd.f32 %v4149, %v4558
        %v4609 = vadd.f32 %v4150, %v4563
        %v4610 = vadd.f32 %v4151, %v4566
        %v4611 = vadd.f32 %v4152, %v4571
        %v4612 = vadd.f32 %v4153, %v4574
        %v4613 = vld [vmem:[#allocation2 + $0x10] sm:$0x8]
        %s4614 = scalar_lea.vmem %s5, 128
        %v4615 = vld [vmem:[%s4614] sm:$0xf]
        %v4616 = vld [vmem:[%s4614 + $0x4] sm:$0xf]
        %v4617 = vld [vmem:[%s4614 + $0x8] sm:$0xf]
        %v4618 = vld [vmem:[%s4614 + $0xc] sm:$0xf]
        %v4620 = vunpack.c.l.b16 %v4613
        %v4621 = vpack.c.b16 %v3783, %v4620
        %vm4622 = vcmask 1044480
        %v4623 = vrot.slane %v4621, 3
        %v4624 = vrot.slane %v3820, 3
        %v4625 = vsel %vm4622, %v4623, %v4624
        %v4626 = vrot.slane %v3821, 3
        %v4627 = vsel %vm4622, %v4624, %v4626
        %v4628 = vrot.slane %v3822, 3
        %v4629 = vsel %vm4622, %v4626, %v4628
        %v4630 = vrot.slane %v3823, 3
        %v4631 = vsel %vm4622, %v4628, %v4630
        %v4632 = vrot.slane %v3824, 3
        %v4633 = vsel %vm4622, %v4630, %v4632
        %v4634 = vrot.slane %v3825, 3
        %v4635 = vsel %vm4622, %v4632, %v4634
        %v4636 = vrot.slane %v3826, 3
        %v4637 = vsel %vm4622, %v4634, %v4636
        %v4638 = vrot.slane %v3827, 3
        %v4639 = vsel %vm4622, %v4636, %v4638
        %v4640 = vrot.slane %v3828, 3
        %v4641 = vsel %vm4622, %v4638, %v4640
        %v4642 = vrot.slane %v3829, 3
        %v4643 = vsel %vm4622, %v4640, %v4642
        %v4644 = vrot.slane %v3830, 3
        %v4645 = vsel %vm4622, %v4642, %v4644
        %v4646 = vrot.slane %v3831, 3
        %v4647 = vsel %vm4622, %v4644, %v4646
        %v4648 = vrot.slane %v3832, 3
        %v4649 = vsel %vm4622, %v4646, %v4648
        %v4650 = vrot.slane %v3833, 3
        %v4651 = vsel %vm4622, %v4648, %v4650
        %v4652 = vrot.slane %v3834, 3
        %v4653 = vsel %vm4622, %v4650, %v4652
        %v4654 = vrot.slane %v3835, 3
        %v4655 = vsel %vm4622, %v4652, %v4654
        %v4656 = vrot.slane %v3836, 3
        %v4657 = vsel %vm4622, %v4654, %v4656
        %v4658 = vrot.slane %v4162, 3
        %v4659 = vsel %vm4622, %v4656, %v4658
        %v4664 = vunpack.c.l.b16 %v4615
        %v4665 = vunpack.c.l.b16 %v4616
        %v4666 = vunpack.c.l.b16 %v4617
        %v4667 = vunpack.c.l.b16 %v4618
        %v4668 = vpack.c.b16 %v4665, %v4664
        %v4669 = vpack.c.b16 %v4667, %v4666
        %v4673 = vsel %vm1684, %v4625, 0
        %v4676 = vsel %vm1684, %v4627, 0
        %v4679 = vsel %vm1684, %v4629, 0
        %v4682 = vsel %vm1684, %v4631, 0
        %v4685 = vsel %vm1684, %v4633, 0
        %v4688 = vsel %vm1684, %v4635, 0
        %v4691 = vsel %vm1684, %v4637, 0
        %v4694 = vsel %vm1684, %v4639, 0
        %v4697 = vsel %vm1684, %v4641, 0
        %v4700 = vsel %vm1684, %v4643, 0
        %v4703 = vsel %vm1684, %v4645, 0
        %v4706 = vsel %vm1684, %v4647, 0
        %v4709 = vsel %vm1684, %v4649, 0
        %v4712 = vsel %vm1684, %v4651, 0
        %v4715 = vsel %vm1684, %v4653, 0
        %v4718 = vsel %vm1684, %v4655, 0
        %v4721 = vsel %vm1684, %v4657, 0
        %v4724 = vsel %vm1684, %v4659, 0
        %4726 = vmatprep.subr.bf16.mxu0 0
        %4727 = vmatpush1.bf16.msra.mxu0 0
        %4728 = vmatprep.subr.bf16.mxu0 0
        %4729 = vmatpush1.bf16.msra.mxu0 0
        %4730 = vmatprep.subr.bf16.mxu0 0
        %4731 = vmatpush1.bf16.msra.mxu0 0
        %4732 = vmatprep.subr.bf16.mxu0 0
        %4733 = vmatpush1.bf16.msra.mxu0 0
        %4734 = vmatprep.subr.bf16.mxu0 0
        %4735 = vmatpush1.bf16.msra.mxu0 0
        %4736 = vmatprep.subr.bf16.mxu0 0
        %4737 = vmatpush1.bf16.msra.mxu0 0
        %4738 = vmatprep.subr.bf16.mxu0 0
        %4739 = vmatpush1.bf16.msra.mxu0 %v4669
        %4740 = vmatprep.subr.bf16.mxu0 0
        %4741 = vmatpush1.bf16.msra.mxu0 %v4668
        %4742 = vmatprep.subr.bf16.mxu0 0
        %4743 = vmatpush2.bf16.msra.mxu0 0
        %4744 = vmatprep.subr.bf16.mxu0 0
        %4745 = vmatpush2.bf16.msra.mxu0 0
        %4746 = vmatprep.subr.bf16.mxu0 0
        %4747 = vmatpush2.bf16.msra.mxu0 0
        %4748 = vmatprep.subr.bf16.mxu0 0
        %4749 = vmatpush2.bf16.msra.mxu0 0
        %4750 = vmatprep.subr.bf16.mxu0 0
        %4751 = vmatpush2.bf16.msra.mxu0 0
        %4752 = vmatprep.subr.bf16.mxu0 0
        %4753 = vmatpush2.bf16.msra.mxu0 0
        %4754 = vmatprep.subr.bf16.mxu0 0
        %4755 = vmatpush2.bf16.msra.mxu0 0
        %4756 = vmatprep.subr.bf16.mxu0 0
        %4757 = vmatpush2.bf16.msra.mxu0 0
        %4758 = vmatprep.mubr.bf16.mxu0 0
        %4759 = vmatmul.mubr.bf16.gmra.mxu0 %v4673
        %v4760 = vpop.f32.mrf.mxu0
        %v4761 = vadd.f32 0.0, %v4760
        %v4762 = vpop.f32.mrf.mxu0
        %v4763 = vpop.f32.mrf.mxu0
        %v4764 = vadd.f32 0.0, %v4763
        %v4765 = vpop.f32.mrf.mxu0
        %4766 = vmatprep.mubr.bf16.mxu0 0
        %4767 = vmatmul.mubr.bf16.gmra.mxu0 %v4676
        %v4768 = vpop.f32.mrf.mxu0
        %v4769 = vadd.f32 0.0, %v4768
        %v4770 = vpop.f32.mrf.mxu0
        %v4771 = vpop.f32.mrf.mxu0
        %v4772 = vadd.f32 0.0, %v4771
        %v4773 = vpop.f32.mrf.mxu0
        %4774 = vmatprep.mubr.bf16.mxu0 0
        %4775 = vmatmul.mubr.bf16.gmra.mxu0 %v4679
        %v4776 = vpop.f32.mrf.mxu0
        %v4777 = vadd.f32 0.0, %v4776
        %v4778 = vpop.f32.mrf.mxu0
        %v4779 = vpop.f32.mrf.mxu0
        %v4780 = vadd.f32 0.0, %v4779
        %v4781 = vpop.f32.mrf.mxu0
        %4782 = vmatprep.mubr.bf16.mxu0 0
        %4783 = vmatmul.mubr.bf16.gmra.mxu0 %v4682
        %v4784 = vpop.f32.mrf.mxu0
        %v4785 = vadd.f32 0.0, %v4784
        %v4786 = vpop.f32.mrf.mxu0
        %v4787 = vpop.f32.mrf.mxu0
        %v4788 = vadd.f32 0.0, %v4787
        %v4789 = vpop.f32.mrf.mxu0
        %4790 = vmatprep.mubr.bf16.mxu0 0
        %4791 = vmatmul.mubr.bf16.gmra.mxu0 %v4685
        %v4792 = vpop.f32.mrf.mxu0
        %v4793 = vadd.f32 0.0, %v4792
        %v4794 = vpop.f32.mrf.mxu0
        %v4795 = vpop.f32.mrf.mxu0
        %v4796 = vadd.f32 0.0, %v4795
        %v4797 = vpop.f32.mrf.mxu0
        %4798 = vmatprep.mubr.bf16.mxu0 0
        %4799 = vmatmul.mubr.bf16.gmra.mxu0 %v4688
        %v4800 = vpop.f32.mrf.mxu0
        %v4801 = vadd.f32 0.0, %v4800
        %v4802 = vpop.f32.mrf.mxu0
        %v4803 = vpop.f32.mrf.mxu0
        %v4804 = vadd.f32 0.0, %v4803
        %v4805 = vpop.f32.mrf.mxu0
        %4806 = vmatprep.mubr.bf16.mxu0 0
        %4807 = vmatmul.mubr.bf16.gmra.mxu0 %v4691
        %v4808 = vpop.f32.mrf.mxu0
        %v4809 = vadd.f32 0.0, %v4808
        %v4810 = vpop.f32.mrf.mxu0
        %v4811 = vpop.f32.mrf.mxu0
        %v4812 = vadd.f32 0.0, %v4811
        %v4813 = vpop.f32.mrf.mxu0
        %4814 = vmatprep.mubr.bf16.mxu0 0
        %4815 = vmatmul.mubr.bf16.gmra.mxu0 %v4694
        %v4816 = vpop.f32.mrf.mxu0
        %v4817 = vadd.f32 0.0, %v4816
        %v4818 = vpop.f32.mrf.mxu0
        %v4819 = vpop.f32.mrf.mxu0
        %v4820 = vadd.f32 0.0, %v4819
        %v4821 = vpop.f32.mrf.mxu0
        %4822 = vmatprep.mubr.bf16.mxu0 0
        %4823 = vmatmul.mubr.bf16.gmra.mxu0 %v4697
        %v4824 = vpop.f32.mrf.mxu0
        %v4825 = vadd.f32 0.0, %v4824
        %v4826 = vpop.f32.mrf.mxu0
        %v4827 = vpop.f32.mrf.mxu0
        %v4828 = vadd.f32 0.0, %v4827
        %v4829 = vpop.f32.mrf.mxu0
        %4830 = vmatprep.mubr.bf16.mxu0 0
        %4831 = vmatmul.mubr.bf16.gmra.mxu0 %v4700
        %v4832 = vpop.f32.mrf.mxu0
        %v4833 = vadd.f32 0.0, %v4832
        %v4834 = vpop.f32.mrf.mxu0
        %v4835 = vpop.f32.mrf.mxu0
        %v4836 = vadd.f32 0.0, %v4835
        %v4837 = vpop.f32.mrf.mxu0
        %4838 = vmatprep.mubr.bf16.mxu0 0
        %4839 = vmatmul.mubr.bf16.gmra.mxu0 %v4703
        %v4840 = vpop.f32.mrf.mxu0
        %v4841 = vadd.f32 0.0, %v4840
        %v4842 = vpop.f32.mrf.mxu0
        %v4843 = vpop.f32.mrf.mxu0
        %v4844 = vadd.f32 0.0, %v4843
        %v4845 = vpop.f32.mrf.mxu0
        %4846 = vmatprep.mubr.bf16.mxu0 0
        %4847 = vmatmul.mubr.bf16.gmra.mxu0 %v4706
        %v4848 = vpop.f32.mrf.mxu0
        %v4849 = vadd.f32 0.0, %v4848
        %v4850 = vpop.f32.mrf.mxu0
        %v4851 = vpop.f32.mrf.mxu0
        %v4852 = vadd.f32 0.0, %v4851
        %v4853 = vpop.f32.mrf.mxu0
        %4854 = vmatprep.mubr.bf16.mxu0 0
        %4855 = vmatmul.mubr.bf16.gmra.mxu0 %v4709
        %v4856 = vpop.f32.mrf.mxu0
        %v4857 = vadd.f32 0.0, %v4856
        %v4858 = vpop.f32.mrf.mxu0
        %v4859 = vpop.f32.mrf.mxu0
        %v4860 = vadd.f32 0.0, %v4859
        %v4861 = vpop.f32.mrf.mxu0
        %4862 = vmatprep.mubr.bf16.mxu0 0
        %4863 = vmatmul.mubr.bf16.gmra.mxu0 %v4712
        %v4864 = vpop.f32.mrf.mxu0
        %v4865 = vadd.f32 0.0, %v4864
        %v4866 = vpop.f32.mrf.mxu0
        %v4867 = vpop.f32.mrf.mxu0
        %v4868 = vadd.f32 0.0, %v4867
        %v4869 = vpop.f32.mrf.mxu0
        %4870 = vmatprep.mubr.bf16.mxu0 0
        %4871 = vmatmul.mubr.bf16.gmra.mxu0 %v4715
        %v4872 = vpop.f32.mrf.mxu0
        %v4873 = vadd.f32 0.0, %v4872
        %v4874 = vpop.f32.mrf.mxu0
        %v4875 = vpop.f32.mrf.mxu0
        %v4876 = vadd.f32 0.0, %v4875
        %v4877 = vpop.f32.mrf.mxu0
        %4878 = vmatprep.mubr.bf16.mxu0 0
        %4879 = vmatmul.mubr.bf16.gmra.mxu0 %v4718
        %v4880 = vpop.f32.mrf.mxu0
        %v4881 = vadd.f32 0.0, %v4880
        %v4882 = vpop.f32.mrf.mxu0
        %v4883 = vpop.f32.mrf.mxu0
        %v4884 = vadd.f32 0.0, %v4883
        %v4885 = vpop.f32.mrf.mxu0
        %4886 = vmatprep.mubr.bf16.mxu0 0
        %4887 = vmatmul.mubr.bf16.gmra.mxu0 %v4721
        %v4888 = vpop.f32.mrf.mxu0
        %v4889 = vadd.f32 0.0, %v4888
        %v4890 = vpop.f32.mrf.mxu0
        %v4891 = vpop.f32.mrf.mxu0
        %v4892 = vadd.f32 0.0, %v4891
        %v4893 = vpop.f32.mrf.mxu0
        %4894 = vmatprep.mubr.bf16.mxu0 0
        %4895 = vmatmul.mubr.bf16.gmra.mxu0 %v4724
        %v4896 = vpop.f32.mrf.mxu0
        %v4897 = vadd.f32 0.0, %v4896
        %v4898 = vpop.f32.mrf.mxu0
        %v4899 = vpop.f32.mrf.mxu0
        %v4900 = vadd.f32 0.0, %v4899
        %v4901 = vpop.f32.mrf.mxu0
        %4902 = vdwg.mxu0
        %v4903 = vadd.f32 %v4577, %v4761
        %v4904 = vadd.f32 %v4578, %v4764
        %v4905 = vadd.f32 %v4579, %v4769
        %v4906 = vadd.f32 %v4580, %v4772
        %v4907 = vadd.f32 %v4581, %v4777
        %v4908 = vadd.f32 %v4582, %v4780
        %v4909 = vadd.f32 %v4583, %v4785
        %v4910 = vadd.f32 %v4584, %v4788
        %v4911 = vadd.f32 %v4585, %v4793
        %v4912 = vadd.f32 %v4586, %v4796
        %v4913 = vadd.f32 %v4587, %v4801
        %v4914 = vadd.f32 %v4588, %v4804
        %v4915 = vadd.f32 %v4589, %v4809
        %v4916 = vadd.f32 %v4590, %v4812
        %v4917 = vadd.f32 %v4591, %v4817
        %v4918 = vadd.f32 %v4592, %v4820
        %v4919 = vadd.f32 %v4593, %v4825
        %v4920 = vadd.f32 %v4594, %v4828
        %v4921 = vadd.f32 %v4595, %v4833
        %v4922 = vadd.f32 %v4596, %v4836
        %v4923 = vadd.f32 %v4597, %v4841
        %v4924 = vadd.f32 %v4598, %v4844
        %v4925 = vadd.f32 %v4599, %v4849
        %v4926 = vadd.f32 %v4600, %v4852
        %v4927 = vadd.f32 %v4601, %v4857
        %v4928 = vadd.f32 %v4602, %v4860
        %v4929 = vadd.f32 %v4603, %v4865
        %v4930 = vadd.f32 %v4604, %v4868
        %v4931 = vadd.f32 %v4605, %v4873
        %v4932 = vadd.f32 %v4606, %v4876
        %v4933 = vadd.f32 %v4607, %v4881
        %v4934 = vadd.f32 %v4608, %v4884
        %v4935 = vadd.f32 %v4609, %v4889
        %v4936 = vadd.f32 %v4610, %v4892
        %v4937 = vadd.f32 %v4611, %v4897
        %v4938 = vadd.f32 %v4612, %v4900
        %v4939 = vld [vmem:[%s6] sm:$0x1]
        %v4941 = vlaneseq
        %v4942 = vshrl.u32 %v4941, 7
        %v4943 = vsub.s32 0, %v4942
        %v4944 = vrot.slane %v4939, %v4943
        %v4946 = vadd.f32 %v4903, %v4944
        %v4947 = vadd.f32 %v4904, %v4944
        %v4948 = vadd.f32 %v4905, %v4944
        %v4949 = vadd.f32 %v4906, %v4944
        %v4950 = vadd.f32 %v4907, %v4944
        %v4951 = vadd.f32 %v4908, %v4944
        %v4952 = vadd.f32 %v4909, %v4944
        %v4953 = vadd.f32 %v4910, %v4944
        %v4954 = vadd.f32 %v4911, %v4944
        %v4955 = vadd.f32 %v4912, %v4944
        %v4956 = vadd.f32 %v4913, %v4944
        %v4957 = vadd.f32 %v4914, %v4944
        %v4958 = vadd.f32 %v4915, %v4944
        %v4959 = vadd.f32 %v4916, %v4944
        %v4960 = vadd.f32 %v4917, %v4944
        %v4961 = vadd.f32 %v4918, %v4944
        %v4962 = vadd.f32 %v4919, %v4944
        %v4963 = vadd.f32 %v4920, %v4944
        %v4964 = vadd.f32 %v4921, %v4944
        %v4965 = vadd.f32 %v4922, %v4944
        %v4966 = vadd.f32 %v4923, %v4944
        %v4967 = vadd.f32 %v4924, %v4944
        %v4968 = vadd.f32 %v4925, %v4944
        %v4969 = vadd.f32 %v4926, %v4944
        %v4970 = vadd.f32 %v4927, %v4944
        %v4971 = vadd.f32 %v4928, %v4944
        %v4972 = vadd.f32 %v4929, %v4944
        %v4973 = vadd.f32 %v4930, %v4944
        %v4974 = vadd.f32 %v4931, %v4944
        %v4975 = vadd.f32 %v4932, %v4944
        %v4976 = vadd.f32 %v4933, %v4944
        %v4977 = vadd.f32 %v4934, %v4944
        %v4978 = vadd.f32 %v4935, %v4944
        %v4979 = vadd.f32 %v4936, %v4944
        %v4980 = vadd.f32 %v4937, %v4944
        %v4981 = vadd.f32 %v4938, %v4944
        %v4982 = vmax.f32 %v4946, 0.0
        %v4983 = vmax.f32 %v4947, 0.0
        %v4984 = vmax.f32 %v4948, 0.0
        %v4985 = vmax.f32 %v4949, 0.0
        %v4986 = vmax.f32 %v4950, 0.0
        %v4987 = vmax.f32 %v4951, 0.0
        %v4988 = vmax.f32 %v4952, 0.0
        %v4989 = vmax.f32 %v4953, 0.0
        %v4990 = vmax.f32 %v4954, 0.0
        %v4991 = vmax.f32 %v4955, 0.0
        %v4992 = vmax.f32 %v4956, 0.0
        %v4993 = vmax.f32 %v4957, 0.0
        %v4994 = vmax.f32 %v4958, 0.0
        %v4995 = vmax.f32 %v4959, 0.0
        %v4996 = vmax.f32 %v4960, 0.0
        %v4997 = vmax.f32 %v4961, 0.0
        %v4998 = vmax.f32 %v4962, 0.0
        %v4999 = vmax.f32 %v4963, 0.0
        %v5000 = vmax.f32 %v4964, 0.0
        %v5001 = vmax.f32 %v4965, 0.0
        %v5002 = vmax.f32 %v4966, 0.0
        %v5003 = vmax.f32 %v4967, 0.0
        %v5004 = vmax.f32 %v4968, 0.0
        %v5005 = vmax.f32 %v4969, 0.0
        %v5006 = vmax.f32 %v4970, 0.0
        %v5007 = vmax.f32 %v4971, 0.0
        %v5008 = vmax.f32 %v4972, 0.0
        %v5009 = vmax.f32 %v4973, 0.0
        %v5010 = vmax.f32 %v4974, 0.0
        %v5011 = vmax.f32 %v4975, 0.0
        %v5012 = vmax.f32 %v4976, 0.0
        %v5013 = vmax.f32 %v4977, 0.0
        %v5014 = vmax.f32 %v4978, 0.0
        %v5015 = vmax.f32 %v4979, 0.0
        %v5016 = vmax.f32 %v4980, 0.0
        %v5017 = vmax.f32 %v4981, 0.0
        %v5018 = vpack.c.bf16 %v4983, %v4982
        %v5019 = vpack.c.bf16 %v4985, %v4984
        %v5020 = vpack.c.bf16 %v4987, %v4986
        %v5021 = vpack.c.bf16 %v4989, %v4988
        %v5022 = vpack.c.bf16 %v4991, %v4990
        %v5023 = vpack.c.bf16 %v4993, %v4992
        %v5024 = vpack.c.bf16 %v4995, %v4994
        %v5025 = vpack.c.bf16 %v4997, %v4996
        %v5026 = vpack.c.bf16 %v4999, %v4998
        %v5027 = vpack.c.bf16 %v5001, %v5000
        %v5028 = vpack.c.bf16 %v5003, %v5002
        %v5029 = vpack.c.bf16 %v5005, %v5004
        %v5030 = vpack.c.bf16 %v5007, %v5006
        %v5031 = vpack.c.bf16 %v5009, %v5008
        %v5032 = vpack.c.bf16 %v5011, %v5010
        %v5033 = vpack.c.bf16 %v5013, %v5012
        %v5034 = vpack.c.bf16 %v5015, %v5014
        %v5035 = vpack.c.bf16 %v5017, %v5016
        %v5036 = vld [vmem:[%s2] sm:$0xff]
        %v5037 = vld [vmem:[%s2 + $0x8] sm:$0xf]
        %v5038 = vld [vmem:[%s2 + $0xc] sm:$0xff]
        %v5039 = vld [vmem:[%s2 + $0x14] sm:$0xf]
        %v5040 = vld [vmem:[%s2 + $0x18] sm:$0xff]
        %v5041 = vld [vmem:[%s2 + $0x20] sm:$0xf]
        %v5042 = vld [vmem:[%s2 + $0x24] sm:$0xff]
        %v5043 = vld [vmem:[%s2 + $0x2c] sm:$0xf]
        %v5044 = vld [vmem:[%s2 + $0x30] sm:$0xff]
        %v5045 = vld [vmem:[%s2 + $0x38] sm:$0xf]
        %v5046 = vld [vmem:[%s2 + $0x3c] sm:$0xff]
        %v5047 = vld [vmem:[%s2 + $0x44] sm:$0xf]
        %v5048 = vld [vmem:[%s2 + $0x48] sm:$0xff]
        %v5049 = vld [vmem:[%s2 + $0x50] sm:$0xf]
        %v5050 = vld [vmem:[%s2 + $0x54] sm:$0xff]
        %v5051 = vld [vmem:[%s2 + $0x5c] sm:$0xf]
        %v5068 = vunpack.c.l.b16 %v5036
        %v5069 = vunpack.c.h.b16 %v5036
        %v5070 = vunpack.c.l.b16 %v5037
        %v5071 = vunpack.c.l.b16 %v5038
        %v5072 = vunpack.c.h.b16 %v5038
        %v5073 = vunpack.c.l.b16 %v5039
        %v5074 = vunpack.c.l.b16 %v5040
        %v5075 = vunpack.c.h.b16 %v5040
        %v5076 = vunpack.c.l.b16 %v5041
        %v5077 = vunpack.c.l.b16 %v5042
        %v5078 = vunpack.c.h.b16 %v5042
        %v5079 = vunpack.c.l.b16 %v5043
        %v5080 = vunpack.c.l.b16 %v5044
        %v5081 = vunpack.c.h.b16 %v5044
        %v5082 = vunpack.c.l.b16 %v5045
        %v5083 = vunpack.c.l.b16 %v5046
        %v5084 = vunpack.c.h.b16 %v5046
        %v5085 = vunpack.c.l.b16 %v5047
        %v5086 = vunpack.c.l.b16 %v5048
        %v5087 = vunpack.c.h.b16 %v5048
        %v5088 = vunpack.c.l.b16 %v5049
        %v5089 = vunpack.c.l.b16 %v5050
        %v5090 = vunpack.c.h.b16 %v5050
        %v5091 = vunpack.c.l.b16 %v5051
        %v5092 = vpack.c.b16 %v5071, %v5068
        %v5093 = vpack.c.b16 %v5072, %v5069
        %v5094 = vpack.c.b16 %v5073, %v5070
        %v5095 = vpack.c.b16 %v5077, %v5074
        %v5096 = vpack.c.b16 %v5078, %v5075
        %v5097 = vpack.c.b16 %v5079, %v5076
        %v5098 = vpack.c.b16 %v5083, %v5080
        %v5099 = vpack.c.b16 %v5084, %v5081
        %v5100 = vpack.c.b16 %v5085, %v5082
        %v5101 = vpack.c.b16 %v5089, %v5086
        %v5102 = vpack.c.b16 %v5090, %v5087
        %v5103 = vpack.c.b16 %v5091, %v5088
        %v5113 = vsel %vm1684, %v5094, 0
        %v5116 = vsel %vm1684, %v5097, 0
        %v5119 = vsel %vm1684, %v5100, 0
        %v5122 = vsel %vm1684, %v5103, 0
        %5124 = vmatprep.subr.bf16.mxu0 0
        %5125 = vmatpush1.bf16.msra.mxu0 %v5025
        %5126 = vmatprep.subr.bf16.mxu0 0
        %5127 = vmatpush1.bf16.msra.mxu0 %v5024
        %5128 = vmatprep.subr.bf16.mxu0 0
        %5129 = vmatpush1.bf16.msra.mxu0 %v5023
        %5130 = vmatprep.subr.bf16.mxu0 0
        %5131 = vmatpush1.bf16.msra.mxu0 %v5022
        %5132 = vmatprep.subr.bf16.mxu0 0
        %5133 = vmatpush1.bf16.msra.mxu0 %v5021
        %5134 = vmatprep.subr.bf16.mxu0 0
        %5135 = vmatpush1.bf16.msra.mxu0 %v5020
        %5136 = vmatprep.subr.bf16.mxu0 0
        %5137 = vmatpush1.bf16.msra.mxu0 %v5019
        %5138 = vmatprep.subr.bf16.mxu0 0
        %5139 = vmatpush1.bf16.msra.mxu0 %v5018
        %5140 = vmatprep.subr.bf16.mxu0 0
        %5141 = vmatpush2.bf16.msra.mxu0 %v5033
        %5142 = vmatprep.subr.bf16.mxu0 0
        %5143 = vmatpush2.bf16.msra.mxu0 %v5032
        %5144 = vmatprep.subr.bf16.mxu0 0
        %5145 = vmatpush2.bf16.msra.mxu0 %v5031
        %5146 = vmatprep.subr.bf16.mxu0 0
        %5147 = vmatpush2.bf16.msra.mxu0 %v5030
        %5148 = vmatprep.subr.bf16.mxu0 0
        %5149 = vmatpush2.bf16.msra.mxu0 %v5029
        %5150 = vmatprep.subr.bf16.mxu0 0
        %5151 = vmatpush2.bf16.msra.mxu0 %v5028
        %5152 = vmatprep.subr.bf16.mxu0 0
        %5153 = vmatpush2.bf16.msra.mxu0 %v5027
        %5154 = vmatprep.subr.bf16.mxu0 0
        %5155 = vmatpush2.bf16.msra.mxu0 %v5026
        %5156 = vmatprep.mubr.bf16.mxu0 %v5093
        %5157 = vmatmul.mubr.bf16.gmra.mxu0 %v5092
        %v5158 = vpop.f32.mrf.mxu0
        %v5159 = vadd.f32 0.0, %v5158
        %v5160 = vpop.f32.mrf.mxu0
        %v5161 = vpop.f32.mrf.mxu0
        %v5162 = vadd.f32 0.0, %v5161
        %v5163 = vpop.f32.mrf.mxu0
        %5164 = vmatprep.mubr.bf16.mxu0 %v5096
        %5165 = vmatmul.mubr.bf16.gmra.mxu0 %v5095
        %v5166 = vpop.f32.mrf.mxu0
        %v5167 = vadd.f32 0.0, %v5166
        %v5168 = vpop.f32.mrf.mxu0
        %v5169 = vpop.f32.mrf.mxu0
        %v5170 = vadd.f32 0.0, %v5169
        %v5171 = vpop.f32.mrf.mxu0
        %5172 = vmatprep.mubr.bf16.mxu0 %v5099
        %5173 = vmatmul.mubr.bf16.gmra.mxu0 %v5098
        %v5174 = vpop.f32.mrf.mxu0
        %v5175 = vadd.f32 0.0, %v5174
        %v5176 = vpop.f32.mrf.mxu0
        %v5177 = vpop.f32.mrf.mxu0
        %v5178 = vadd.f32 0.0, %v5177
        %v5179 = vpop.f32.mrf.mxu0
        %5180 = vmatprep.mubr.bf16.mxu0 %v5102
        %5181 = vmatmul.mubr.bf16.gmra.mxu0 %v5101
        %v5182 = vpop.f32.mrf.mxu0
        %v5183 = vadd.f32 0.0, %v5182
        %v5184 = vpop.f32.mrf.mxu0
        %v5185 = vpop.f32.mrf.mxu0
        %v5186 = vadd.f32 0.0, %v5185
        %v5187 = vpop.f32.mrf.mxu0
        %5188 = vdwg.mxu0
        %5189 = vmatprep.subr.bf16.mxu0 0
        %5190 = vmatpush1.bf16.msra.mxu0 0
        %5191 = vmatprep.subr.bf16.mxu0 0
        %5192 = vmatpush1.bf16.msra.mxu0 0
        %5193 = vmatprep.subr.bf16.mxu0 0
        %5194 = vmatpush1.bf16.msra.mxu0 0
        %5195 = vmatprep.subr.bf16.mxu0 0
        %5196 = vmatpush1.bf16.msra.mxu0 0
        %5197 = vmatprep.subr.bf16.mxu0 0
        %5198 = vmatpush1.bf16.msra.mxu0 0
        %5199 = vmatprep.subr.bf16.mxu0 0
        %5200 = vmatpush1.bf16.msra.mxu0 0
        %5201 = vmatprep.subr.bf16.mxu0 0
        %5202 = vmatpush1.bf16.msra.mxu0 %v5035
        %5203 = vmatprep.subr.bf16.mxu0 0
        %5204 = vmatpush1.bf16.msra.mxu0 %v5034
        %5205 = vmatprep.subr.bf16.mxu0 0
        %5206 = vmatpush2.bf16.msra.mxu0 0
        %5207 = vmatprep.subr.bf16.mxu0 0
        %5208 = vmatpush2.bf16.msra.mxu0 0
        %5209 = vmatprep.subr.bf16.mxu0 0
        %5210 = vmatpush2.bf16.msra.mxu0 0
        %5211 = vmatprep.subr.bf16.mxu0 0
        %5212 = vmatpush2.bf16.msra.mxu0 0
        %5213 = vmatprep.subr.bf16.mxu0 0
        %5214 = vmatpush2.bf16.msra.mxu0 0
        %5215 = vmatprep.subr.bf16.mxu0 0
        %5216 = vmatpush2.bf16.msra.mxu0 0
        %5217 = vmatprep.subr.bf16.mxu0 0
        %5218 = vmatpush2.bf16.msra.mxu0 0
        %5219 = vmatprep.subr.bf16.mxu0 0
        %5220 = vmatpush2.bf16.msra.mxu0 0
        %5221 = vmatprep.mubr.bf16.mxu0 0
        %5222 = vmatmul.mubr.bf16.gmra.mxu0 %v5113
        %v5223 = vpop.f32.mrf.mxu0
        %v5224 = vadd.f32 %v5159, %v5223
        %v5225 = vpop.f32.mrf.mxu0
        %v5226 = vpop.f32.mrf.mxu0
        %v5227 = vadd.f32 %v5162, %v5226
        %v5228 = vpop.f32.mrf.mxu0
        %5229 = vmatprep.mubr.bf16.mxu0 0
        %5230 = vmatmul.mubr.bf16.gmra.mxu0 %v5116
        %v5231 = vpop.f32.mrf.mxu0
        %v5232 = vadd.f32 %v5167, %v5231
        %v5233 = vpop.f32.mrf.mxu0
        %v5234 = vpop.f32.mrf.mxu0
        %v5235 = vadd.f32 %v5170, %v5234
        %v5236 = vpop.f32.mrf.mxu0
        %5237 = vmatprep.mubr.bf16.mxu0 0
        %5238 = vmatmul.mubr.bf16.gmra.mxu0 %v5119
        %v5239 = vpop.f32.mrf.mxu0
        %v5240 = vadd.f32 %v5175, %v5239
        %v5241 = vpop.f32.mrf.mxu0
        %v5242 = vpop.f32.mrf.mxu0
        %v5243 = vadd.f32 %v5178, %v5242
        %v5244 = vpop.f32.mrf.mxu0
        %5245 = vmatprep.mubr.bf16.mxu0 0
        %5246 = vmatmul.mubr.bf16.gmra.mxu0 %v5122
        %v5247 = vpop.f32.mrf.mxu0
        %v5248 = vadd.f32 %v5183, %v5247
        %v5249 = vpop.f32.mrf.mxu0
        %v5250 = vpop.f32.mrf.mxu0
        %v5251 = vadd.f32 %v5186, %v5250
        %v5252 = vpop.f32.mrf.mxu0
        %5253 = vdwg.mxu0
        %v5254 = vpack.c.bf16 %v5227, %v5224
        %v5255 = vpack.c.bf16 %v5235, %v5232
        %v5256 = vpack.c.bf16 %v5243, %v5240
        %v5257 = vpack.c.bf16 %v5251, %v5248
        %v5258 = vld [vmem:[%s384 + $0x8] sm:$0xe]
        %v5259 = vld [vmem:[%s384 + $0xc] sm:$0xf]
        %v5260 = vld [vmem:[%s384 + $0x10] sm:$0xf]
        %v5261 = vld [vmem:[%s384 + $0x14] sm:$0xf]
        %v5262 = vld [vmem:[%s384 + $0x18] sm:$0xf]
        %v5263 = vld [vmem:[%s384 + $0x1c] sm:$0xf]
        %v5264 = vld [vmem:[%s384 + $0x20] sm:$0xf]
        %v5265 = vld [vmem:[%s384 + $0x24] sm:$0xf]
        %v5266 = vld [vmem:[%s384 + $0x28] sm:$0xf]
        %v5267 = vld [vmem:[%s384 + $0x2c] sm:$0xf]
        %v5268 = vld [vmem:[%s384 + $0x30] sm:$0xf]
        %v5269 = vld [vmem:[%s384 + $0x34] sm:$0xf]
        %v5270 = vld [vmem:[%s384 + $0x38] sm:$0xf]
        %v5271 = vld [vmem:[%s384 + $0x3c] sm:$0xf]
        %v5272 = vld [vmem:[%s384 + $0x40] sm:$0xf]
        %v5273 = vld [vmem:[%s384 + $0x44] sm:$0xf]
        %v5274 = vld [vmem:[%s384 + $0x48] sm:$0xf]
        %v5275 = vld [vmem:[%s384 + $0x4c] sm:$0xf]
        %v5276 = vld [vmem:[%s384 + $0x50] sm:$0xf]
        %v5277 = vld [vmem:[%s384 + $0x54] sm:$0xf]
        %v5278 = vld [vmem:[%s384 + $0x58] sm:$0xf]
        %v5279 = vld [vmem:[%s384 + $0x5c] sm:$0xf]
        %v5280 = vld [vmem:[%s384 + $0x60] sm:$0xf]
        %v5281 = vld [vmem:[%s384 + $0x64] sm:$0xf]
        %v5282 = vld [vmem:[%s384 + $0x68] sm:$0xf]
        %v5283 = vld [vmem:[%s384 + $0x6c] sm:$0xf]
        %v5284 = vld [vmem:[%s384 + $0x70] sm:$0xf]
        %v5285 = vld [vmem:[%s384 + $0x74] sm:$0xf]
        %v5286 = vld [vmem:[%s384 + $0x78] sm:$0xf]
        %v5287 = vld [vmem:[%s384 + $0x7c] sm:$0xf]
        %v5288 = vld [vmem:[%s384 + $0x80] sm:$0xf]
        %v5289 = vld [vmem:[%s384 + $0x84] sm:$0xf]
        %v5290 = vld [vmem:[%s384 + $0x88] sm:$0xf]
        %v5291 = vld [vmem:[%s384 + $0x8c] sm:$0xf]
        %v5292 = vld [vmem:[%s384 + $0x90] sm:$0xf]
        %v5293 = vld [vmem:[%s384 + $0x94] sm:$0xf]
        %v5294 = vld [vmem:[%s384 + $0x98] sm:$0x3]
        %v5332 = vunpack.c.l.b16 %v5258
        %v5333 = vunpack.c.l.b16 %v5259
        %v5334 = vunpack.c.l.b16 %v5260
        %v5335 = vunpack.c.l.b16 %v5261
        %v5336 = vunpack.c.l.b16 %v5262
        %v5337 = vunpack.c.l.b16 %v5263
        %v5338 = vunpack.c.l.b16 %v5264
        %v5339 = vunpack.c.l.b16 %v5265
        %v5340 = vunpack.c.l.b16 %v5266
        %v5341 = vunpack.c.l.b16 %v5267
        %v5342 = vunpack.c.l.b16 %v5268
        %v5343 = vunpack.c.l.b16 %v5269
        %v5344 = vunpack.c.l.b16 %v5270
        %v5345 = vunpack.c.l.b16 %v5271
        %v5346 = vunpack.c.l.b16 %v5272
        %v5347 = vunpack.c.l.b16 %v5273
        %v5348 = vunpack.c.l.b16 %v5274
        %v5349 = vunpack.c.l.b16 %v5275
        %v5350 = vunpack.c.l.b16 %v5276
        %v5351 = vunpack.c.l.b16 %v5277
        %v5352 = vunpack.c.l.b16 %v5278
        %v5353 = vunpack.c.l.b16 %v5279
        %v5354 = vunpack.c.l.b16 %v5280
        %v5355 = vunpack.c.l.b16 %v5281
        %v5356 = vunpack.c.l.b16 %v5282
        %v5357 = vunpack.c.l.b16 %v5283
        %v5358 = vunpack.c.l.b16 %v5284
        %v5359 = vunpack.c.l.b16 %v5285
        %v5360 = vunpack.c.l.b16 %v5286
        %v5361 = vunpack.c.l.b16 %v5287
        %v5362 = vunpack.c.l.b16 %v5288
        %v5363 = vunpack.c.l.b16 %v5289
        %v5364 = vunpack.c.l.b16 %v5290
        %v5365 = vunpack.c.l.b16 %v5291
        %v5366 = vunpack.c.l.b16 %v5292
        %v5367 = vunpack.c.l.b16 %v5293
        %v5368 = vunpack.c.l.b16 %v5294
        %v5369 = vpack.c.b16 %v5333, %v5332
        %v5370 = vpack.c.b16 %v5335, %v5334
        %v5371 = vpack.c.b16 %v5337, %v5336
        %v5372 = vpack.c.b16 %v5339, %v5338
        %v5373 = vpack.c.b16 %v5341, %v5340
        %v5374 = vpack.c.b16 %v5343, %v5342
        %v5375 = vpack.c.b16 %v5345, %v5344
        %v5376 = vpack.c.b16 %v5347, %v5346
        %v5377 = vpack.c.b16 %v5349, %v5348
        %v5378 = vpack.c.b16 %v5351, %v5350
        %v5379 = vpack.c.b16 %v5353, %v5352
        %v5380 = vpack.c.b16 %v5355, %v5354
        %v5381 = vpack.c.b16 %v5357, %v5356
        %v5382 = vpack.c.b16 %v5359, %v5358
        %v5383 = vpack.c.b16 %v5361, %v5360
        %v5384 = vpack.c.b16 %v5363, %v5362
        %v5385 = vpack.c.b16 %v5365, %v5364
        %v5386 = vpack.c.b16 %v5367, %v5366
        %v5387 = vpack.c.b16 %v5368, %v5368
        %v5389 = vshrl.u32 %v5369, 16
        %v5391 = vrot.slane %v5389, 1
        %v5392 = vshll.u32 %v5369, 16
        %v5394 = vrot.slane %v5392, 2
        %v5395 = vor.u32 %v5391, %v5394
        %v5397 = vshrl.u32 %v5370, 16
        %v5399 = vrot.slane %v5397, 1
        %v5400 = vshll.u32 %v5370, 16
        %v5402 = vrot.slane %v5400, 2
        %v5403 = vor.u32 %v5399, %v5402
        %v5404 = vsel %vm2927, %v5395, %v5403
        %v5406 = vshrl.u32 %v5371, 16
        %v5408 = vrot.slane %v5406, 1
        %v5409 = vshll.u32 %v5371, 16
        %v5411 = vrot.slane %v5409, 2
        %v5412 = vor.u32 %v5408, %v5411
        %v5413 = vsel %vm2927, %v5403, %v5412
        %v5415 = vshrl.u32 %v5372, 16
        %v5417 = vrot.slane %v5415, 1
        %v5418 = vshll.u32 %v5372, 16
        %v5420 = vrot.slane %v5418, 2
        %v5421 = vor.u32 %v5417, %v5420
        %v5422 = vsel %vm2927, %v5412, %v5421
        %v5424 = vshrl.u32 %v5373, 16
        %v5426 = vrot.slane %v5424, 1
        %v5427 = vshll.u32 %v5373, 16
        %v5429 = vrot.slane %v5427, 2
        %v5430 = vor.u32 %v5426, %v5429
        %v5431 = vsel %vm2927, %v5421, %v5430
        %v5433 = vshrl.u32 %v5374, 16
        %v5435 = vrot.slane %v5433, 1
        %v5436 = vshll.u32 %v5374, 16
        %v5438 = vrot.slane %v5436, 2
        %v5439 = vor.u32 %v5435, %v5438
        %v5440 = vsel %vm2927, %v5430, %v5439
        %v5442 = vshrl.u32 %v5375, 16
        %v5444 = vrot.slane %v5442, 1
        %v5445 = vshll.u32 %v5375, 16
        %v5447 = vrot.slane %v5445, 2
        %v5448 = vor.u32 %v5444, %v5447
        %v5449 = vsel %vm2927, %v5439, %v5448
        %v5451 = vshrl.u32 %v5376, 16
        %v5453 = vrot.slane %v5451, 1
        %v5454 = vshll.u32 %v5376, 16
        %v5456 = vrot.slane %v5454, 2
        %v5457 = vor.u32 %v5453, %v5456
        %v5458 = vsel %vm2927, %v5448, %v5457
        %v5460 = vshrl.u32 %v5377, 16
        %v5462 = vrot.slane %v5460, 1
        %v5463 = vshll.u32 %v5377, 16
        %v5465 = vrot.slane %v5463, 2
        %v5466 = vor.u32 %v5462, %v5465
        %v5467 = vsel %vm2927, %v5457, %v5466
        %v5469 = vshrl.u32 %v5378, 16
        %v5471 = vrot.slane %v5469, 1
        %v5472 = vshll.u32 %v5378, 16
        %v5474 = vrot.slane %v5472, 2
        %v5475 = vor.u32 %v5471, %v5474
        %v5476 = vsel %vm2927, %v5466, %v5475
        %v5478 = vshrl.u32 %v5379, 16
        %v5480 = vrot.slane %v5478, 1
        %v5481 = vshll.u32 %v5379, 16
        %v5483 = vrot.slane %v5481, 2
        %v5484 = vor.u32 %v5480, %v5483
        %v5485 = vsel %vm2927, %v5475, %v5484
        %v5487 = vshrl.u32 %v5380, 16
        %v5489 = vrot.slane %v5487, 1
        %v5490 = vshll.u32 %v5380, 16
        %v5492 = vrot.slane %v5490, 2
        %v5493 = vor.u32 %v5489, %v5492
        %v5494 = vsel %vm2927, %v5484, %v5493
        %v5496 = vshrl.u32 %v5381, 16
        %v5498 = vrot.slane %v5496, 1
        %v5499 = vshll.u32 %v5381, 16
        %v5501 = vrot.slane %v5499, 2
        %v5502 = vor.u32 %v5498, %v5501
        %v5503 = vsel %vm2927, %v5493, %v5502
        %v5505 = vshrl.u32 %v5382, 16
        %v5507 = vrot.slane %v5505, 1
        %v5508 = vshll.u32 %v5382, 16
        %v5510 = vrot.slane %v5508, 2
        %v5511 = vor.u32 %v5507, %v5510
        %v5512 = vsel %vm2927, %v5502, %v5511
        %v5514 = vshrl.u32 %v5383, 16
        %v5516 = vrot.slane %v5514, 1
        %v5517 = vshll.u32 %v5383, 16
        %v5519 = vrot.slane %v5517, 2
        %v5520 = vor.u32 %v5516, %v5519
        %v5521 = vsel %vm2927, %v5511, %v5520
        %v5523 = vshrl.u32 %v5384, 16
        %v5525 = vrot.slane %v5523, 1
        %v5526 = vshll.u32 %v5384, 16
        %v5528 = vrot.slane %v5526, 2
        %v5529 = vor.u32 %v5525, %v5528
        %v5530 = vsel %vm2927, %v5520, %v5529
        %v5532 = vshrl.u32 %v5385, 16
        %v5534 = vrot.slane %v5532, 1
        %v5535 = vshll.u32 %v5385, 16
        %v5537 = vrot.slane %v5535, 2
        %v5538 = vor.u32 %v5534, %v5537
        %v5539 = vsel %vm2927, %v5529, %v5538
        %v5541 = vshrl.u32 %v5386, 16
        %v5543 = vrot.slane %v5541, 1
        %v5544 = vshll.u32 %v5386, 16
        %v5546 = vrot.slane %v5544, 2
        %v5547 = vor.u32 %v5543, %v5546
        %v5548 = vsel %vm2927, %v5538, %v5547
        %v5550 = vshrl.u32 %v5387, 16
        %v5552 = vrot.slane %v5550, 1
        %v5553 = vshll.u32 %v5387, 16
        %v5555 = vrot.slane %v5553, 2
        %v5556 = vor.u32 %v5552, %v5555
        %v5557 = vsel %vm2927, %v5547, %v5556
        %5576 = vmatprep.subr.bf16.mxu0 0
        %5577 = vmatpush1.bf16.msra.mxu0 %v5467
        %5578 = vmatprep.subr.bf16.mxu0 0
        %5579 = vmatpush1.bf16.msra.mxu0 %v5458
        %5580 = vmatprep.subr.bf16.mxu0 0
        %5581 = vmatpush1.bf16.msra.mxu0 %v5449
        %5582 = vmatprep.subr.bf16.mxu0 0
        %5583 = vmatpush1.bf16.msra.mxu0 %v5440
        %5584 = vmatprep.subr.bf16.mxu0 0
        %5585 = vmatpush1.bf16.msra.mxu0 %v5431
        %5586 = vmatprep.subr.bf16.mxu0 0
        %5587 = vmatpush1.bf16.msra.mxu0 %v5422
        %5588 = vmatprep.subr.bf16.mxu0 0
        %5589 = vmatpush1.bf16.msra.mxu0 %v5413
        %5590 = vmatprep.subr.bf16.mxu0 0
        %5591 = vmatpush1.bf16.msra.mxu0 %v5404
        %5592 = vmatprep.subr.bf16.mxu0 0
        %5593 = vmatpush2.bf16.msra.mxu0 %v5539
        %5594 = vmatprep.subr.bf16.mxu0 0
        %5595 = vmatpush2.bf16.msra.mxu0 %v5530
        %5596 = vmatprep.subr.bf16.mxu0 0
        %5597 = vmatpush2.bf16.msra.mxu0 %v5521
        %5598 = vmatprep.subr.bf16.mxu0 0
        %5599 = vmatpush2.bf16.msra.mxu0 %v5512
        %5600 = vmatprep.subr.bf16.mxu0 0
        %5601 = vmatpush2.bf16.msra.mxu0 %v5503
        %5602 = vmatprep.subr.bf16.mxu0 0
        %5603 = vmatpush2.bf16.msra.mxu0 %v5494
        %5604 = vmatprep.subr.bf16.mxu0 0
        %5605 = vmatpush2.bf16.msra.mxu0 %v5485
        %5606 = vmatprep.subr.bf16.mxu0 0
        %5607 = vmatpush2.bf16.msra.mxu0 %v5476
        %5608 = vmatprep.mubr.bf16.mxu0 %v5093
        %5609 = vmatmul.mubr.bf16.gmra.mxu0 %v5092
        %v5610 = vpop.f32.mrf.mxu0
        %v5611 = vadd.f32 0.0, %v5610
        %v5612 = vpop.f32.mrf.mxu0
        %v5613 = vpop.f32.mrf.mxu0
        %v5614 = vadd.f32 0.0, %v5613
        %v5615 = vpop.f32.mrf.mxu0
        %5616 = vmatprep.mubr.bf16.mxu0 %v5096
        %5617 = vmatmul.mubr.bf16.gmra.mxu0 %v5095
        %v5618 = vpop.f32.mrf.mxu0
        %v5619 = vadd.f32 0.0, %v5618
        %v5620 = vpop.f32.mrf.mxu0
        %v5621 = vpop.f32.mrf.mxu0
        %v5622 = vadd.f32 0.0, %v5621
        %v5623 = vpop.f32.mrf.mxu0
        %5624 = vmatprep.mubr.bf16.mxu0 %v5099
        %5625 = vmatmul.mubr.bf16.gmra.mxu0 %v5098
        %v5626 = vpop.f32.mrf.mxu0
        %v5627 = vadd.f32 0.0, %v5626
        %v5628 = vpop.f32.mrf.mxu0
        %v5629 = vpop.f32.mrf.mxu0
        %v5630 = vadd.f32 0.0, %v5629
        %v5631 = vpop.f32.mrf.mxu0
        %5632 = vmatprep.mubr.bf16.mxu0 %v5102
        %5633 = vmatmul.mubr.bf16.gmra.mxu0 %v5101
        %v5634 = vpop.f32.mrf.mxu0
        %v5635 = vadd.f32 0.0, %v5634
        %v5636 = vpop.f32.mrf.mxu0
        %v5637 = vpop.f32.mrf.mxu0
        %v5638 = vadd.f32 0.0, %v5637
        %v5639 = vpop.f32.mrf.mxu0
        %5640 = vdwg.mxu0
        %5641 = vmatprep.subr.bf16.mxu0 0
        %5642 = vmatpush1.bf16.msra.mxu0 0
        %5643 = vmatprep.subr.bf16.mxu0 0
        %5644 = vmatpush1.bf16.msra.mxu0 0
        %5645 = vmatprep.subr.bf16.mxu0 0
        %5646 = vmatpush1.bf16.msra.mxu0 0
        %5647 = vmatprep.subr.bf16.mxu0 0
        %5648 = vmatpush1.bf16.msra.mxu0 0
        %5649 = vmatprep.subr.bf16.mxu0 0
        %5650 = vmatpush1.bf16.msra.mxu0 0
        %5651 = vmatprep.subr.bf16.mxu0 0
        %5652 = vmatpush1.bf16.msra.mxu0 0
        %5653 = vmatprep.subr.bf16.mxu0 0
        %5654 = vmatpush1.bf16.msra.mxu0 %v5557
        %5655 = vmatprep.subr.bf16.mxu0 0
        %5656 = vmatpush1.bf16.msra.mxu0 %v5548
        %5657 = vmatprep.subr.bf16.mxu0 0
        %5658 = vmatpush2.bf16.msra.mxu0 0
        %5659 = vmatprep.subr.bf16.mxu0 0
        %5660 = vmatpush2.bf16.msra.mxu0 0
        %5661 = vmatprep.subr.bf16.mxu0 0
        %5662 = vmatpush2.bf16.msra.mxu0 0
        %5663 = vmatprep.subr.bf16.mxu0 0
        %5664 = vmatpush2.bf16.msra.mxu0 0
        %5665 = vmatprep.subr.bf16.mxu0 0
        %5666 = vmatpush2.bf16.msra.mxu0 0
        %5667 = vmatprep.subr.bf16.mxu0 0
        %5668 = vmatpush2.bf16.msra.mxu0 0
        %5669 = vmatprep.subr.bf16.mxu0 0
        %5670 = vmatpush2.bf16.msra.mxu0 0
        %5671 = vmatprep.subr.bf16.mxu0 0
        %5672 = vmatpush2.bf16.msra.mxu0 0
        %5673 = vmatprep.mubr.bf16.mxu0 0
        %5674 = vmatmul.mubr.bf16.gmra.mxu0 %v5113
        %v5675 = vpop.f32.mrf.mxu0
        %v5676 = vadd.f32 %v5611, %v5675
        %v5677 = vpop.f32.mrf.mxu0
        %v5678 = vpop.f32.mrf.mxu0
        %v5679 = vadd.f32 %v5614, %v5678
        %v5680 = vpop.f32.mrf.mxu0
        %5681 = vmatprep.mubr.bf16.mxu0 0
        %5682 = vmatmul.mubr.bf16.gmra.mxu0 %v5116
        %v5683 = vpop.f32.mrf.mxu0
        %v5684 = vadd.f32 %v5619, %v5683
        %v5685 = vpop.f32.mrf.mxu0
        %v5686 = vpop.f32.mrf.mxu0
        %v5687 = vadd.f32 %v5622, %v5686
        %v5688 = vpop.f32.mrf.mxu0
        %5689 = vmatprep.mubr.bf16.mxu0 0
        %5690 = vmatmul.mubr.bf16.gmra.mxu0 %v5119
        %v5691 = vpop.f32.mrf.mxu0
        %v5692 = vadd.f32 %v5627, %v5691
        %v5693 = vpop.f32.mrf.mxu0
        %v5694 = vpop.f32.mrf.mxu0
        %v5695 = vadd.f32 %v5630, %v5694
        %v5696 = vpop.f32.mrf.mxu0
        %5697 = vmatprep.mubr.bf16.mxu0 0
        %5698 = vmatmul.mubr.bf16.gmra.mxu0 %v5122
        %v5699 = vpop.f32.mrf.mxu0
        %v5700 = vadd.f32 %v5635, %v5699
        %v5701 = vpop.f32.mrf.mxu0
        %v5702 = vpop.f32.mrf.mxu0
        %v5703 = vadd.f32 %v5638, %v5702
        %v5704 = vpop.f32.mrf.mxu0
        %5705 = vdwg.mxu0
        %v5706 = vpack.c.bf16 %v5679, %v5676
        %v5707 = vpack.c.bf16 %v5687, %v5684
        %v5708 = vpack.c.bf16 %v5695, %v5692
        %v5709 = vpack.c.bf16 %v5703, %v5700
        %v5710 = vld [vmem:[%s9] sm:$0xf]
        %v5711 = vld [vmem:[%s9 + $0x4] sm:$0xf]
        %v5712 = vld [vmem:[%s9 + $0x8] sm:$0xf]
        %v5713 = vld [vmem:[%s9 + $0xc] sm:$0xf]
        %v5714 = vld [vmem:[%s9 + $0x10] sm:$0xf]
        %v5715 = vld [vmem:[%s9 + $0x14] sm:$0xf]
        %v5716 = vld [vmem:[%s9 + $0x18] sm:$0xf]
        %v5717 = vld [vmem:[%s9 + $0x1c] sm:$0xf]
        %v5718 = vld [vmem:[%s10] sm:$0x1]
        %v5720 = vlaneseq
        %v5721 = vshrl.u32 %v5720, 7
        %v5722 = vsub.s32 0, %v5721
        %v5723 = vrot.slane %v5718, %v5722
        %v5733 = vunpack.c.l.b16 %v5710
        %v5734 = vunpack.c.l.b16 %v5711
        %v5735 = vunpack.c.l.b16 %v5712
        %v5736 = vunpack.c.l.b16 %v5713
        %v5737 = vunpack.c.l.b16 %v5714
        %v5738 = vunpack.c.l.b16 %v5715
        %v5739 = vunpack.c.l.b16 %v5716
        %v5740 = vunpack.c.l.b16 %v5717
        %v5741 = vpack.c.b16 %v5734, %v5733
        %v5742 = vpack.c.b16 %v5736, %v5735
        %v5743 = vpack.c.b16 %v5738, %v5737
        %v5744 = vpack.c.b16 %v5740, %v5739
        %v5750 = vsel %vm572, %v5706, 0
        %v5753 = vsel %vm572, %v5707, 0
        %v5756 = vsel %vm572, %v5708, 0
        %v5759 = vsel %vm572, %v5709, 0
        %5761 = vmatprep.subr.bf16.mxu0 0
        %5762 = vmatpush1.bf16.msra.mxu0 0
        %5763 = vmatprep.subr.bf16.mxu0 0
        %5764 = vmatpush1.bf16.msra.mxu0 0
        %5765 = vmatprep.subr.bf16.mxu0 0
        %5766 = vmatpush1.bf16.msra.mxu0 0
        %5767 = vmatprep.subr.bf16.mxu0 0
        %5768 = vmatpush1.bf16.msra.mxu0 0
        %5769 = vmatprep.subr.bf16.mxu0 0
        %5770 = vmatpush1.bf16.msra.mxu0 %v5744
        %5771 = vmatprep.subr.bf16.mxu0 0
        %5772 = vmatpush1.bf16.msra.mxu0 %v5743
        %5773 = vmatprep.subr.bf16.mxu0 0
        %5774 = vmatpush1.bf16.msra.mxu0 %v5742
        %5775 = vmatprep.subr.bf16.mxu0 0
        %5776 = vmatpush1.bf16.msra.mxu0 %v5741
        %5777 = vmatprep.subr.bf16.mxu0 0
        %5778 = vmatpush2.bf16.msra.mxu0 0
        %5779 = vmatprep.subr.bf16.mxu0 0
        %5780 = vmatpush2.bf16.msra.mxu0 0
        %5781 = vmatprep.subr.bf16.mxu0 0
        %5782 = vmatpush2.bf16.msra.mxu0 0
        %5783 = vmatprep.subr.bf16.mxu0 0
        %5784 = vmatpush2.bf16.msra.mxu0 0
        %5785 = vmatprep.subr.bf16.mxu0 0
        %5786 = vmatpush2.bf16.msra.mxu0 0
        %5787 = vmatprep.subr.bf16.mxu0 0
        %5788 = vmatpush2.bf16.msra.mxu0 0
        %5789 = vmatprep.subr.bf16.mxu0 0
        %5790 = vmatpush2.bf16.msra.mxu0 0
        %5791 = vmatprep.subr.bf16.mxu0 0
        %5792 = vmatpush2.bf16.msra.mxu0 0
        %5793 = vmatprep.mubr.bf16.mxu0 0
        %5794 = vmatmul.mubr.bf16.gmra.mxu0 %v5750
        %v5795 = vpop.f32.mrf.mxu0
        %v5796 = vadd.f32 %v5723, %v5795
        %v5797 = vpop.f32.mrf.mxu0
        %v5798 = vpop.f32.mrf.mxu0
        %v5799 = vadd.f32 %v5723, %v5798
        %v5800 = vpop.f32.mrf.mxu0
        %5801 = vmatprep.mubr.bf16.mxu0 0
        %5802 = vmatmul.mubr.bf16.gmra.mxu0 %v5753
        %v5803 = vpop.f32.mrf.mxu0
        %v5804 = vadd.f32 %v5723, %v5803
        %v5805 = vpop.f32.mrf.mxu0
        %v5806 = vpop.f32.mrf.mxu0
        %v5807 = vadd.f32 %v5723, %v5806
        %v5808 = vpop.f32.mrf.mxu0
        %5809 = vmatprep.mubr.bf16.mxu0 0
        %5810 = vmatmul.mubr.bf16.gmra.mxu0 %v5756
        %v5811 = vpop.f32.mrf.mxu0
        %v5812 = vadd.f32 %v5723, %v5811
        %v5813 = vpop.f32.mrf.mxu0
        %v5814 = vpop.f32.mrf.mxu0
        %v5815 = vadd.f32 %v5723, %v5814
        %v5816 = vpop.f32.mrf.mxu0
        %5817 = vmatprep.mubr.bf16.mxu0 0
        %5818 = vmatmul.mubr.bf16.gmra.mxu0 %v5759
        %v5819 = vpop.f32.mrf.mxu0
        %v5820 = vadd.f32 %v5723, %v5819
        %v5821 = vpop.f32.mrf.mxu0
        %v5822 = vpop.f32.mrf.mxu0
        %v5823 = vadd.f32 %v5723, %v5822
        %v5824 = vpop.f32.mrf.mxu0
        %5825 = vdwg.mxu0
        %v5826 = vld [vmem:[%s7] sm:$0xf]
        %v5827 = vld [vmem:[%s7 + $0x4] sm:$0xf]
        %v5828 = vld [vmem:[%s7 + $0x8] sm:$0xf]
        %v5829 = vld [vmem:[%s7 + $0xc] sm:$0xf]
        %v5830 = vld [vmem:[%s8] sm:$0x1]
        %v5832 = vlaneseq
        %v5833 = vshrl.u32 %v5832, 7
        %v5834 = vsub.s32 0, %v5833
        %v5835 = vrot.slane %v5830, %v5834
        %v5841 = vunpack.c.l.b16 %v5826
        %v5842 = vunpack.c.l.b16 %v5827
        %v5843 = vunpack.c.l.b16 %v5828
        %v5844 = vunpack.c.l.b16 %v5829
        %v5845 = vpack.c.b16 %v5842, %v5841
        %v5846 = vpack.c.b16 %v5844, %v5843
        %v5850 = vsel %vm1684, %v5254, 0
        %v5853 = vsel %vm1684, %v5255, 0
        %v5856 = vsel %vm1684, %v5256, 0
        %v5859 = vsel %vm1684, %v5257, 0
        %5861 = vmatprep.subr.bf16.mxu0 0
        %5862 = vmatpush1.bf16.msra.mxu0 0
        %5863 = vmatprep.subr.bf16.mxu0 0
        %5864 = vmatpush1.bf16.msra.mxu0 0
        %5865 = vmatprep.subr.bf16.mxu0 0
        %5866 = vmatpush1.bf16.msra.mxu0 0
        %5867 = vmatprep.subr.bf16.mxu0 0
        %5868 = vmatpush1.bf16.msra.mxu0 0
        %5869 = vmatprep.subr.bf16.mxu0 0
        %5870 = vmatpush1.bf16.msra.mxu0 0
        %5871 = vmatprep.subr.bf16.mxu0 0
        %5872 = vmatpush1.bf16.msra.mxu0 0
        %5873 = vmatprep.subr.bf16.mxu0 0
        %5874 = vmatpush1.bf16.msra.mxu0 %v5846
        %5875 = vmatprep.subr.bf16.mxu0 0
        %5876 = vmatpush1.bf16.msra.mxu0 %v5845
        %5877 = vmatprep.subr.bf16.mxu0 0
        %5878 = vmatpush2.bf16.msra.mxu0 0
        %5879 = vmatprep.subr.bf16.mxu0 0
        %5880 = vmatpush2.bf16.msra.mxu0 0
        %5881 = vmatprep.subr.bf16.mxu0 0
        %5882 = vmatpush2.bf16.msra.mxu0 0
        %5883 = vmatprep.subr.bf16.mxu0 0
        %5884 = vmatpush2.bf16.msra.mxu0 0
        %5885 = vmatprep.subr.bf16.mxu0 0
        %5886 = vmatpush2.bf16.msra.mxu0 0
        %5887 = vmatprep.subr.bf16.mxu0 0
        %5888 = vmatpush2.bf16.msra.mxu0 0
        %5889 = vmatprep.subr.bf16.mxu0 0
        %5890 = vmatpush2.bf16.msra.mxu0 0
        %5891 = vmatprep.subr.bf16.mxu0 0
        %5892 = vmatpush2.bf16.msra.mxu0 0
        %5893 = vmatprep.mubr.bf16.mxu0 0
        %5894 = vmatmul.mubr.bf16.gmra.mxu0 %v5850
        %v5895 = vpop.f32.mrf.mxu0
        %v5896 = vadd.f32 %v5835, %v5895
        %v5897 = vpop.f32.mrf.mxu0
        %v5898 = vpop.f32.mrf.mxu0
        %v5899 = vadd.f32 %v5835, %v5898
        %v5900 = vpop.f32.mrf.mxu0
        %5901 = vmatprep.mubr.bf16.mxu0 0
        %5902 = vmatmul.mubr.bf16.gmra.mxu0 %v5853
        %v5903 = vpop.f32.mrf.mxu0
        %v5904 = vadd.f32 %v5835, %v5903
        %v5905 = vpop.f32.mrf.mxu0
        %v5906 = vpop.f32.mrf.mxu0
        %v5907 = vadd.f32 %v5835, %v5906
        %v5908 = vpop.f32.mrf.mxu0
        %5909 = vmatprep.mubr.bf16.mxu0 0
        %5910 = vmatmul.mubr.bf16.gmra.mxu0 %v5856
        %v5911 = vpop.f32.mrf.mxu0
        %v5912 = vadd.f32 %v5835, %v5911
        %v5913 = vpop.f32.mrf.mxu0
        %v5914 = vpop.f32.mrf.mxu0
        %v5915 = vadd.f32 %v5835, %v5914
        %v5916 = vpop.f32.mrf.mxu0
        %5917 = vmatprep.mubr.bf16.mxu0 0
        %5918 = vmatmul.mubr.bf16.gmra.mxu0 %v5859
        %v5919 = vpop.f32.mrf.mxu0
        %v5920 = vadd.f32 %v5835, %v5919
        %v5921 = vpop.f32.mrf.mxu0
        %v5922 = vpop.f32.mrf.mxu0
        %v5923 = vadd.f32 %v5835, %v5922
        %v5924 = vpop.f32.mrf.mxu0
        %5925 = vdwg.mxu0
        %v5926 = vadd.f32 %v5896, %v5796
        %v5927 = vadd.f32 %v5899, %v5799
        %v5928 = vadd.f32 %v5904, %v5804
        %v5929 = vadd.f32 %v5907, %v5807
        %v5930 = vadd.f32 %v5912, %v5812
        %v5931 = vadd.f32 %v5915, %v5815
        %v5932 = vadd.f32 %v5920, %v5820
        %v5933 = vadd.f32 %v5923, %v5823
        %v5934 = vmax.f32 %v5926, 0.0
        %v5935 = vmax.f32 %v5927, 0.0
        %v5936 = vmax.f32 %v5928, 0.0
        %v5937 = vmax.f32 %v5929, 0.0
        %v5938 = vmax.f32 %v5930, 0.0
        %v5939 = vmax.f32 %v5931, 0.0
        %v5940 = vmax.f32 %v5932, 0.0
        %v5941 = vmax.f32 %v5933, 0.0
        %v5942 = vpack.c.bf16 %v5935, %v5934
        %v5943 = vpack.c.bf16 %v5937, %v5936
        %v5944 = vpack.c.bf16 %v5939, %v5938
        %v5945 = vpack.c.bf16 %v5941, %v5940
        %v5950 = vunpack.c.l.b16 %v5942
        %v5951 = vunpack.c.h.b16 %v5942
        %v5952 = vunpack.c.l.b16 %v5943
        %v5953 = vunpack.c.h.b16 %v5943
        %v5954 = vunpack.c.l.b16 %v5944
        %v5955 = vunpack.c.h.b16 %v5944
        %v5956 = vunpack.c.l.b16 %v5945
        %v5957 = vunpack.c.h.b16 %v5945
        %v5958 = vpack.c.b16 %v5950, %v5950
        %v5959 = vpack.c.b16 %v5951, %v5951
        %v5960 = vpack.c.b16 %v5952, %v5952
        %v5961 = vpack.c.b16 %v5953, %v5953
        %v5962 = vpack.c.b16 %v5954, %v5954
        %v5963 = vpack.c.b16 %v5955, %v5955
        %v5964 = vpack.c.b16 %v5956, %v5956
        %v5965 = vpack.c.b16 %v5957, %v5957
        %5974 = vst [vmem:[%s379] sm:$0xf] %v5958
        %5975 = vst [vmem:[%s379 + $0x4] sm:$0xf] %v5959
        %5976 = vst [vmem:[%s379 + $0x8] sm:$0xf] %v5960
        %5977 = vst [vmem:[%s379 + $0xc] sm:$0xf] %v5961
        %5978 = vst [vmem:[%s379 + $0x10] sm:$0xf] %v5962
        %5979 = vst [vmem:[%s379 + $0x14] sm:$0xf] %v5963
        %5980 = vst [vmem:[%s379 + $0x18] sm:$0xf] %v5964
        %5981 = vst [vmem:[%s379 + $0x1c] sm:$0xf] %v5965
        %s5982 = sand.u32 %s269, 1
        %s5983 = scalar_lea.sflag [#allocation4], %s5982
        %s5984 = sand.u32 %s269, 1
        %s5985 = smul.addr %s5984, 32
        %s5986 = scalar_lea.vmem [#allocation3], %s5985
        // Predicated region
        $region65: #{bottleneck_forward_nhwc.1} parent=63 // pred_check
          %p5987 = pneg %p279
        $region66: #{bottleneck_forward_nhwc.1} parent=63 // pred_check_branch
          %5989 = sbr.rel (%p5987) target = $region68
        $region67: #{bottleneck_forward_nhwc.1} parent=63 // pred_region
          %s5991 = ssub.s32 512, 512
          %5992 = vsyncadd %s5983, %s5991
          %s5993 = smul.addr %s25, 8
          %s5994 = smul.addr %s5993, 64
          %s5995 = scalar_lea.hbm %s11, %s5994
          %s5996 = sshll.u32 %s5986, 4
          %s5997 = int_to_ptr.vmem [resolvable:$true] %s5996
          %6002 = dma.vmem_to_hbm [thread:$0]  %s5997, 512, %s5995, %s5983, 64, 64, 4
        $region68: #{bottleneck_forward_nhwc.1} parent=63 // pred_fallthru
          _
      $region64: #{bottleneck_forward_nhwc.1} parent=5 // pred_fallthru
        _
      %p6003 = scmp.le.s32.totalorder 2, %s20
      // Predicated region
      $region69: #{bottleneck_forward_nhwc.1} parent=5 // pred_check
        %p6004 = pneg %p6003
      $region70: #{bottleneck_forward_nhwc.1} parent=5 // pred_check_branch
        %6006 = sbr.rel (%p6004) target = $region72
      $region71: #{bottleneck_forward_nhwc.1} parent=5 // pred_region
        %s6007 = ssub.s32 %s20, 2
        // Predicated region
        $region73: #{bottleneck_forward_nhwc.1} parent=71 // pred_check
          %p6008 = pneg %p285
        $region74: #{bottleneck_forward_nhwc.1} parent=71 // pred_check_branch
          %6010 = sbr.rel (%p6008) target = $region76
        $region75: #{bottleneck_forward_nhwc.1} parent=71 // pred_region
          %s6011 = sand.u32 %s270, 1
          %s6012 = scalar_lea.sflag [#allocation4], %s6011
          %s6013 = sand.u32 %s270, 1
          %s6014 = smul.addr %s6013, 32
          %s6015 = scalar_lea.vmem [#allocation3], %s6014
          %6016 = dma.done %s6012, 512
        $region76: #{bottleneck_forward_nhwc.1} parent=71 // pred_fallthru
          _
      $region72: #{bottleneck_forward_nhwc.1} parent=5 // pred_fallthru
        _
    $region6: #{bottleneck_forward_nhwc.1} parent=1 // loop_footer
      %s24 = sadd.s32 1, %s20
    $region7: #{bottleneck_forward_nhwc.1} parent=1 // loop_footer_branch
      %19 = sbr.rel target = $region3
    $region8: #{bottleneck_forward_nhwc.1} parent=1 // loop_exit
      _
    %6017 = vsyncpa [#allocation4], 1
    %s6018 = scalar_lea.sflag [#allocation4], 1
    %6019 = vsyncpa %s6018, 1

</llo_original>
